<compile_context>
chip_gen: v6e
topology: v6e:2x2x1
jax: 0.10.0
libtpu: 0.0.40
codegen_flags: <defaults>
</compile_context>

<pallas_src>
import functools

import jax
import jax.numpy as jnp
from jax.experimental import pallas as pl
from jax.experimental.pallas import tpu as pltpu

_SELU_ALPHA = 1.6732632423543772848170429916717
_SELU_SCALE = 1.0507009873554804934193349852946
_BN_EPS = 1e-5


def _round_up(a, b):
    return (a + b - 1) // b * b


def _resblock_kernel(mask_ref, x_ref, w1_ref, s1_ref, b1_ref,
                     w2_ref, s2_ref, b2_ref, wsc_ref, ssc_ref, bsc_ref,
                     out_ref, h1_ref, *, wp, guard, identity_sc):
    # x_ref  : (Cin, Lf)      bf16 flattened zero-padded image + flat guard zones
    # w1_ref : (9, Cout, Cin) bf16 tap-major 3x3 weights; w2_ref: (9, Cout, Cout)
    # s*/b*  : (Cout, 1)      f32 folded BN (+conv bias) scale / bias
    # wsc    : (Cout, Cin)    bf16 1x1 shortcut projection (unused if identity)
    # mask   : (1, P)         f32, 1.0 at valid HxW positions, 0.0 at padding
    # out    : (Cout, P)      f32 padded-grid layout (wrapper strips the border)
    # h1_ref : (Cout, Lf)     bf16 VMEM scratch for the intermediate activation
    cout, p = out_ref.shape

    def conv3x3(src_ref, w_ref):
        # 9 per-tap slab matmuls over the whole image: (Cout, Cs) @ (Cs, P)
        acc = jnp.zeros((cout, p), jnp.float32)
        for t in range(9):
            kh, kw = t // 3, t % 3
            off = guard + (kh - 1) * wp + (kw - 1)        # static offset
            acc = acc + jnp.dot(w_ref[t], src_ref[:, pl.ds(off, p)],
                                preferred_element_type=jnp.float32)
        return acc

    mask = mask_ref[...]

    # h1 = relu(bn1(conv1(x))), written back in the same padded flat layout
    a1 = conv3x3(x_ref, w1_ref)
    h1 = jnp.maximum(a1 * s1_ref[...] + b1_ref[...], 0.0) * mask
    h1_ref[...] = jnp.zeros_like(h1_ref)                  # zero flat guard zones
    h1_ref[:, pl.ds(guard, p)] = h1.astype(h1_ref.dtype)

    # y = bn2(conv2(h1)) + shortcut(x)
    y = conv3x3(h1_ref, w2_ref) * s2_ref[...] + b2_ref[...]
    xc = x_ref[:, pl.ds(guard, p)]                        # center (identity) tap
    if identity_sc:
        y = y + xc.astype(jnp.float32)
    else:
        sc = jnp.dot(wsc_ref[...], xc, preferred_element_type=jnp.float32)
        y = y + sc * ssc_ref[...] + bsc_ref[...]

    # SELU (exp only on the non-positive branch -> no overflow on junk lanes)
    neg = _SELU_ALPHA * (jnp.exp(jnp.minimum(y, 0.0)) - 1.0)
    out_ref[...] = (_SELU_SCALE * jnp.where(y > 0, y, neg)).astype(out_ref.dtype)


def _fold_bn(conv_bias, gamma, beta, mean, var):
    scale = gamma / jnp.sqrt(var + _BN_EPS)
    bias = beta + (conv_bias - mean) * scale
    cout = scale.shape[0]
    return (scale.reshape(cout, 1).astype(jnp.float32),
            bias.reshape(cout, 1).astype(jnp.float32))


def res_block_forward(x_nchw, params):
    N, Cin, H, W = x_nchw.shape
    Cout = params["w1"].shape[-1]
    Hp, Wp = H + 2, W + 2
    P = Hp * Wp
    guard = _round_up(Wp + 1, 128)             # front guard keeps tap slices in-bounds
    Lf = _round_up(guard + P + Wp + 1, 128)    # padded flat length per channel

    # NCHW keeps spatial contiguous -> no transpose; pad, flatten, cast bf16.
    xp = jnp.pad(x_nchw.astype(jnp.float32), ((0, 0), (0, 0), (1, 1), (1, 1)))
    xf = jnp.pad(xp.reshape(N, Cin, P),
                 ((0, 0), (0, 0), (guard, Lf - guard - P))).astype(jnp.bfloat16)

    # validity mask over the padded grid (zeros at the 1-pixel border)
    ii = jnp.arange(P, dtype=jnp.int32) // Wp
    jj = jnp.arange(P, dtype=jnp.int32) % Wp
    mask = (((ii >= 1) & (ii <= H)) & ((jj >= 1) & (jj <= W)))
    mask = mask.astype(jnp.float32).reshape(1, P)

    # weights: tap-major (9, Cout, Cin) bf16
    w1 = jnp.transpose(params["w1"], (0, 1, 3, 2)).reshape(9, Cout, Cin)
    w2 = jnp.transpose(params["w2"], (0, 1, 3, 2)).reshape(9, Cout, Cout)
    w1 = w1.astype(jnp.bfloat16)
    w2 = w2.astype(jnp.bfloat16)

    s1, b1 = _fold_bn(params["b1"], params["g1"], params["be1"],
                      params["m1"], params["v1"])
    s2, b2 = _fold_bn(params["b2"], params["g2"], params["be2"],
                      params["m2"], params["v2"])

    identity_sc = params["wsc"] is None
    if identity_sc:
        wsc = jnp.zeros((Cout, Cin), jnp.bfloat16)          # unused
        ssc = jnp.ones((Cout, 1), jnp.float32)
        bsc = jnp.zeros((Cout, 1), jnp.float32)
    else:
        wsc = jnp.transpose(params["wsc"], (1, 0)).astype(jnp.bfloat16)
        ssc, bsc = _fold_bn(params["bsc"], params["gsc"], params["besc"],
                            params["msc"], params["vsc"])

    kernel = functools.partial(_resblock_kernel, wp=Wp, guard=guard,
                               identity_sc=identity_sc)
    full2 = lambda n: (0, 0)
    full3 = lambda n: (0, 0, 0)

    out_pad = pl.pallas_call(
        kernel,
        out_shape=jax.ShapeDtypeStruct((N, Cout, P), jnp.float32),
        grid=(N,),
        in_specs=[
            pl.BlockSpec((1, P), full2),                          # mask
            pl.BlockSpec((None, Cin, Lf), lambda n: (n, 0, 0)),   # x
            pl.BlockSpec((9, Cout, Cin), full3),                  # w1
            pl.BlockSpec((Cout, 1), full2),                       # s1
            pl.BlockSpec((Cout, 1), full2),                       # b1
            pl.BlockSpec((9, Cout, Cout), full3),                 # w2
            pl.BlockSpec((Cout, 1), full2),                       # s2
            pl.BlockSpec((Cout, 1), full2),                       # b2
            pl.BlockSpec((Cout, Cin), full2),                     # wsc
            pl.BlockSpec((Cout, 1), full2),                       # ssc
            pl.BlockSpec((Cout, 1), full2),                       # bsc
        ],
        out_specs=pl.BlockSpec((None, Cout, P), lambda n: (n, 0, 0)),
        scratch_shapes=[pltpu.VMEM((Cout, Lf), jnp.bfloat16)],
        compiler_params=pltpu.CompilerParams(
            dimension_semantics=("parallel",)),
    )(mask, xf, w1, s1, b1, w2, s2, b2, wsc, ssc, bsc)

    # strip the 1-pixel border; output is already NCHW
    return out_pad.reshape(N, Cout, Hp, Wp)[:, :, 1:H + 1, 1:W + 1]


def init_params(key, ch_in, ch_out):
    ks = jax.random.split(key, 16)

    def conv_w(k, kh, kw, ci, co):
        bound = 1.0 / jnp.sqrt(ci * kh * kw)
        return jax.random.uniform(k, (kh, kw, ci, co), jnp.float32, -bound, bound)

    def bn(k):
        kg, kb, km, kv = jax.random.split(k, 4)
        return dict(
            g=1.0 + 0.1 * jax.random.normal(kg, (ch_out,), jnp.float32),
            be=0.1 * jax.random.normal(kb, (ch_out,), jnp.float32),
            m=0.1 * jax.random.normal(km, (ch_out,), jnp.float32),
            v=jax.random.uniform(kv, (ch_out,), jnp.float32, 0.5, 1.5),
        )

    bn1, bn2, bnsc = bn(ks[0]), bn(ks[1]), bn(ks[2])
    params = {
        "w1": conv_w(ks[3], 3, 3, ch_in, ch_out),
        "b1": 0.05 * jax.random.normal(ks[4], (ch_out,), jnp.float32),
        "g1": bn1["g"], "be1": bn1["be"], "m1": bn1["m"], "v1": bn1["v"],
        "w2": conv_w(ks[5], 3, 3, ch_out, ch_out),
        "b2": 0.05 * jax.random.normal(ks[6], (ch_out,), jnp.float32),
        "g2": bn2["g"], "be2": bn2["be"], "m2": bn2["m"], "v2": bn2["v"],
    }
    if ch_in != ch_out:
        params.update({
            "wsc": conv_w(ks[7], 1, 1, ch_in, ch_out).reshape(ch_in, ch_out),
            "bsc": 0.05 * jax.random.normal(ks[8], (ch_out,), jnp.float32),
            "gsc": bnsc["g"], "besc": bnsc["be"], "msc": bnsc["m"], "vsc": bnsc["v"],
        })
    else:
        params.update({"wsc": None, "bsc": None, "gsc": None,
                       "besc": None, "msc": None, "vsc": None})
    return params


def res_block_reference(x_nchw, params, quantize=False):
    # pure-JAX reference (inference-mode BN).  quantize=True mirrors the
    # kernel's deliberate bf16 cast points (conv operands, h1) for a tight check.
    if quantize:
        q = lambda a: a.astype(jnp.float32).astype(jnp.bfloat16).astype(jnp.float32)
    else:
        q = lambda a: a.astype(jnp.float32)
    x = jnp.transpose(x_nchw, (0, 2, 3, 1)).astype(jnp.float32)

    def conv(inp, w, b):
        y = jax.lax.conv_general_dilated(
            q(inp), q(w), (1, 1), "SAME",
            dimension_numbers=("NHWC", "HWIO", "NHWC"),
            precision=jax.lax.Precision.HIGHEST)
        return y + b

    def bn(y, g, be, m, v):
        return (y - m) / jnp.sqrt(v + _BN_EPS) * g + be

    h = jnp.maximum(bn(conv(x, params["w1"], params["b1"]),
                       params["g1"], params["be1"], params["m1"], params["v1"]), 0.0)
    h = bn(conv(h, params["w2"], params["b2"]),
           params["g2"], params["be2"], params["m2"], params["v2"])
    if params["wsc"] is not None:
        sc = bn(conv(x, params["wsc"].reshape(1, 1, *params["wsc"].shape), params["bsc"]),
                params["gsc"], params["besc"], params["msc"], params["vsc"])
    else:
        sc = q(x)
    z = h + sc
    out = _SELU_SCALE * jnp.where(z > 0, z,
                                  _SELU_ALPHA * (jnp.exp(jnp.minimum(z, 0.0)) - 1.0))
    return jnp.transpose(out, (0, 3, 1, 2))


if __name__ == "__main__":
    N, CH_IN, CH_OUT, H, W = 2, 4, 8, 16, 16
    key = jax.random.PRNGKey(0)
    k_x, k_p = jax.random.split(key)

    x = jax.random.normal(k_x, (N, CH_IN, H, W), jnp.float32)
    params = init_params(k_p, CH_IN, CH_OUT)

    out = jax.block_until_ready(res_block_forward(x, params))
    assert out.shape == (N, CH_OUT, H, W), out.shape

    # tight check vs bf16-quantization-aware reference, loose check vs pure-f32
    # module semantics (kernel uses bf16 MXU operands, f32 accumulation).
    ref_q = jax.block_until_ready(res_block_reference(x, params, quantize=True))
    ref_f = jax.block_until_ready(res_block_reference(x, params, quantize=False))
    err_q = float(jnp.max(jnp.abs(out - ref_q)))
    err_f = float(jnp.max(jnp.abs(out - ref_f)))
    if not jnp.isfinite(out).all() or err_q > 1e-2 or err_f > 1e-1:
        raise AssertionError(f"kernel/reference mismatch: err_q={err_q}, err_f={err_f}")

    print("KERNEL_OK")
</pallas_src>

<mosaic_0001>
module attributes {stable_mosaic.version = 11 : i64} {
  func.func @_resblock_kernel(%arg0: i32, %arg1: memref<1x324xf32, #tpu.memory_space<vmem>>, %arg2: memref<1x4x512xbf16, #tpu.memory_space<vmem>>, %arg3: memref<9x8x4xbf16, #tpu.memory_space<vmem>>, %arg4: memref<8x1xf32, #tpu.memory_space<vmem>>, %arg5: memref<8x1xf32, #tpu.memory_space<vmem>>, %arg6: memref<9x8x8xbf16, #tpu.memory_space<vmem>>, %arg7: memref<8x1xf32, #tpu.memory_space<vmem>>, %arg8: memref<8x1xf32, #tpu.memory_space<vmem>>, %arg9: memref<8x4xbf16, #tpu.memory_space<vmem>>, %arg10: memref<8x1xf32, #tpu.memory_space<vmem>>, %arg11: memref<8x1xf32, #tpu.memory_space<vmem>>, %arg12: memref<1x8x324xf32, #tpu.memory_space<vmem>>, %arg13: memref<8x512xbf16, #tpu.memory_space<vmem>>) attributes {dimension_semantics = [#tpu.dimension_semantics<parallel>], iteration_bounds = array<i64: 2>, scalar_prefetch = 0 : i64, scratch_operands = 1 : i64, tpu.core_type = #tpu.core_type<tc>, window_params = [{pipeline_mode = #tpu.pipeline_mode<synchronous>, transform_indices = @transform_0, window_bounds = array<i64: 1, 324>}, {transform_indices = @transform_1, window_bounds = array<i64: 1, 4, 512>}, {pipeline_mode = #tpu.pipeline_mode<synchronous>, transform_indices = @transform_2, window_bounds = array<i64: 9, 8, 4>}, {pipeline_mode = #tpu.pipeline_mode<synchronous>, transform_indices = @transform_3, window_bounds = array<i64: 8, 1>}, {pipeline_mode = #tpu.pipeline_mode<synchronous>, transform_indices = @transform_4, window_bounds = array<i64: 8, 1>}, {pipeline_mode = #tpu.pipeline_mode<synchronous>, transform_indices = @transform_5, window_bounds = array<i64: 9, 8, 8>}, {pipeline_mode = #tpu.pipeline_mode<synchronous>, transform_indices = @transform_6, window_bounds = array<i64: 8, 1>}, {pipeline_mode = #tpu.pipeline_mode<synchronous>, transform_indices = @transform_7, window_bounds = array<i64: 8, 1>}, {pipeline_mode = #tpu.pipeline_mode<synchronous>, transform_indices = @transform_8, window_bounds = array<i64: 8, 4>}, {pipeline_mode = #tpu.pipeline_mode<synchronous>, transform_indices = @transform_9, window_bounds = array<i64: 8, 1>}, {pipeline_mode = #tpu.pipeline_mode<synchronous>, transform_indices = @transform_10, window_bounds = array<i64: 8, 1>}, {transform_indices = @transform_11, window_bounds = array<i64: 1, 8, 324>}]} {
    %c0 = arith.constant 0 : index
    %c0_0 = arith.constant 0 : index
    %0 = vector.load %arg1[%c0, %c0_0] : memref<1x324xf32, #tpu.memory_space<vmem>>, vector<1x324xf32>
    %cst = arith.constant 0.000000e+00 : f32
    %1 = vector.broadcast %cst : f32 to vector<8x324xf32>
    %c0_1 = arith.constant 0 : index
    %c0_2 = arith.constant 0 : index
    %c0_3 = arith.constant 0 : index
    %2 = vector.load %arg3[%c0_1, %c0_2, %c0_3] : memref<9x8x4xbf16, #tpu.memory_space<vmem>>, vector<1x8x4xbf16>
    %3 = vector.shape_cast %2 : vector<1x8x4xbf16> to vector<8x4xbf16>
    %c0_4 = arith.constant 0 : index
    %c0_5 = arith.constant 0 : index
    %c109 = arith.constant 109 : index
    %4 = vector.load %arg2[%c0_4, %c0_5, %c109] : memref<1x4x512xbf16, #tpu.memory_space<vmem>>, vector<1x4x324xbf16>
    %5 = vector.shape_cast %4 : vector<1x4x324xbf16> to vector<4x324xbf16>
    %cst_6 = arith.constant dense<0.000000e+00> : vector<8x324xf32>
    %6 = tpu.matmul %3, %5, %cst_6 {dimension_numbers = #tpu.dot_dimension_numbers<[1], [0], [0], [1], [0, 0, 1, 1], [], []>} : vector<8x4xbf16>, vector<4x324xbf16>, vector<8x324xf32> -> vector<8x324xf32>
    %7 = arith.addf %1, %6 : vector<8x324xf32>
    %c1 = arith.constant 1 : index
    %c0_7 = arith.constant 0 : index
    %c0_8 = arith.constant 0 : index
    %8 = vector.load %arg3[%c1, %c0_7, %c0_8] : memref<9x8x4xbf16, #tpu.memory_space<vmem>>, vector<1x8x4xbf16>
    %9 = vector.shape_cast %8 : vector<1x8x4xbf16> to vector<8x4xbf16>
    %c0_9 = arith.constant 0 : index
    %c0_10 = arith.constant 0 : index
    %c110 = arith.constant 110 : index
    %10 = vector.load %arg2[%c0_9, %c0_10, %c110] : memref<1x4x512xbf16, #tpu.memory_space<vmem>>, vector<1x4x324xbf16>
    %11 = vector.shape_cast %10 : vector<1x4x324xbf16> to vector<4x324xbf16>
    %cst_11 = arith.constant dense<0.000000e+00> : vector<8x324xf32>
    %12 = tpu.matmul %9, %11, %cst_11 {dimension_numbers = #tpu.dot_dimension_numbers<[1], [0], [0], [1], [0, 0, 1, 1], [], []>} : vector<8x4xbf16>, vector<4x324xbf16>, vector<8x324xf32> -> vector<8x324xf32>
    %13 = arith.addf %7, %12 : vector<8x324xf32>
    %c2 = arith.constant 2 : index
    %c0_12 = arith.constant 0 : index
    %c0_13 = arith.constant 0 : index
    %14 = vector.load %arg3[%c2, %c0_12, %c0_13] : memref<9x8x4xbf16, #tpu.memory_space<vmem>>, vector<1x8x4xbf16>
    %15 = vector.shape_cast %14 : vector<1x8x4xbf16> to vector<8x4xbf16>
    %c0_14 = arith.constant 0 : index
    %c0_15 = arith.constant 0 : index
    %c111 = arith.constant 111 : index
    %16 = vector.load %arg2[%c0_14, %c0_15, %c111] : memref<1x4x512xbf16, #tpu.memory_space<vmem>>, vector<1x4x324xbf16>
    %17 = vector.shape_cast %16 : vector<1x4x324xbf16> to vector<4x324xbf16>
    %cst_16 = arith.constant dense<0.000000e+00> : vector<8x324xf32>
    %18 = tpu.matmul %15, %17, %cst_16 {dimension_numbers = #tpu.dot_dimension_numbers<[1], [0], [0], [1], [0, 0, 1, 1], [], []>} : vector<8x4xbf16>, vector<4x324xbf16>, vector<8x324xf32> -> vector<8x324xf32>
    %19 = arith.addf %13, %18 : vector<8x324xf32>
    %c3 = arith.constant 3 : index
    %c0_17 = arith.constant 0 : index
    %c0_18 = arith.constant 0 : index
    %20 = vector.load %arg3[%c3, %c0_17, %c0_18] : memref<9x8x4xbf16, #tpu.memory_space<vmem>>, vector<1x8x4xbf16>
    %21 = vector.shape_cast %20 : vector<1x8x4xbf16> to vector<8x4xbf16>
    %c0_19 = arith.constant 0 : index
    %c0_20 = arith.constant 0 : index
    %c127 = arith.constant 127 : index
    %22 = vector.load %arg2[%c0_19, %c0_20, %c127] : memref<1x4x512xbf16, #tpu.memory_space<vmem>>, vector<1x4x324xbf16>
    %23 = vector.shape_cast %22 : vector<1x4x324xbf16> to vector<4x324xbf16>
    %cst_21 = arith.constant dense<0.000000e+00> : vector<8x324xf32>
    %24 = tpu.matmul %21, %23, %cst_21 {dimension_numbers = #tpu.dot_dimension_numbers<[1], [0], [0], [1], [0, 0, 1, 1], [], []>} : vector<8x4xbf16>, vector<4x324xbf16>, vector<8x324xf32> -> vector<8x324xf32>
    %25 = arith.addf %19, %24 : vector<8x324xf32>
    %c4 = arith.constant 4 : index
    %c0_22 = arith.constant 0 : index
    %c0_23 = arith.constant 0 : index
    %26 = vector.load %arg3[%c4, %c0_22, %c0_23] : memref<9x8x4xbf16, #tpu.memory_space<vmem>>, vector<1x8x4xbf16>
    %27 = vector.shape_cast %26 : vector<1x8x4xbf16> to vector<8x4xbf16>
    %c0_24 = arith.constant 0 : index
    %c0_25 = arith.constant 0 : index
    %c128 = arith.constant 128 : index
    %28 = vector.load %arg2[%c0_24, %c0_25, %c128] : memref<1x4x512xbf16, #tpu.memory_space<vmem>>, vector<1x4x324xbf16>
    %29 = vector.shape_cast %28 : vector<1x4x324xbf16> to vector<4x324xbf16>
    %cst_26 = arith.constant dense<0.000000e+00> : vector<8x324xf32>
    %30 = tpu.matmul %27, %29, %cst_26 {dimension_numbers = #tpu.dot_dimension_numbers<[1], [0], [0], [1], [0, 0, 1, 1], [], []>} : vector<8x4xbf16>, vector<4x324xbf16>, vector<8x324xf32> -> vector<8x324xf32>
    %31 = arith.addf %25, %30 : vector<8x324xf32>
    %c5 = arith.constant 5 : index
    %c0_27 = arith.constant 0 : index
    %c0_28 = arith.constant 0 : index
    %32 = vector.load %arg3[%c5, %c0_27, %c0_28] : memref<9x8x4xbf16, #tpu.memory_space<vmem>>, vector<1x8x4xbf16>
    %33 = vector.shape_cast %32 : vector<1x8x4xbf16> to vector<8x4xbf16>
    %c0_29 = arith.constant 0 : index
    %c0_30 = arith.constant 0 : index
    %c129 = arith.constant 129 : index
    %34 = vector.load %arg2[%c0_29, %c0_30, %c129] : memref<1x4x512xbf16, #tpu.memory_space<vmem>>, vector<1x4x324xbf16>
    %35 = vector.shape_cast %34 : vector<1x4x324xbf16> to vector<4x324xbf16>
    %cst_31 = arith.constant dense<0.000000e+00> : vector<8x324xf32>
    %36 = tpu.matmul %33, %35, %cst_31 {dimension_numbers = #tpu.dot_dimension_numbers<[1], [0], [0], [1], [0, 0, 1, 1], [], []>} : vector<8x4xbf16>, vector<4x324xbf16>, vector<8x324xf32> -> vector<8x324xf32>
    %37 = arith.addf %31, %36 : vector<8x324xf32>
    %c6 = arith.constant 6 : index
    %c0_32 = arith.constant 0 : index
    %c0_33 = arith.constant 0 : index
    %38 = vector.load %arg3[%c6, %c0_32, %c0_33] : memref<9x8x4xbf16, #tpu.memory_space<vmem>>, vector<1x8x4xbf16>
    %39 = vector.shape_cast %38 : vector<1x8x4xbf16> to vector<8x4xbf16>
    %c0_34 = arith.constant 0 : index
    %c0_35 = arith.constant 0 : index
    %c145 = arith.constant 145 : index
    %40 = vector.load %arg2[%c0_34, %c0_35, %c145] : memref<1x4x512xbf16, #tpu.memory_space<vmem>>, vector<1x4x324xbf16>
    %41 = vector.shape_cast %40 : vector<1x4x324xbf16> to vector<4x324xbf16>
    %cst_36 = arith.constant dense<0.000000e+00> : vector<8x324xf32>
    %42 = tpu.matmul %39, %41, %cst_36 {dimension_numbers = #tpu.dot_dimension_numbers<[1], [0], [0], [1], [0, 0, 1, 1], [], []>} : vector<8x4xbf16>, vector<4x324xbf16>, vector<8x324xf32> -> vector<8x324xf32>
    %43 = arith.addf %37, %42 : vector<8x324xf32>
    %c7 = arith.constant 7 : index
    %c0_37 = arith.constant 0 : index
    %c0_38 = arith.constant 0 : index
    %44 = vector.load %arg3[%c7, %c0_37, %c0_38] : memref<9x8x4xbf16, #tpu.memory_space<vmem>>, vector<1x8x4xbf16>
    %45 = vector.shape_cast %44 : vector<1x8x4xbf16> to vector<8x4xbf16>
    %c0_39 = arith.constant 0 : index
    %c0_40 = arith.constant 0 : index
    %c146 = arith.constant 146 : index
    %46 = vector.load %arg2[%c0_39, %c0_40, %c146] : memref<1x4x512xbf16, #tpu.memory_space<vmem>>, vector<1x4x324xbf16>
    %47 = vector.shape_cast %46 : vector<1x4x324xbf16> to vector<4x324xbf16>
    %cst_41 = arith.constant dense<0.000000e+00> : vector<8x324xf32>
    %48 = tpu.matmul %45, %47, %cst_41 {dimension_numbers = #tpu.dot_dimension_numbers<[1], [0], [0], [1], [0, 0, 1, 1], [], []>} : vector<8x4xbf16>, vector<4x324xbf16>, vector<8x324xf32> -> vector<8x324xf32>
    %49 = arith.addf %43, %48 : vector<8x324xf32>
    %c8 = arith.constant 8 : index
    %c0_42 = arith.constant 0 : index
    %c0_43 = arith.constant 0 : index
    %50 = vector.load %arg3[%c8, %c0_42, %c0_43] : memref<9x8x4xbf16, #tpu.memory_space<vmem>>, vector<1x8x4xbf16>
    %51 = vector.shape_cast %50 : vector<1x8x4xbf16> to vector<8x4xbf16>
    %c0_44 = arith.constant 0 : index
    %c0_45 = arith.constant 0 : index
    %c147 = arith.constant 147 : index
    %52 = vector.load %arg2[%c0_44, %c0_45, %c147] : memref<1x4x512xbf16, #tpu.memory_space<vmem>>, vector<1x4x324xbf16>
    %53 = vector.shape_cast %52 : vector<1x4x324xbf16> to vector<4x324xbf16>
    %cst_46 = arith.constant dense<0.000000e+00> : vector<8x324xf32>
    %54 = tpu.matmul %51, %53, %cst_46 {dimension_numbers = #tpu.dot_dimension_numbers<[1], [0], [0], [1], [0, 0, 1, 1], [], []>} : vector<8x4xbf16>, vector<4x324xbf16>, vector<8x324xf32> -> vector<8x324xf32>
    %55 = arith.addf %49, %54 : vector<8x324xf32>
    %c0_47 = arith.constant 0 : index
    %c0_48 = arith.constant 0 : index
    %56 = vector.load %arg4[%c0_47, %c0_48] : memref<8x1xf32, #tpu.memory_space<vmem>>, vector<8x1xf32>
    %57 = vector.broadcast %56 : vector<8x1xf32> to vector<8x324xf32>
    %58 = arith.mulf %55, %57 : vector<8x324xf32>
    %c0_49 = arith.constant 0 : index
    %c0_50 = arith.constant 0 : index
    %59 = vector.load %arg5[%c0_49, %c0_50] : memref<8x1xf32, #tpu.memory_space<vmem>>, vector<8x1xf32>
    %60 = vector.broadcast %59 : vector<8x1xf32> to vector<8x324xf32>
    %61 = arith.addf %58, %60 : vector<8x324xf32>
    %cst_51 = arith.constant 0.000000e+00 : f32
    %62 = vector.broadcast %cst_51 : f32 to vector<8x324xf32>
    %63 = arith.maximumf %61, %62 : vector<8x324xf32>
    %64 = vector.broadcast %0 : vector<1x324xf32> to vector<8x324xf32>
    %65 = arith.mulf %63, %64 : vector<8x324xf32>
    %cst_52 = arith.constant 0.000000e+00 : bf16
    %66 = vector.broadcast %cst_52 : bf16 to vector<8x512xbf16>
    %c0_53 = arith.constant 0 : index
    %c0_54 = arith.constant 0 : index
    %67 = vector.load %arg13[%c0_53, %c0_54] : memref<8x512xbf16, #tpu.memory_space<vmem>>, vector<8x512xbf16>
    tpu.vector_store %arg13[%c0_53, %c0_54], %66 {strides = array<i32>} : memref<8x512xbf16, #tpu.memory_space<vmem>>, vector<8x512xbf16>,
    %68 = arith.truncf %65 : vector<8x324xf32> to vector<8x324xbf16>
    %c0_55 = arith.constant 0 : index
    %c128_56 = arith.constant 128 : index
    %69 = vector.load %arg13[%c0_55, %c128_56] : memref<8x512xbf16, #tpu.memory_space<vmem>>, vector<8x324xbf16>
    tpu.vector_store %arg13[%c0_55, %c128_56], %68 {strides = array<i32>} : memref<8x512xbf16, #tpu.memory_space<vmem>>, vector<8x324xbf16>,
    %cst_57 = arith.constant 0.000000e+00 : f32
    %70 = vector.broadcast %cst_57 : f32 to vector<8x324xf32>
    %c0_58 = arith.constant 0 : index
    %c0_59 = arith.constant 0 : index
    %c0_60 = arith.constant 0 : index
    %71 = vector.load %arg6[%c0_58, %c0_59, %c0_60] : memref<9x8x8xbf16, #tpu.memory_space<vmem>>, vector<1x8x8xbf16>
    %72 = vector.shape_cast %71 : vector<1x8x8xbf16> to vector<8x8xbf16>
    %c0_61 = arith.constant 0 : index
    %c109_62 = arith.constant 109 : index
    %73 = vector.load %arg13[%c0_61, %c109_62] : memref<8x512xbf16, #tpu.memory_space<vmem>>, vector<8x324xbf16>
    %cst_63 = arith.constant dense<0.000000e+00> : vector<8x324xf32>
    %74 = tpu.matmul %72, %73, %cst_63 {dimension_numbers = #tpu.dot_dimension_numbers<[1], [0], [0], [1], [0, 0, 1, 1], [], []>} : vector<8x8xbf16>, vector<8x324xbf16>, vector<8x324xf32> -> vector<8x324xf32>
    %75 = arith.addf %70, %74 : vector<8x324xf32>
    %c1_64 = arith.constant 1 : index
    %c0_65 = arith.constant 0 : index
    %c0_66 = arith.constant 0 : index
    %76 = vector.load %arg6[%c1_64, %c0_65, %c0_66] : memref<9x8x8xbf16, #tpu.memory_space<vmem>>, vector<1x8x8xbf16>
    %77 = vector.shape_cast %76 : vector<1x8x8xbf16> to vector<8x8xbf16>
    %c0_67 = arith.constant 0 : index
    %c110_68 = arith.constant 110 : index
    %78 = vector.load %arg13[%c0_67, %c110_68] : memref<8x512xbf16, #tpu.memory_space<vmem>>, vector<8x324xbf16>
    %cst_69 = arith.constant dense<0.000000e+00> : vector<8x324xf32>
    %79 = tpu.matmul %77, %78, %cst_69 {dimension_numbers = #tpu.dot_dimension_numbers<[1], [0], [0], [1], [0, 0, 1, 1], [], []>} : vector<8x8xbf16>, vector<8x324xbf16>, vector<8x324xf32> -> vector<8x324xf32>
    %80 = arith.addf %75, %79 : vector<8x324xf32>
    %c2_70 = arith.constant 2 : index
    %c0_71 = arith.constant 0 : index
    %c0_72 = arith.constant 0 : index
    %81 = vector.load %arg6[%c2_70, %c0_71, %c0_72] : memref<9x8x8xbf16, #tpu.memory_space<vmem>>, vector<1x8x8xbf16>
    %82 = vector.shape_cast %81 : vector<1x8x8xbf16> to vector<8x8xbf16>
    %c0_73 = arith.constant 0 : index
    %c111_74 = arith.constant 111 : index
    %83 = vector.load %arg13[%c0_73, %c111_74] : memref<8x512xbf16, #tpu.memory_space<vmem>>, vector<8x324xbf16>
    %cst_75 = arith.constant dense<0.000000e+00> : vector<8x324xf32>
    %84 = tpu.matmul %82, %83, %cst_75 {dimension_numbers = #tpu.dot_dimension_numbers<[1], [0], [0], [1], [0, 0, 1, 1], [], []>} : vector<8x8xbf16>, vector<8x324xbf16>, vector<8x324xf32> -> vector<8x324xf32>
    %85 = arith.addf %80, %84 : vector<8x324xf32>
    %c3_76 = arith.constant 3 : index
    %c0_77 = arith.constant 0 : index
    %c0_78 = arith.constant 0 : index
    %86 = vector.load %arg6[%c3_76, %c0_77, %c0_78] : memref<9x8x8xbf16, #tpu.memory_space<vmem>>, vector<1x8x8xbf16>
    %87 = vector.shape_cast %86 : vector<1x8x8xbf16> to vector<8x8xbf16>
    %c0_79 = arith.constant 0 : index
    %c127_80 = arith.constant 127 : index
    %88 = vector.load %arg13[%c0_79, %c127_80] : memref<8x512xbf16, #tpu.memory_space<vmem>>, vector<8x324xbf16>
    %cst_81 = arith.constant dense<0.000000e+00> : vector<8x324xf32>
    %89 = tpu.matmul %87, %88, %cst_81 {dimension_numbers = #tpu.dot_dimension_numbers<[1], [0], [0], [1], [0, 0, 1, 1], [], []>} : vector<8x8xbf16>, vector<8x324xbf16>, vector<8x324xf32> -> vector<8x324xf32>
    %90 = arith.addf %85, %89 : vector<8x324xf32>
    %c4_82 = arith.constant 4 : index
    %c0_83 = arith.constant 0 : index
    %c0_84 = arith.constant 0 : index
    %91 = vector.load %arg6[%c4_82, %c0_83, %c0_84] : memref<9x8x8xbf16, #tpu.memory_space<vmem>>, vector<1x8x8xbf16>
    %92 = vector.shape_cast %91 : vector<1x8x8xbf16> to vector<8x8xbf16>
    %c0_85 = arith.constant 0 : index
    %c128_86 = arith.constant 128 : index
    %93 = vector.load %arg13[%c0_85, %c128_86] : memref<8x512xbf16, #tpu.memory_space<vmem>>, vector<8x324xbf16>
    %cst_87 = arith.constant dense<0.000000e+00> : vector<8x324xf32>
    %94 = tpu.matmul %92, %93, %cst_87 {dimension_numbers = #tpu.dot_dimension_numbers<[1], [0], [0], [1], [0, 0, 1, 1], [], []>} : vector<8x8xbf16>, vector<8x324xbf16>, vector<8x324xf32> -> vector<8x324xf32>
    %95 = arith.addf %90, %94 : vector<8x324xf32>
    %c5_88 = arith.constant 5 : index
    %c0_89 = arith.constant 0 : index
    %c0_90 = arith.constant 0 : index
    %96 = vector.load %arg6[%c5_88, %c0_89, %c0_90] : memref<9x8x8xbf16, #tpu.memory_space<vmem>>, vector<1x8x8xbf16>
    %97 = vector.shape_cast %96 : vector<1x8x8xbf16> to vector<8x8xbf16>
    %c0_91 = arith.constant 0 : index
    %c129_92 = arith.constant 129 : index
    %98 = vector.load %arg13[%c0_91, %c129_92] : memref<8x512xbf16, #tpu.memory_space<vmem>>, vector<8x324xbf16>
    %cst_93 = arith.constant dense<0.000000e+00> : vector<8x324xf32>
    %99 = tpu.matmul %97, %98, %cst_93 {dimension_numbers = #tpu.dot_dimension_numbers<[1], [0], [0], [1], [0, 0, 1, 1], [], []>} : vector<8x8xbf16>, vector<8x324xbf16>, vector<8x324xf32> -> vector<8x324xf32>
    %100 = arith.addf %95, %99 : vector<8x324xf32>
    %c6_94 = arith.constant 6 : index
    %c0_95 = arith.constant 0 : index
    %c0_96 = arith.constant 0 : index
    %101 = vector.load %arg6[%c6_94, %c0_95, %c0_96] : memref<9x8x8xbf16, #tpu.memory_space<vmem>>, vector<1x8x8xbf16>
    %102 = vector.shape_cast %101 : vector<1x8x8xbf16> to vector<8x8xbf16>
    %c0_97 = arith.constant 0 : index
    %c145_98 = arith.constant 145 : index
    %103 = vector.load %arg13[%c0_97, %c145_98] : memref<8x512xbf16, #tpu.memory_space<vmem>>, vector<8x324xbf16>
    %cst_99 = arith.constant dense<0.000000e+00> : vector<8x324xf32>
    %104 = tpu.matmul %102, %103, %cst_99 {dimension_numbers = #tpu.dot_dimension_numbers<[1], [0], [0], [1], [0, 0, 1, 1], [], []>} : vector<8x8xbf16>, vector<8x324xbf16>, vector<8x324xf32> -> vector<8x324xf32>
    %105 = arith.addf %100, %104 : vector<8x324xf32>
    %c7_100 = arith.constant 7 : index
    %c0_101 = arith.constant 0 : index
    %c0_102 = arith.constant 0 : index
    %106 = vector.load %arg6[%c7_100, %c0_101, %c0_102] : memref<9x8x8xbf16, #tpu.memory_space<vmem>>, vector<1x8x8xbf16>
    %107 = vector.shape_cast %106 : vector<1x8x8xbf16> to vector<8x8xbf16>
    %c0_103 = arith.constant 0 : index
    %c146_104 = arith.constant 146 : index
    %108 = vector.load %arg13[%c0_103, %c146_104] : memref<8x512xbf16, #tpu.memory_space<vmem>>, vector<8x324xbf16>
    %cst_105 = arith.constant dense<0.000000e+00> : vector<8x324xf32>
    %109 = tpu.matmul %107, %108, %cst_105 {dimension_numbers = #tpu.dot_dimension_numbers<[1], [0], [0], [1], [0, 0, 1, 1], [], []>} : vector<8x8xbf16>, vector<8x324xbf16>, vector<8x324xf32> -> vector<8x324xf32>
    %110 = arith.addf %105, %109 : vector<8x324xf32>
    %c8_106 = arith.constant 8 : index
    %c0_107 = arith.constant 0 : index
    %c0_108 = arith.constant 0 : index
    %111 = vector.load %arg6[%c8_106, %c0_107, %c0_108] : memref<9x8x8xbf16, #tpu.memory_space<vmem>>, vector<1x8x8xbf16>
    %112 = vector.shape_cast %111 : vector<1x8x8xbf16> to vector<8x8xbf16>
    %c0_109 = arith.constant 0 : index
    %c147_110 = arith.constant 147 : index
    %113 = vector.load %arg13[%c0_109, %c147_110] : memref<8x512xbf16, #tpu.memory_space<vmem>>, vector<8x324xbf16>
    %cst_111 = arith.constant dense<0.000000e+00> : vector<8x324xf32>
    %114 = tpu.matmul %112, %113, %cst_111 {dimension_numbers = #tpu.dot_dimension_numbers<[1], [0], [0], [1], [0, 0, 1, 1], [], []>} : vector<8x8xbf16>, vector<8x324xbf16>, vector<8x324xf32> -> vector<8x324xf32>
    %115 = arith.addf %110, %114 : vector<8x324xf32>
    %c0_112 = arith.constant 0 : index
    %c0_113 = arith.constant 0 : index
    %116 = vector.load %arg7[%c0_112, %c0_113] : memref<8x1xf32, #tpu.memory_space<vmem>>, vector<8x1xf32>
    %117 = vector.broadcast %116 : vector<8x1xf32> to vector<8x324xf32>
    %118 = arith.mulf %115, %117 : vector<8x324xf32>
    %c0_114 = arith.constant 0 : index
    %c0_115 = arith.constant 0 : index
    %119 = vector.load %arg8[%c0_114, %c0_115] : memref<8x1xf32, #tpu.memory_space<vmem>>, vector<8x1xf32>
    %120 = vector.broadcast %119 : vector<8x1xf32> to vector<8x324xf32>
    %121 = arith.addf %118, %120 : vector<8x324xf32>
    %c0_116 = arith.constant 0 : index
    %c0_117 = arith.constant 0 : index
    %c128_118 = arith.constant 128 : index
    %122 = vector.load %arg2[%c0_116, %c0_117, %c128_118] : memref<1x4x512xbf16, #tpu.memory_space<vmem>>, vector<1x4x324xbf16>
    %123 = vector.shape_cast %122 : vector<1x4x324xbf16> to vector<4x324xbf16>
    %c0_119 = arith.constant 0 : index
    %c0_120 = arith.constant 0 : index
    %124 = vector.load %arg9[%c0_119, %c0_120] : memref<8x4xbf16, #tpu.memory_space<vmem>>, vector<8x4xbf16>
    %cst_121 = arith.constant dense<0.000000e+00> : vector<8x324xf32>
    %125 = tpu.matmul %124, %123, %cst_121 {dimension_numbers = #tpu.dot_dimension_numbers<[1], [0], [0], [1], [0, 0, 1, 1], [], []>} : vector<8x4xbf16>, vector<4x324xbf16>, vector<8x324xf32> -> vector<8x324xf32>
    %c0_122 = arith.constant 0 : index
    %c0_123 = arith.constant 0 : index
    %126 = vector.load %arg10[%c0_122, %c0_123] : memref<8x1xf32, #tpu.memory_space<vmem>>, vector<8x1xf32>
    %127 = vector.broadcast %126 : vector<8x1xf32> to vector<8x324xf32>
    %128 = arith.mulf %125, %127 : vector<8x324xf32>
    %129 = arith.addf %121, %128 : vector<8x324xf32>
    %c0_124 = arith.constant 0 : index
    %c0_125 = arith.constant 0 : index
    %130 = vector.load %arg11[%c0_124, %c0_125] : memref<8x1xf32, #tpu.memory_space<vmem>>, vector<8x1xf32>
    %131 = vector.broadcast %130 : vector<8x1xf32> to vector<8x324xf32>
    %132 = arith.addf %129, %131 : vector<8x324xf32>
    %cst_126 = arith.constant 0.000000e+00 : f32
    %133 = vector.broadcast %cst_126 : f32 to vector<8x324xf32>
    %134 = arith.minimumf %132, %133 : vector<8x324xf32>
    %135 = math.exp %134 : vector<8x324xf32>
    %cst_127 = arith.constant 1.000000e+00 : f32
    %136 = vector.broadcast %cst_127 : f32 to vector<8x324xf32>
    %137 = arith.subf %135, %136 : vector<8x324xf32>
    %cst_128 = arith.constant 1.67326319 : f32
    %138 = vector.broadcast %cst_128 : f32 to vector<8x324xf32>
    %139 = arith.mulf %138, %137 : vector<8x324xf32>
    %cst_129 = arith.constant 0.000000e+00 : f32
    %140 = vector.broadcast %cst_129 : f32 to vector<8x324xf32>
    %141 = arith.cmpf ogt, %132, %140 : vector<8x324xf32>
    %142 = arith.select %141, %132, %139 : vector<8x324xi1>, vector<8x324xf32>
    %cst_130 = arith.constant 1.05070102 : f32
    %143 = vector.broadcast %cst_130 : f32 to vector<8x324xf32>
    %144 = arith.mulf %143, %142 : vector<8x324xf32>
    %c0_131 = arith.constant 0 : index
    %c0_132 = arith.constant 0 : index
    %c0_133 = arith.constant 0 : index
    %145 = vector.load %arg12[%c0_131, %c0_132, %c0_133] : memref<1x8x324xf32, #tpu.memory_space<vmem>>, vector<1x8x324xf32>
    %146 = vector.shape_cast %145 : vector<1x8x324xf32> to vector<8x324xf32>
    %147 = vector.shape_cast %144 : vector<8x324xf32> to vector<1x8x324xf32>
    tpu.vector_store %arg12[%c0_131, %c0_132, %c0_133], %147 {strides = array<i32>} : memref<1x8x324xf32, #tpu.memory_space<vmem>>, vector<1x8x324xf32>,
    return
  }
  func.func @transform_0(%arg0: i32) -> (i32, i32) {
    %c0_i32 = arith.constant 0 : i32
    %c0_i32_0 = arith.constant 0 : i32
    %c0_i32_1 = arith.constant 0 : i32
    return %c0_i32, %c0_i32_0 : i32, i32
  }
  func.func @transform_1(%arg0: i32) -> (i32, i32, i32) {
    %c0_i32 = arith.constant 0 : i32
    %c0_i32_0 = arith.constant 0 : i32
    %c0_i32_1 = arith.constant 0 : i32
    return %arg0, %c0_i32, %c0_i32_0 : i32, i32, i32
  }
  func.func @transform_2(%arg0: i32) -> (i32, i32, i32) {
    %c0_i32 = arith.constant 0 : i32
    %c0_i32_0 = arith.constant 0 : i32
    %c0_i32_1 = arith.constant 0 : i32
    %c0_i32_2 = arith.constant 0 : i32
    return %c0_i32, %c0_i32_0, %c0_i32_1 : i32, i32, i32
  }
  func.func @transform_3(%arg0: i32) -> (i32, i32) {
    %c0_i32 = arith.constant 0 : i32
    %c0_i32_0 = arith.constant 0 : i32
    %c0_i32_1 = arith.constant 0 : i32
    return %c0_i32, %c0_i32_0 : i32, i32
  }
  func.func @transform_4(%arg0: i32) -> (i32, i32) {
    %c0_i32 = arith.constant 0 : i32
    %c0_i32_0 = arith.constant 0 : i32
    %c0_i32_1 = arith.constant 0 : i32
    return %c0_i32, %c0_i32_0 : i32, i32
  }
  func.func @transform_5(%arg0: i32) -> (i32, i32, i32) {
    %c0_i32 = arith.constant 0 : i32
    %c0_i32_0 = arith.constant 0 : i32
    %c0_i32_1 = arith.constant 0 : i32
    %c0_i32_2 = arith.constant 0 : i32
    return %c0_i32, %c0_i32_0, %c0_i32_1 : i32, i32, i32
  }
  func.func @transform_6(%arg0: i32) -> (i32, i32) {
    %c0_i32 = arith.constant 0 : i32
    %c0_i32_0 = arith.constant 0 : i32
    %c0_i32_1 = arith.constant 0 : i32
    return %c0_i32, %c0_i32_0 : i32, i32
  }
  func.func @transform_7(%arg0: i32) -> (i32, i32) {
    %c0_i32 = arith.constant 0 : i32
    %c0_i32_0 = arith.constant 0 : i32
    %c0_i32_1 = arith.constant 0 : i32
    return %c0_i32, %c0_i32_0 : i32, i32
  }
  func.func @transform_8(%arg0: i32) -> (i32, i32) {
    %c0_i32 = arith.constant 0 : i32
    %c0_i32_0 = arith.constant 0 : i32
    %c0_i32_1 = arith.constant 0 : i32
    return %c0_i32, %c0_i32_0 : i32, i32
  }
  func.func @transform_9(%arg0: i32) -> (i32, i32) {
    %c0_i32 = arith.constant 0 : i32
    %c0_i32_0 = arith.constant 0 : i32
    %c0_i32_1 = arith.constant 0 : i32
    return %c0_i32, %c0_i32_0 : i32, i32
  }
  func.func @transform_10(%arg0: i32) -> (i32, i32) {
    %c0_i32 = arith.constant 0 : i32
    %c0_i32_0 = arith.constant 0 : i32
    %c0_i32_1 = arith.constant 0 : i32
    return %c0_i32, %c0_i32_0 : i32, i32
  }
  func.func @transform_11(%arg0: i32) -> (i32, i32, i32) {
    %c0_i32 = arith.constant 0 : i32
    %c0_i32_0 = arith.constant 0 : i32
    %c0_i32_1 = arith.constant 0 : i32
    return %arg0, %c0_i32, %c0_i32_0 : i32, i32, i32
  }
}

</mosaic_0001>

<llo_original>
// kernel: tpu_custom_call.1
$region0: #{tpu_custom_call.1}
  #allocation0 [shape = 'u32[]', space=smem, size = 0x4, offset = 0x4, fixed_abs, tag = 'smem constant byte address 0x4 - core index']
  #allocation1 [shape = 'u32[144,128]{1,0:T(1,128)}', space=vmem, size = 0x12000, scoped, tag = 'internal scratch']
  #allocation2 [shape = 'bf16[8,512]{1,0:T(8,128)(2,1)}', space=vmem, size = 0x2000, scoped, tag = 'scratch operand']
  %s0 = inlined_call_operand.vmem [shape: f32[1,324], index: 0, kind: input, shape index: {}]
  %s1 = inlined_call_operand.vmem [shape: bf16[2,4,512], index: 1, kind: input, shape index: {}]
  %s2 = inlined_call_operand.vmem [shape: bf16[9,8,4], index: 2, kind: input, shape index: {}]
  %s3 = inlined_call_operand.vmem [shape: f32[8,1], index: 3, kind: input, shape index: {}]
  %s4 = inlined_call_operand.vmem [shape: f32[8,1], index: 4, kind: input, shape index: {}]
  %s5 = inlined_call_operand.vmem [shape: bf16[9,8,8], index: 5, kind: input, shape index: {}]
  %s6 = inlined_call_operand.vmem [shape: f32[8,1], index: 6, kind: input, shape index: {}]
  %s7 = inlined_call_operand.vmem [shape: f32[8,1], index: 7, kind: input, shape index: {}]
  %s8 = inlined_call_operand.vmem [shape: bf16[8,4], index: 8, kind: input, shape index: {}]
  %s9 = inlined_call_operand.vmem [shape: f32[8,1], index: 9, kind: input, shape index: {}]
  %s10 = inlined_call_operand.vmem [shape: f32[8,1], index: 10, kind: input, shape index: {}]
  %s11 = inlined_call_operand.hbm [shape: f32[2,8,324], index: 11, kind: output, shape index: {}]
  %s12 = sld [smem:[#allocation0]]
  $region77: #{tpu_custom_call.1} parent=0
    _
  %s14 = ssub.s32 1, %s12
  %s15 = scalar_select 0, %s14, %s12
  $region1: #{tpu_custom_call.1} parent=0
    #allocation3 [shape = 'u8[24576]{0}', space=vmem, size = 0x6000, scoped, tag = 'output window, operand 0']
    #allocation4 [shape = 's32[2]{0}', space=sflag, size = 0x8, scoped, tag = 'scoped memory for tpu_custom_call.1']
    %16 = vsyncpa [#allocation4], 0
    %s17 = scalar_lea.sflag [#allocation4], 1
    %18 = vsyncpa %s17, 0
    loop: start=0, step=1, limit=4
    $region2: #{tpu_custom_call.1} parent=1 // loop_pre_header
      _
    $region3: #{tpu_custom_call.1} parent=1 // loop_header
      %s20 = sphi 0, %s24
      %p21 = scmp.ge.s32.totalorder %s20, 4
      %s28 = sphi 0, %s28
      %s30 = sphi 0, %s28
      %s31 = sphi 0, %s30
      %s45 = sphi 0, %s31
      %s51 = sphi 0, %s53
      %s54 = sphi 0, %s51
      %s55 = sphi 0, %s54
      %s71 = sphi 0, %s55
      %s75 = sphi 0, %s75
      %s77 = sphi 0, %s75
      %s78 = sphi 0, %s77
      %s92 = sphi 0, %s78
      %s96 = sphi 0, %s96
      %s98 = sphi 0, %s96
      %s99 = sphi 0, %s98
      %s113 = sphi 0, %s99
      %s117 = sphi 0, %s117
      %s119 = sphi 0, %s117
      %s120 = sphi 0, %s119
      %s134 = sphi 0, %s120
      %s138 = sphi 0, %s138
      %s140 = sphi 0, %s138
      %s141 = sphi 0, %s140
      %s155 = sphi 0, %s141
      %s159 = sphi 0, %s159
      %s161 = sphi 0, %s159
      %s162 = sphi 0, %s161
      %s176 = sphi 0, %s162
      %s180 = sphi 0, %s180
      %s182 = sphi 0, %s180
      %s183 = sphi 0, %s182
      %s197 = sphi 0, %s183
      %s201 = sphi 0, %s201
      %s203 = sphi 0, %s201
      %s204 = sphi 0, %s203
      %s218 = sphi 0, %s204
      %s222 = sphi 0, %s222
      %s224 = sphi 0, %s222
      %s225 = sphi 0, %s224
      %s239 = sphi 0, %s225
      %s243 = sphi 0, %s243
      %s245 = sphi 0, %s243
      %s246 = sphi 0, %s245
      %s260 = sphi 0, %s246
      %s266 = sphi 0, %s268
      %s269 = sphi 0, %s266
      %s270 = sphi 0, %s269
      %s286 = sphi 0, %s270
    $region4: #{tpu_custom_call.1} parent=1 // loop_header_branch
      %23 = sbr.rel (%p21) target = $region8
    $region5: #{tpu_custom_call.1} parent=1 // loop_body
      %s25 = ssub.s32 %s20, 1
      %s26 = ssub.s32 %s20, 2
      %s27 = sadd.s32 %s20, 1
      %s29 = sadd.s32 %s28, 1
      %p32 = scmp.eq.s32.totalorder %s20, 1
      %p33 = scmp.ne.s32.totalorder %s28, %s30
      %p34 = scmp.eq.s32.totalorder %s20, 0
      %p35 = por %p33, %p34
      %p36 = scmp.ne.s32.totalorder %s28, %s30
      %p37 = scmp.eq.s32.totalorder %s25, 1
      %p38 = por %p36, %p37
      %p39 = scmp.ne.s32.totalorder %s30, %s31
      %p40 = scmp.eq.s32.totalorder %s25, 0
      %p41 = por %p39, %p40
      %p42 = scmp.ne.s32.totalorder %s30, %s31
      %p43 = scmp.eq.s32.totalorder %s26, 1
      %p44 = por %p42, %p43
      %p46 = scmp.ne.s32.totalorder %s31, %s45
      %p47 = scmp.eq.s32.totalorder %s26, 0
      %p48 = por %p46, %p47
      %s49 = ssub.s32 %s20, %s27
      %p50 = scmp.eq.s32.totalorder %s49, 0
      %s52 = sadd.s32 %s51, 1
      %s53 = scalar_select %p50, %s51, %s52
      %p56 = pneg %p50
      %p57 = scmp.eq.s32.totalorder %s20, 1
      %p58 = por %p56, %p57
      %p59 = scmp.ne.s32.totalorder %s51, %s54
      %p60 = scmp.eq.s32.totalorder %s20, 0
      %p61 = por %p59, %p60
      %p62 = scmp.ne.s32.totalorder %s51, %s54
      %p63 = scmp.eq.s32.totalorder %s25, 1
      %p64 = por %p62, %p63
      %p65 = scmp.ne.s32.totalorder %s54, %s55
      %p66 = scmp.eq.s32.totalorder %s25, 0
      %p67 = por %p65, %p66
      %p68 = scmp.ne.s32.totalorder %s54, %s55
      %p69 = scmp.eq.s32.totalorder %s26, 1
      %p70 = por %p68, %p69
      %p72 = scmp.ne.s32.totalorder %s55, %s71
      %p73 = scmp.eq.s32.totalorder %s26, 0
      %p74 = por %p72, %p73
      %s76 = sadd.s32 %s75, 1
      %p79 = scmp.eq.s32.totalorder %s20, 1
      %p80 = scmp.ne.s32.totalorder %s75, %s77
      %p81 = scmp.eq.s32.totalorder %s20, 0
      %p82 = por %p80, %p81
      %p83 = scmp.ne.s32.totalorder %s75, %s77
      %p84 = scmp.eq.s32.totalorder %s25, 1
      %p85 = por %p83, %p84
      %p86 = scmp.ne.s32.totalorder %s77, %s78
      %p87 = scmp.eq.s32.totalorder %s25, 0
      %p88 = por %p86, %p87
      %p89 = scmp.ne.s32.totalorder %s77, %s78
      %p90 = scmp.eq.s32.totalorder %s26, 1
      %p91 = por %p89, %p90
      %p93 = scmp.ne.s32.totalorder %s78, %s92
      %p94 = scmp.eq.s32.totalorder %s26, 0
      %p95 = por %p93, %p94
      %s97 = sadd.s32 %s96, 1
      %p100 = scmp.eq.s32.totalorder %s20, 1
      %p101 = scmp.ne.s32.totalorder %s96, %s98
      %p102 = scmp.eq.s32.totalorder %s20, 0
      %p103 = por %p101, %p102
      %p104 = scmp.ne.s32.totalorder %s96, %s98
      %p105 = scmp.eq.s32.totalorder %s25, 1
      %p106 = por %p104, %p105
      %p107 = scmp.ne.s32.totalorder %s98, %s99
      %p108 = scmp.eq.s32.totalorder %s25, 0
      %p109 = por %p107, %p108
      %p110 = scmp.ne.s32.totalorder %s98, %s99
      %p111 = scmp.eq.s32.totalorder %s26, 1
      %p112 = por %p110, %p111
      %p114 = scmp.ne.s32.totalorder %s99, %s113
      %p115 = scmp.eq.s32.totalorder %s26, 0
      %p116 = por %p114, %p115
      %s118 = sadd.s32 %s117, 1
      %p121 = scmp.eq.s32.totalorder %s20, 1
      %p122 = scmp.ne.s32.totalorder %s117, %s119
      %p123 = scmp.eq.s32.totalorder %s20, 0
      %p124 = por %p122, %p123
      %p125 = scmp.ne.s32.totalorder %s117, %s119
      %p126 = scmp.eq.s32.totalorder %s25, 1
      %p127 = por %p125, %p126
      %p128 = scmp.ne.s32.totalorder %s119, %s120
      %p129 = scmp.eq.s32.totalorder %s25, 0
      %p130 = por %p128, %p129
      %p131 = scmp.ne.s32.totalorder %s119, %s120
      %p132 = scmp.eq.s32.totalorder %s26, 1
      %p133 = por %p131, %p132
      %p135 = scmp.ne.s32.totalorder %s120, %s134
      %p136 = scmp.eq.s32.totalorder %s26, 0
      %p137 = por %p135, %p136
      %s139 = sadd.s32 %s138, 1
      %p142 = scmp.eq.s32.totalorder %s20, 1
      %p143 = scmp.ne.s32.totalorder %s138, %s140
      %p144 = scmp.eq.s32.totalorder %s20, 0
      %p145 = por %p143, %p144
      %p146 = scmp.ne.s32.totalorder %s138, %s140
      %p147 = scmp.eq.s32.totalorder %s25, 1
      %p148 = por %p146, %p147
      %p149 = scmp.ne.s32.totalorder %s140, %s141
      %p150 = scmp.eq.s32.totalorder %s25, 0
      %p151 = por %p149, %p150
      %p152 = scmp.ne.s32.totalorder %s140, %s141
      %p153 = scmp.eq.s32.totalorder %s26, 1
      %p154 = por %p152, %p153
      %p156 = scmp.ne.s32.totalorder %s141, %s155
      %p157 = scmp.eq.s32.totalorder %s26, 0
      %p158 = por %p156, %p157
      %s160 = sadd.s32 %s159, 1
      %p163 = scmp.eq.s32.totalorder %s20, 1
      %p164 = scmp.ne.s32.totalorder %s159, %s161
      %p165 = scmp.eq.s32.totalorder %s20, 0
      %p166 = por %p164, %p165
      %p167 = scmp.ne.s32.totalorder %s159, %s161
      %p168 = scmp.eq.s32.totalorder %s25, 1
      %p169 = por %p167, %p168
      %p170 = scmp.ne.s32.totalorder %s161, %s162
      %p171 = scmp.eq.s32.totalorder %s25, 0
      %p172 = por %p170, %p171
      %p173 = scmp.ne.s32.totalorder %s161, %s162
      %p174 = scmp.eq.s32.totalorder %s26, 1
      %p175 = por %p173, %p174
      %p177 = scmp.ne.s32.totalorder %s162, %s176
      %p178 = scmp.eq.s32.totalorder %s26, 0
      %p179 = por %p177, %p178
      %s181 = sadd.s32 %s180, 1
      %p184 = scmp.eq.s32.totalorder %s20, 1
      %p185 = scmp.ne.s32.totalorder %s180, %s182
      %p186 = scmp.eq.s32.totalorder %s20, 0
      %p187 = por %p185, %p186
      %p188 = scmp.ne.s32.totalorder %s180, %s182
      %p189 = scmp.eq.s32.totalorder %s25, 1
      %p190 = por %p188, %p189
      %p191 = scmp.ne.s32.totalorder %s182, %s183
      %p192 = scmp.eq.s32.totalorder %s25, 0
      %p193 = por %p191, %p192
      %p194 = scmp.ne.s32.totalorder %s182, %s183
      %p195 = scmp.eq.s32.totalorder %s26, 1
      %p196 = por %p194, %p195
      %p198 = scmp.ne.s32.totalorder %s183, %s197
      %p199 = scmp.eq.s32.totalorder %s26, 0
      %p200 = por %p198, %p199
      %s202 = sadd.s32 %s201, 1
      %p205 = scmp.eq.s32.totalorder %s20, 1
      %p206 = scmp.ne.s32.totalorder %s201, %s203
      %p207 = scmp.eq.s32.totalorder %s20, 0
      %p208 = por %p206, %p207
      %p209 = scmp.ne.s32.totalorder %s201, %s203
      %p210 = scmp.eq.s32.totalorder %s25, 1
      %p211 = por %p209, %p210
      %p212 = scmp.ne.s32.totalorder %s203, %s204
      %p213 = scmp.eq.s32.totalorder %s25, 0
      %p214 = por %p212, %p213
      %p215 = scmp.ne.s32.totalorder %s203, %s204
      %p216 = scmp.eq.s32.totalorder %s26, 1
      %p217 = por %p215, %p216
      %p219 = scmp.ne.s32.totalorder %s204, %s218
      %p220 = scmp.eq.s32.totalorder %s26, 0
      %p221 = por %p219, %p220
      %s223 = sadd.s32 %s222, 1
      %p226 = scmp.eq.s32.totalorder %s20, 1
      %p227 = scmp.ne.s32.totalorder %s222, %s224
      %p228 = scmp.eq.s32.totalorder %s20, 0
      %p229 = por %p227, %p228
      %p230 = scmp.ne.s32.totalorder %s222, %s224
      %p231 = scmp.eq.s32.totalorder %s25, 1
      %p232 = por %p230, %p231
      %p233 = scmp.ne.s32.totalorder %s224, %s225
      %p234 = scmp.eq.s32.totalorder %s25, 0
      %p235 = por %p233, %p234
      %p236 = scmp.ne.s32.totalorder %s224, %s225
      %p237 = scmp.eq.s32.totalorder %s26, 1
      %p238 = por %p236, %p237
      %p240 = scmp.ne.s32.totalorder %s225, %s239
      %p241 = scmp.eq.s32.totalorder %s26, 0
      %p242 = por %p240, %p241
      %s244 = sadd.s32 %s243, 1
      %p247 = scmp.eq.s32.totalorder %s20, 1
      %p248 = scmp.ne.s32.totalorder %s243, %s245
      %p249 = scmp.eq.s32.totalorder %s20, 0
      %p250 = por %p248, %p249
      %p251 = scmp.ne.s32.totalorder %s243, %s245
      %p252 = scmp.eq.s32.totalorder %s25, 1
      %p253 = por %p251, %p252
      %p254 = scmp.ne.s32.totalorder %s245, %s246
      %p255 = scmp.eq.s32.totalorder %s25, 0
      %p256 = por %p254, %p255
      %p257 = scmp.ne.s32.totalorder %s245, %s246
      %p258 = scmp.eq.s32.totalorder %s26, 1
      %p259 = por %p257, %p258
      %p261 = scmp.ne.s32.totalorder %s246, %s260
      %p262 = scmp.eq.s32.totalorder %s26, 0
      %p263 = por %p261, %p262
      %s264 = ssub.s32 %s20, %s27
      %p265 = scmp.eq.s32.totalorder %s264, 0
      %s267 = sadd.s32 %s266, 1
      %s268 = scalar_select %p265, %s266, %s267
      %p271 = pneg %p265
      %p272 = scmp.eq.s32.totalorder %s20, 1
      %p273 = por %p271, %p272
      %p274 = scmp.ne.s32.totalorder %s266, %s269
      %p275 = scmp.eq.s32.totalorder %s20, 0
      %p276 = por %p274, %p275
      %p277 = scmp.ne.s32.totalorder %s266, %s269
      %p278 = scmp.eq.s32.totalorder %s25, 1
      %p279 = por %p277, %p278
      %p280 = scmp.ne.s32.totalorder %s269, %s270
      %p281 = scmp.eq.s32.totalorder %s25, 0
      %p282 = por %p280, %p281
      %p283 = scmp.ne.s32.totalorder %s269, %s270
      %p284 = scmp.eq.s32.totalorder %s26, 1
      %p285 = por %p283, %p284
      %p287 = scmp.ne.s32.totalorder %s270, %s286
      %p288 = scmp.eq.s32.totalorder %s26, 0
      %p289 = por %p287, %p288
      %p290 = scmp.le.s32.totalorder 1, %s20
      %p291 = scmp.lt.s32.totalorder %s20, 3
      %p292 = pnand %p290, %p291
      %p293 = pneg %p292
      // Predicated region
      $region9: #{tpu_custom_call.1} parent=5 // pred_check
        _
      $region10: #{tpu_custom_call.1} parent=5 // pred_check_branch
        %295 = sbr.rel (%p292) target = $region12
      $region11: #{tpu_custom_call.1} parent=5 // pred_region
        %s296 = ssub.s32 %s20, 1
        // Predicated region
        $region13: #{tpu_custom_call.1} parent=11 // pred_check
          %p297 = pneg %p41
        $region14: #{tpu_custom_call.1} parent=11 // pred_check_branch
          %299 = sbr.rel (%p297) target = $region16
        $region15: #{tpu_custom_call.1} parent=11 // pred_region
          _
        $region16: #{tpu_custom_call.1} parent=11 // pred_fallthru
          _
        // Predicated region
        $region17: #{tpu_custom_call.1} parent=11 // pred_check
          %p300 = pneg %p88
        $region18: #{tpu_custom_call.1} parent=11 // pred_check_branch
          %302 = sbr.rel (%p300) target = $region20
        $region19: #{tpu_custom_call.1} parent=11 // pred_region
          _
        $region20: #{tpu_custom_call.1} parent=11 // pred_fallthru
          _
        // Predicated region
        $region21: #{tpu_custom_call.1} parent=11 // pred_check
          %p303 = pneg %p109
        $region22: #{tpu_custom_call.1} parent=11 // pred_check_branch
          %305 = sbr.rel (%p303) target = $region24
        $region23: #{tpu_custom_call.1} parent=11 // pred_region
          _
        $region24: #{tpu_custom_call.1} parent=11 // pred_fallthru
          _
        // Predicated region
        $region25: #{tpu_custom_call.1} parent=11 // pred_check
          %p306 = pneg %p130
        $region26: #{tpu_custom_call.1} parent=11 // pred_check_branch
          %308 = sbr.rel (%p306) target = $region28
        $region27: #{tpu_custom_call.1} parent=11 // pred_region
          _
        $region28: #{tpu_custom_call.1} parent=11 // pred_fallthru
          _
        // Predicated region
        $region29: #{tpu_custom_call.1} parent=11 // pred_check
          %p309 = pneg %p151
        $region30: #{tpu_custom_call.1} parent=11 // pred_check_branch
          %311 = sbr.rel (%p309) target = $region32
        $region31: #{tpu_custom_call.1} parent=11 // pred_region
          _
        $region32: #{tpu_custom_call.1} parent=11 // pred_fallthru
          _
        // Predicated region
        $region33: #{tpu_custom_call.1} parent=11 // pred_check
          %p312 = pneg %p172
        $region34: #{tpu_custom_call.1} parent=11 // pred_check_branch
          %314 = sbr.rel (%p312) target = $region36
        $region35: #{tpu_custom_call.1} parent=11 // pred_region
          _
        $region36: #{tpu_custom_call.1} parent=11 // pred_fallthru
          _
        // Predicated region
        $region37: #{tpu_custom_call.1} parent=11 // pred_check
          %p315 = pneg %p193
        $region38: #{tpu_custom_call.1} parent=11 // pred_check_branch
          %317 = sbr.rel (%p315) target = $region40
        $region39: #{tpu_custom_call.1} parent=11 // pred_region
          _
        $region40: #{tpu_custom_call.1} parent=11 // pred_fallthru
          _
        // Predicated region
        $region41: #{tpu_custom_call.1} parent=11 // pred_check
          %p318 = pneg %p214
        $region42: #{tpu_custom_call.1} parent=11 // pred_check_branch
          %320 = sbr.rel (%p318) target = $region44
        $region43: #{tpu_custom_call.1} parent=11 // pred_region
          _
        $region44: #{tpu_custom_call.1} parent=11 // pred_fallthru
          _
        // Predicated region
        $region45: #{tpu_custom_call.1} parent=11 // pred_check
          %p321 = pneg %p235
        $region46: #{tpu_custom_call.1} parent=11 // pred_check_branch
          %323 = sbr.rel (%p321) target = $region48
        $region47: #{tpu_custom_call.1} parent=11 // pred_region
          _
        $region48: #{tpu_custom_call.1} parent=11 // pred_fallthru
          _
        // Predicated region
        $region49: #{tpu_custom_call.1} parent=11 // pred_check
          %p324 = pneg %p256
        $region50: #{tpu_custom_call.1} parent=11 // pred_check_branch
          %326 = sbr.rel (%p324) target = $region52
        $region51: #{tpu_custom_call.1} parent=11 // pred_region
          _
        $region52: #{tpu_custom_call.1} parent=11 // pred_fallthru
          _
      $region12: #{tpu_custom_call.1} parent=5 // pred_fallthru
        _
      %p327 = scmp.lt.s32.totalorder %s20, 2
      // Predicated region
      $region53: #{tpu_custom_call.1} parent=5 // pred_check
        %p328 = pneg %p327
      $region54: #{tpu_custom_call.1} parent=5 // pred_check_branch
        %330 = sbr.rel (%p328) target = $region56
      $region55: #{tpu_custom_call.1} parent=5 // pred_region
        // Predicated region
        $region57: #{tpu_custom_call.1} parent=55 // pred_check
          %p331 = pneg %p61
        $region58: #{tpu_custom_call.1} parent=55 // pred_check_branch
          %333 = sbr.rel (%p331) target = $region60
        $region59: #{tpu_custom_call.1} parent=55 // pred_region
          %p334 = scmp.lt.s32.totalorder %s20, 1
          %s335 = scalar_select %p334, %s20, 1
          %s336 = smul.addr %s335, 4
          %s337 = smul.addr %s336, 2
          %s338 = scalar_lea.vmem %s1, %s337
        $region60: #{tpu_custom_call.1} parent=55 // pred_fallthru
          _
      $region56: #{tpu_custom_call.1} parent=5 // pred_fallthru
        _
      %p339 = scmp.le.s32.totalorder 1, %s20
      %p340 = scmp.lt.s32.totalorder %s20, 3
      %p341 = pnand %p339, %p340
      %p342 = pneg %p341
      // Predicated region
      $region61: #{tpu_custom_call.1} parent=5 // pred_check
        _
      $region62: #{tpu_custom_call.1} parent=5 // pred_check_branch
        %344 = sbr.rel (%p341) target = $region64
      $region63: #{tpu_custom_call.1} parent=5 // pred_region
        %s345 = ssub.s32 %s20, 1
        %p346 = pneg %p41
        %p347 = pneg %p38
        %p348 = scmp.lt.s32.totalorder %s25, 1
        %s349 = scalar_select %p348, %s25, 1
        %s350 = smul.addr %s349, 4
        %s351 = smul.addr %s350, 2
        %s352 = scalar_lea.vmem %s1, %s351
        %p353 = pneg %p67
        %p354 = pneg %p64
        %p355 = pneg %p88
        %p356 = pneg %p85
        %p357 = pneg %p109
        %p358 = pneg %p106
        %p359 = pneg %p130
        %p360 = pneg %p127
        %p361 = pneg %p151
        %p362 = pneg %p148
        %p363 = pneg %p172
        %p364 = pneg %p169
        %p365 = pneg %p193
        %p366 = pneg %p190
        %p367 = pneg %p214
        %p368 = pneg %p211
        %p369 = pneg %p235
        %p370 = pneg %p232
        %p371 = pneg %p256
        %p372 = pneg %p253
        %p373 = pneg %p282
        %p374 = pneg %p279
        %s375 = sand.u32 %s269, 1
        %s376 = scalar_lea.sflag [#allocation4], %s375
        %s377 = sand.u32 %s269, 1
        %s378 = smul.addr %s377, 24
        %s379 = scalar_lea.vmem [#allocation3], %s378
        %p380 = scmp.lt.s32.totalorder %s25, 1
        %s381 = scalar_select %p380, %s25, 1
        %s382 = smul.addr %s381, 4
        %s383 = smul.addr %s382, 2
        %s384 = scalar_lea.vmem %s1, %s383
        %v386 = vld [vmem:[%s0] sm:$0x7]
        %v387 = vld [vmem:[%s2] sm:$0xf]
        %v388 = vld [vmem:[%s384] sm:$0xff]
        %s389 = scalar_lea.vmem %s2, 4
        %v390 = vld [vmem:[%s389] sm:$0xf]
        %v392 = vcombine.high %v388, %v388
        %v394 = vunpack.c.l.s4 1983009808
        %v395 = vunpack.c.0.s8 %v394
        %v396 = vlaneseq
        %v397 = vshrl.u32 %v396, 7
        %v398 = vsub.s32 %v395, %v397
        %v399 = vrot.slane %v388, %v398
        %v401 = vunpack.c.l.s4 1983009808
        %v402 = vunpack.c.0.s8 %v401
        %v403 = vlaneseq
        %v404 = vshrl.u32 %v403, 7
        %v405 = vsub.s32 %v402, %v404
        %v406 = vrot.slane %v392, %v405
        %v407 = vcombine.high %v399, %v399
        %v408 = vcombine.high %v406, %v406
        %409 = vrot.lane.b32.xlu0 %v399, 18
        %v410 = vpop.permute.xlu0 %409
        %411 = vrot.lane.b32.xlu0 %v407, 18
        %v412 = vpop.permute.xlu0 %411
        %413 = vrot.lane.b32.xlu0 %v406, 18
        %v414 = vpop.permute.xlu0 %413
        %415 = vrot.lane.b32.xlu0 %v408, 18
        %v416 = vpop.permute.xlu0 %415
        %vm417 = vcmask 146432
        %v418 = vsel %vm417, %v410, %v412
        %v419 = vsel %vm417, %v412, %v414
        %v420 = vsel %vm417, %v414, %v416
        %vm421 = vcmask 31744
        %v423 = vsel %vm421, %v390, 0
        %vm425 = vcmask 1041408
        %v427 = vsel %vm425, %v418, 0
        %v430 = vsel %vm425, %v419, 0
        %v433 = vsel %vm425, %v420, 0
        %435 = vmatprep.subr.bf16.mxu0 0
        %436 = vmatpush1.bf16.msra.mxu0 0
        %437 = vmatprep.subr.bf16.mxu0 0
        %438 = vmatpush1.bf16.msra.mxu0 0
        %439 = vmatprep.subr.bf16.mxu0 0
        %440 = vmatpush1.bf16.msra.mxu0 0
        %441 = vmatprep.subr.bf16.mxu0 0
        %442 = vmatpush1.bf16.msra.mxu0 0
        %443 = vmatprep.subr.bf16.mxu0 0
        %444 = vmatpush1.bf16.msra.mxu0 0
        %445 = vmatprep.subr.bf16.mxu0 0
        %446 = vmatpush1.bf16.msra.mxu0 0
        %447 = vmatprep.subr.bf16.mxu0 0
        %448 = vmatpush1.bf16.msra.mxu0 0
        %449 = vmatprep.subr.bf16.mxu0 %v430
        %450 = vmatpush1.bf16.msra.mxu0 %v427
        %451 = vmatprep.subr.bf16.mxu0 0
        %452 = vmatpush2.bf16.msra.mxu0 0
        %453 = vmatprep.subr.bf16.mxu0 0
        %454 = vmatpush2.bf16.msra.mxu0 0
        %455 = vmatprep.subr.bf16.mxu0 0
        %456 = vmatpush2.bf16.msra.mxu0 0
        %457 = vmatprep.subr.bf16.mxu0 0
        %458 = vmatpush2.bf16.msra.mxu0 0
        %459 = vmatprep.subr.bf16.mxu0 0
        %460 = vmatpush2.bf16.msra.mxu0 0
        %461 = vmatprep.subr.bf16.mxu0 0
        %462 = vmatpush2.bf16.msra.mxu0 0
        %463 = vmatprep.subr.bf16.mxu0 0
        %464 = vmatpush2.bf16.msra.mxu0 0
        %465 = vmatprep.subr.bf16.mxu0 0
        %466 = vmatpush2.bf16.msra.mxu0 0
        %467 = vmatprep.mubr.bf16.mxu0 0
        %468 = vmatmul.mubr.bf16.gmra.mxu0 %v423
        %v469 = vpop.f32.mrf.mxu0
        %v470 = vadd.f32 0.0, %v469
        %v471 = vpop.f32.mrf.mxu0
        %v472 = vadd.f32 0.0, %v471
        %v473 = vpop.f32.mrf.mxu0
        %v474 = vpop.f32.mrf.mxu0
        %475 = vdwg.mxu0
        %476 = vmatprep.subr.bf16.mxu0 0
        %477 = vmatpush1.bf16.msra.mxu0 0
        %478 = vmatprep.subr.bf16.mxu0 0
        %479 = vmatpush1.bf16.msra.mxu0 0
        %480 = vmatprep.subr.bf16.mxu0 0
        %481 = vmatpush1.bf16.msra.mxu0 0
        %482 = vmatprep.subr.bf16.mxu0 0
        %483 = vmatpush1.bf16.msra.mxu0 0
        %484 = vmatprep.subr.bf16.mxu0 0
        %485 = vmatpush1.bf16.msra.mxu0 0
        %486 = vmatprep.subr.bf16.mxu0 0
        %487 = vmatpush1.bf16.msra.mxu0 0
        %488 = vmatprep.subr.bf16.mxu0 0
        %489 = vmatpush1.bf16.msra.mxu0 0
        %490 = vmatprep.subr.bf16.mxu0 0
        %491 = vmatpush1.bf16.msra.mxu0 %v433
        %492 = vmatprep.subr.bf16.mxu0 0
        %493 = vmatpush2.bf16.msra.mxu0 0
        %494 = vmatprep.subr.bf16.mxu0 0
        %495 = vmatpush2.bf16.msra.mxu0 0
        %496 = vmatprep.subr.bf16.mxu0 0
        %497 = vmatpush2.bf16.msra.mxu0 0
        %498 = vmatprep.subr.bf16.mxu0 0
        %499 = vmatpush2.bf16.msra.mxu0 0
        %500 = vmatprep.subr.bf16.mxu0 0
        %501 = vmatpush2.bf16.msra.mxu0 0
        %502 = vmatprep.subr.bf16.mxu0 0
        %503 = vmatpush2.bf16.msra.mxu0 0
        %504 = vmatprep.subr.bf16.mxu0 0
        %505 = vmatpush2.bf16.msra.mxu0 0
        %506 = vmatprep.subr.bf16.mxu0 0
        %507 = vmatpush2.bf16.msra.mxu0 0
        %508 = vmatprep.mubr.bf16.mxu0 0
        %509 = vmatmul.mubr.bf16.gmra.mxu0 %v423
        %v510 = vpop.f32.mrf.mxu0
        %v511 = vadd.f32 0.0, %v510
        %v512 = vpop.f32.mrf.mxu0
        %v513 = vpop.f32.mrf.mxu0
        %v514 = vpop.f32.mrf.mxu0
        %515 = vdwg.mxu0
        %516 = vrot.lane.b32.xlu0 %v399, 19
        %v517 = vpop.permute.xlu0 %516
        %518 = vrot.lane.b32.xlu0 %v407, 19
        %v519 = vpop.permute.xlu0 %518
        %520 = vrot.lane.b32.xlu0 %v406, 19
        %v521 = vpop.permute.xlu0 %520
        %522 = vrot.lane.b32.xlu0 %v408, 19
        %v523 = vpop.permute.xlu0 %522
        %vm524 = vcmask 154624
        %v525 = vsel %vm524, %v517, %v519
        %v526 = vsel %vm524, %v519, %v521
        %v527 = vsel %vm524, %v521, %v523
        %v529 = vsel %vm421, %v387, 0
        %v532 = vsel %vm425, %v525, 0
        %v535 = vsel %vm425, %v526, 0
        %v538 = vsel %vm425, %v527, 0
        %540 = vmatprep.subr.bf16.mxu0 0
        %541 = vmatpush1.bf16.msra.mxu0 0
        %542 = vmatprep.subr.bf16.mxu0 0
        %543 = vmatpush1.bf16.msra.mxu0 0
        %544 = vmatprep.subr.bf16.mxu0 0
        %545 = vmatpush1.bf16.msra.mxu0 0
        %546 = vmatprep.subr.bf16.mxu0 0
        %547 = vmatpush1.bf16.msra.mxu0 0
        %548 = vmatprep.subr.bf16.mxu0 0
        %549 = vmatpush1.bf16.msra.mxu0 0
        %550 = vmatprep.subr.bf16.mxu0 0
        %551 = vmatpush1.bf16.msra.mxu0 0
        %552 = vmatprep.subr.bf16.mxu0 0
        %553 = vmatpush1.bf16.msra.mxu0 0
        %554 = vmatprep.subr.bf16.mxu0 %v535
        %555 = vmatpush1.bf16.msra.mxu0 %v532
        %556 = vmatprep.subr.bf16.mxu0 0
        %557 = vmatpush2.bf16.msra.mxu0 0
        %558 = vmatprep.subr.bf16.mxu0 0
        %559 = vmatpush2.bf16.msra.mxu0 0
        %560 = vmatprep.subr.bf16.mxu0 0
        %561 = vmatpush2.bf16.msra.mxu0 0
        %562 = vmatprep.subr.bf16.mxu0 0
        %563 = vmatpush2.bf16.msra.mxu0 0
        %564 = vmatprep.subr.bf16.mxu0 0
        %565 = vmatpush2.bf16.msra.mxu0 0
        %566 = vmatprep.subr.bf16.mxu0 0
        %567 = vmatpush2.bf16.msra.mxu0 0
        %568 = vmatprep.subr.bf16.mxu0 0
        %569 = vmatpush2.bf16.msra.mxu0 0
        %570 = vmatprep.subr.bf16.mxu0 0
        %571 = vmatpush2.bf16.msra.mxu0 0
        %572 = vmatprep.mubr.bf16.mxu0 0
        %573 = vmatmul.mubr.bf16.gmra.mxu0 %v529
        %v574 = vpop.f32.mrf.mxu0
        %v575 = vadd.f32 %v470, %v574
        %v576 = vpop.f32.mrf.mxu0
        %v577 = vadd.f32 %v472, %v576
        %v578 = vpop.f32.mrf.mxu0
        %v579 = vpop.f32.mrf.mxu0
        %580 = vdwg.mxu0
        %581 = vmatprep.subr.bf16.mxu0 0
        %582 = vmatpush1.bf16.msra.mxu0 0
        %583 = vmatprep.subr.bf16.mxu0 0
        %584 = vmatpush1.bf16.msra.mxu0 0
        %585 = vmatprep.subr.bf16.mxu0 0
        %586 = vmatpush1.bf16.msra.mxu0 0
        %587 = vmatprep.subr.bf16.mxu0 0
        %588 = vmatpush1.bf16.msra.mxu0 0
        %589 = vmatprep.subr.bf16.mxu0 0
        %590 = vmatpush1.bf16.msra.mxu0 0
        %591 = vmatprep.subr.bf16.mxu0 0
        %592 = vmatpush1.bf16.msra.mxu0 0
        %593 = vmatprep.subr.bf16.mxu0 0
        %594 = vmatpush1.bf16.msra.mxu0 0
        %595 = vmatprep.subr.bf16.mxu0 0
        %596 = vmatpush1.bf16.msra.mxu0 %v538
        %597 = vmatprep.subr.bf16.mxu0 0
        %598 = vmatpush2.bf16.msra.mxu0 0
        %599 = vmatprep.subr.bf16.mxu0 0
        %600 = vmatpush2.bf16.msra.mxu0 0
        %601 = vmatprep.subr.bf16.mxu0 0
        %602 = vmatpush2.bf16.msra.mxu0 0
        %603 = vmatprep.subr.bf16.mxu0 0
        %604 = vmatpush2.bf16.msra.mxu0 0
        %605 = vmatprep.subr.bf16.mxu0 0
        %606 = vmatpush2.bf16.msra.mxu0 0
        %607 = vmatprep.subr.bf16.mxu0 0
        %608 = vmatpush2.bf16.msra.mxu0 0
        %609 = vmatprep.subr.bf16.mxu0 0
        %610 = vmatpush2.bf16.msra.mxu0 0
        %611 = vmatprep.subr.bf16.mxu0 0
        %612 = vmatpush2.bf16.msra.mxu0 0
        %613 = vmatprep.mubr.bf16.mxu0 0
        %614 = vmatmul.mubr.bf16.gmra.mxu0 %v529
        %v615 = vpop.f32.mrf.mxu0
        %v616 = vadd.f32 %v511, %v615
        %v617 = vpop.f32.mrf.mxu0
        %v618 = vpop.f32.mrf.mxu0
        %v619 = vpop.f32.mrf.mxu0
        %620 = vdwg.mxu0
        %s621 = scalar_lea.vmem %s2, 8
        %v622 = vld [vmem:[%s621] sm:$0xf]
        %v623 = vld [vmem:[%s384] sm:$0xff]
        %v625 = vcombine.high %v623, %v623
        %v627 = vunpack.c.l.s4 1983009808
        %v628 = vunpack.c.0.s8 %v627
        %v629 = vlaneseq
        %v630 = vshrl.u32 %v629, 7
        %v631 = vsub.s32 %v628, %v630
        %v632 = vrot.slane %v623, %v631
        %v634 = vunpack.c.l.s4 1983009808
        %v635 = vunpack.c.0.s8 %v634
        %v636 = vlaneseq
        %v637 = vshrl.u32 %v636, 7
        %v638 = vsub.s32 %v635, %v637
        %v639 = vrot.slane %v625, %v638
        %v640 = vcombine.high %v632, %v632
        %v641 = vcombine.high %v639, %v639
        %642 = vrot.lane.b32.xlu0 %v632, 17
        %v643 = vpop.permute.xlu0 %642
        %644 = vrot.lane.b32.xlu0 %v640, 17
        %v645 = vpop.permute.xlu0 %644
        %646 = vrot.lane.b32.xlu0 %v639, 17
        %v647 = vpop.permute.xlu0 %646
        %648 = vrot.lane.b32.xlu0 %v641, 17
        %v649 = vpop.permute.xlu0 %648
        %vm650 = vcmask 138240
        %v651 = vsel %vm650, %v643, %v645
        %v652 = vsel %vm650, %v645, %v647
        %v653 = vsel %vm650, %v647, %v649
        %v655 = vsel %vm421, %v622, 0
        %v658 = vsel %vm425, %v651, 0
        %v661 = vsel %vm425, %v652, 0
        %v664 = vsel %vm425, %v653, 0
        %666 = vmatprep.subr.bf16.mxu0 0
        %667 = vmatpush1.bf16.msra.mxu0 0
        %668 = vmatprep.subr.bf16.mxu0 0
        %669 = vmatpush1.bf16.msra.mxu0 0
        %670 = vmatprep.subr.bf16.mxu0 0
        %671 = vmatpush1.bf16.msra.mxu0 0
        %672 = vmatprep.subr.bf16.mxu0 0
        %673 = vmatpush1.bf16.msra.mxu0 0
        %674 = vmatprep.subr.bf16.mxu0 0
        %675 = vmatpush1.bf16.msra.mxu0 0
        %676 = vmatprep.subr.bf16.mxu0 0
        %677 = vmatpush1.bf16.msra.mxu0 0
        %678 = vmatprep.subr.bf16.mxu0 0
        %679 = vmatpush1.bf16.msra.mxu0 0
        %680 = vmatprep.subr.bf16.mxu0 %v661
        %681 = vmatpush1.bf16.msra.mxu0 %v658
        %682 = vmatprep.subr.bf16.mxu0 0
        %683 = vmatpush2.bf16.msra.mxu0 0
        %684 = vmatprep.subr.bf16.mxu0 0
        %685 = vmatpush2.bf16.msra.mxu0 0
        %686 = vmatprep.subr.bf16.mxu0 0
        %687 = vmatpush2.bf16.msra.mxu0 0
        %688 = vmatprep.subr.bf16.mxu0 0
        %689 = vmatpush2.bf16.msra.mxu0 0
        %690 = vmatprep.subr.bf16.mxu0 0
        %691 = vmatpush2.bf16.msra.mxu0 0
        %692 = vmatprep.subr.bf16.mxu0 0
        %693 = vmatpush2.bf16.msra.mxu0 0
        %694 = vmatprep.subr.bf16.mxu0 0
        %695 = vmatpush2.bf16.msra.mxu0 0
        %696 = vmatprep.subr.bf16.mxu0 0
        %697 = vmatpush2.bf16.msra.mxu0 0
        %698 = vmatprep.mubr.bf16.mxu0 0
        %699 = vmatmul.mubr.bf16.gmra.mxu0 %v655
        %v700 = vpop.f32.mrf.mxu0
        %v701 = vadd.f32 0.0, %v700
        %v702 = vpop.f32.mrf.mxu0
        %v703 = vadd.f32 0.0, %v702
        %v704 = vpop.f32.mrf.mxu0
        %v705 = vpop.f32.mrf.mxu0
        %706 = vdwg.mxu0
        %707 = vmatprep.subr.bf16.mxu0 0
        %708 = vmatpush1.bf16.msra.mxu0 0
        %709 = vmatprep.subr.bf16.mxu0 0
        %710 = vmatpush1.bf16.msra.mxu0 0
        %711 = vmatprep.subr.bf16.mxu0 0
        %712 = vmatpush1.bf16.msra.mxu0 0
        %713 = vmatprep.subr.bf16.mxu0 0
        %714 = vmatpush1.bf16.msra.mxu0 0
        %715 = vmatprep.subr.bf16.mxu0 0
        %716 = vmatpush1.bf16.msra.mxu0 0
        %717 = vmatprep.subr.bf16.mxu0 0
        %718 = vmatpush1.bf16.msra.mxu0 0
        %719 = vmatprep.subr.bf16.mxu0 0
        %720 = vmatpush1.bf16.msra.mxu0 0
        %721 = vmatprep.subr.bf16.mxu0 0
        %722 = vmatpush1.bf16.msra.mxu0 %v664
        %723 = vmatprep.subr.bf16.mxu0 0
        %724 = vmatpush2.bf16.msra.mxu0 0
        %725 = vmatprep.subr.bf16.mxu0 0
        %726 = vmatpush2.bf16.msra.mxu0 0
        %727 = vmatprep.subr.bf16.mxu0 0
        %728 = vmatpush2.bf16.msra.mxu0 0
        %729 = vmatprep.subr.bf16.mxu0 0
        %730 = vmatpush2.bf16.msra.mxu0 0
        %731 = vmatprep.subr.bf16.mxu0 0
        %732 = vmatpush2.bf16.msra.mxu0 0
        %733 = vmatprep.subr.bf16.mxu0 0
        %734 = vmatpush2.bf16.msra.mxu0 0
        %735 = vmatprep.subr.bf16.mxu0 0
        %736 = vmatpush2.bf16.msra.mxu0 0
        %737 = vmatprep.subr.bf16.mxu0 0
        %738 = vmatpush2.bf16.msra.mxu0 0
        %739 = vmatprep.mubr.bf16.mxu0 0
        %740 = vmatmul.mubr.bf16.gmra.mxu0 %v655
        %v741 = vpop.f32.mrf.mxu0
        %v742 = vadd.f32 0.0, %v741
        %v743 = vpop.f32.mrf.mxu0
        %v744 = vpop.f32.mrf.mxu0
        %v745 = vpop.f32.mrf.mxu0
        %746 = vdwg.mxu0
        %v747 = vadd.f32 %v575, %v701
        %v748 = vadd.f32 %v577, %v703
        %v749 = vadd.f32 %v616, %v742
        %s750 = scalar_lea.vmem %s2, 12
        %v751 = vld [vmem:[%s750] sm:$0xf]
        %v752 = vld [vmem:[%s384] sm:$0xff]
        %v754 = vcombine.high %v752, %v752
        %v756 = vunpack.c.l.s4 1983009808
        %v757 = vunpack.c.0.s8 %v756
        %v758 = vlaneseq
        %v759 = vshrl.u32 %v758, 7
        %v760 = vsub.s32 %v757, %v759
        %v761 = vrot.slane %v752, %v760
        %v763 = vunpack.c.l.s4 1983009808
        %v764 = vunpack.c.0.s8 %v763
        %v765 = vlaneseq
        %v766 = vshrl.u32 %v765, 7
        %v767 = vsub.s32 %v764, %v766
        %v768 = vrot.slane %v754, %v767
        %v769 = vcombine.high %v761, %v761
        %v770 = vcombine.high %v768, %v768
        %771 = vrot.lane.b32.xlu0 %v761, 1
        %v772 = vpop.permute.xlu0 %771
        %773 = vrot.lane.b32.xlu0 %v769, 1
        %v774 = vpop.permute.xlu0 %773
        %775 = vrot.lane.b32.xlu0 %v768, 1
        %v776 = vpop.permute.xlu0 %775
        %777 = vrot.lane.b32.xlu0 %v770, 1
        %v778 = vpop.permute.xlu0 %777
        %vm779 = vcmask 7168
        %v780 = vsel %vm779, %v772, %v774
        %v781 = vsel %vm779, %v774, %v776
        %v782 = vsel %vm779, %v776, %v778
        %v784 = vsel %vm421, %v751, 0
        %v787 = vsel %vm425, %v780, 0
        %v790 = vsel %vm425, %v781, 0
        %v793 = vsel %vm425, %v782, 0
        %795 = vmatprep.subr.bf16.mxu0 0
        %796 = vmatpush1.bf16.msra.mxu0 0
        %797 = vmatprep.subr.bf16.mxu0 0
        %798 = vmatpush1.bf16.msra.mxu0 0
        %799 = vmatprep.subr.bf16.mxu0 0
        %800 = vmatpush1.bf16.msra.mxu0 0
        %801 = vmatprep.subr.bf16.mxu0 0
        %802 = vmatpush1.bf16.msra.mxu0 0
        %803 = vmatprep.subr.bf16.mxu0 0
        %804 = vmatpush1.bf16.msra.mxu0 0
        %805 = vmatprep.subr.bf16.mxu0 0
        %806 = vmatpush1.bf16.msra.mxu0 0
        %807 = vmatprep.subr.bf16.mxu0 0
        %808 = vmatpush1.bf16.msra.mxu0 0
        %809 = vmatprep.subr.bf16.mxu0 %v790
        %810 = vmatpush1.bf16.msra.mxu0 %v787
        %811 = vmatprep.subr.bf16.mxu0 0
        %812 = vmatpush2.bf16.msra.mxu0 0
        %813 = vmatprep.subr.bf16.mxu0 0
        %814 = vmatpush2.bf16.msra.mxu0 0
        %815 = vmatprep.subr.bf16.mxu0 0
        %816 = vmatpush2.bf16.msra.mxu0 0
        %817 = vmatprep.subr.bf16.mxu0 0
        %818 = vmatpush2.bf16.msra.mxu0 0
        %819 = vmatprep.subr.bf16.mxu0 0
        %820 = vmatpush2.bf16.msra.mxu0 0
        %821 = vmatprep.subr.bf16.mxu0 0
        %822 = vmatpush2.bf16.msra.mxu0 0
        %823 = vmatprep.subr.bf16.mxu0 0
        %824 = vmatpush2.bf16.msra.mxu0 0
        %825 = vmatprep.subr.bf16.mxu0 0
        %826 = vmatpush2.bf16.msra.mxu0 0
        %827 = vmatprep.mubr.bf16.mxu0 0
        %828 = vmatmul.mubr.bf16.gmra.mxu0 %v784
        %v829 = vpop.f32.mrf.mxu0
        %v830 = vadd.f32 0.0, %v829
        %v831 = vpop.f32.mrf.mxu0
        %v832 = vadd.f32 0.0, %v831
        %v833 = vpop.f32.mrf.mxu0
        %v834 = vpop.f32.mrf.mxu0
        %835 = vdwg.mxu0
        %836 = vmatprep.subr.bf16.mxu0 0
        %837 = vmatpush1.bf16.msra.mxu0 0
        %838 = vmatprep.subr.bf16.mxu0 0
        %839 = vmatpush1.bf16.msra.mxu0 0
        %840 = vmatprep.subr.bf16.mxu0 0
        %841 = vmatpush1.bf16.msra.mxu0 0
        %842 = vmatprep.subr.bf16.mxu0 0
        %843 = vmatpush1.bf16.msra.mxu0 0
        %844 = vmatprep.subr.bf16.mxu0 0
        %845 = vmatpush1.bf16.msra.mxu0 0
        %846 = vmatprep.subr.bf16.mxu0 0
        %847 = vmatpush1.bf16.msra.mxu0 0
        %848 = vmatprep.subr.bf16.mxu0 0
        %849 = vmatpush1.bf16.msra.mxu0 0
        %850 = vmatprep.subr.bf16.mxu0 0
        %851 = vmatpush1.bf16.msra.mxu0 %v793
        %852 = vmatprep.subr.bf16.mxu0 0
        %853 = vmatpush2.bf16.msra.mxu0 0
        %854 = vmatprep.subr.bf16.mxu0 0
        %855 = vmatpush2.bf16.msra.mxu0 0
        %856 = vmatprep.subr.bf16.mxu0 0
        %857 = vmatpush2.bf16.msra.mxu0 0
        %858 = vmatprep.subr.bf16.mxu0 0
        %859 = vmatpush2.bf16.msra.mxu0 0
        %860 = vmatprep.subr.bf16.mxu0 0
        %861 = vmatpush2.bf16.msra.mxu0 0
        %862 = vmatprep.subr.bf16.mxu0 0
        %863 = vmatpush2.bf16.msra.mxu0 0
        %864 = vmatprep.subr.bf16.mxu0 0
        %865 = vmatpush2.bf16.msra.mxu0 0
        %866 = vmatprep.subr.bf16.mxu0 0
        %867 = vmatpush2.bf16.msra.mxu0 0
        %868 = vmatprep.mubr.bf16.mxu0 0
        %869 = vmatmul.mubr.bf16.gmra.mxu0 %v784
        %v870 = vpop.f32.mrf.mxu0
        %v871 = vadd.f32 0.0, %v870
        %v872 = vpop.f32.mrf.mxu0
        %v873 = vpop.f32.mrf.mxu0
        %v874 = vpop.f32.mrf.mxu0
        %875 = vdwg.mxu0
        %v876 = vadd.f32 %v747, %v830
        %v877 = vadd.f32 %v748, %v832
        %v878 = vadd.f32 %v749, %v871
        %s879 = scalar_lea.vmem %s2, 16
        %v880 = vld [vmem:[%s879] sm:$0xf]
        %v881 = vld [vmem:[%s384 + $0x2] sm:$0x3f]
        %v883 = vcombine.high %v881, %v881
        %v885 = vunpack.c.l.s4 1983009808
        %v886 = vunpack.c.0.s8 %v885
        %v887 = vlaneseq
        %v888 = vshrl.u32 %v887, 7
        %v889 = vsub.s32 %v886, %v888
        %v890 = vrot.slane %v881, %v889
        %v892 = vunpack.c.l.s4 1983009808
        %v893 = vunpack.c.0.s8 %v892
        %v894 = vlaneseq
        %v895 = vshrl.u32 %v894, 7
        %v896 = vsub.s32 %v893, %v895
        %v897 = vrot.slane %v883, %v896
        %v898 = vcombine.high %v890, %v890
        %v900 = vsel %vm421, %v880, 0
        %v903 = vsel %vm425, %v890, 0
        %v906 = vsel %vm425, %v898, 0
        %v909 = vsel %vm425, %v897, 0
        %911 = vmatprep.subr.bf16.mxu0 0
        %912 = vmatpush1.bf16.msra.mxu0 0
        %913 = vmatprep.subr.bf16.mxu0 0
        %914 = vmatpush1.bf16.msra.mxu0 0
        %915 = vmatprep.subr.bf16.mxu0 0
        %916 = vmatpush1.bf16.msra.mxu0 0
        %917 = vmatprep.subr.bf16.mxu0 0
        %918 = vmatpush1.bf16.msra.mxu0 0
        %919 = vmatprep.subr.bf16.mxu0 0
        %920 = vmatpush1.bf16.msra.mxu0 0
        %921 = vmatprep.subr.bf16.mxu0 0
        %922 = vmatpush1.bf16.msra.mxu0 0
        %923 = vmatprep.subr.bf16.mxu0 0
        %924 = vmatpush1.bf16.msra.mxu0 0
        %925 = vmatprep.subr.bf16.mxu0 %v906
        %926 = vmatpush1.bf16.msra.mxu0 %v903
        %927 = vmatprep.subr.bf16.mxu0 0
        %928 = vmatpush2.bf16.msra.mxu0 0
        %929 = vmatprep.subr.bf16.mxu0 0
        %930 = vmatpush2.bf16.msra.mxu0 0
        %931 = vmatprep.subr.bf16.mxu0 0
        %932 = vmatpush2.bf16.msra.mxu0 0
        %933 = vmatprep.subr.bf16.mxu0 0
        %934 = vmatpush2.bf16.msra.mxu0 0
        %935 = vmatprep.subr.bf16.mxu0 0
        %936 = vmatpush2.bf16.msra.mxu0 0
        %937 = vmatprep.subr.bf16.mxu0 0
        %938 = vmatpush2.bf16.msra.mxu0 0
        %939 = vmatprep.subr.bf16.mxu0 0
        %940 = vmatpush2.bf16.msra.mxu0 0
        %941 = vmatprep.subr.bf16.mxu0 0
        %942 = vmatpush2.bf16.msra.mxu0 0
        %943 = vmatprep.mubr.bf16.mxu0 0
        %944 = vmatmul.mubr.bf16.gmra.mxu0 %v900
        %v945 = vpop.f32.mrf.mxu0
        %v946 = vadd.f32 0.0, %v945
        %v947 = vpop.f32.mrf.mxu0
        %v948 = vadd.f32 0.0, %v947
        %v949 = vpop.f32.mrf.mxu0
        %v950 = vpop.f32.mrf.mxu0
        %951 = vdwg.mxu0
        %952 = vmatprep.subr.bf16.mxu0 0
        %953 = vmatpush1.bf16.msra.mxu0 0
        %954 = vmatprep.subr.bf16.mxu0 0
        %955 = vmatpush1.bf16.msra.mxu0 0
        %956 = vmatprep.subr.bf16.mxu0 0
        %957 = vmatpush1.bf16.msra.mxu0 0
        %958 = vmatprep.subr.bf16.mxu0 0
        %959 = vmatpush1.bf16.msra.mxu0 0
        %960 = vmatprep.subr.bf16.mxu0 0
        %961 = vmatpush1.bf16.msra.mxu0 0
        %962 = vmatprep.subr.bf16.mxu0 0
        %963 = vmatpush1.bf16.msra.mxu0 0
        %964 = vmatprep.subr.bf16.mxu0 0
        %965 = vmatpush1.bf16.msra.mxu0 0
        %966 = vmatprep.subr.bf16.mxu0 0
        %967 = vmatpush1.bf16.msra.mxu0 %v909
        %968 = vmatprep.subr.bf16.mxu0 0
        %969 = vmatpush2.bf16.msra.mxu0 0
        %970 = vmatprep.subr.bf16.mxu0 0
        %971 = vmatpush2.bf16.msra.mxu0 0
        %972 = vmatprep.subr.bf16.mxu0 0
        %973 = vmatpush2.bf16.msra.mxu0 0
        %974 = vmatprep.subr.bf16.mxu0 0
        %975 = vmatpush2.bf16.msra.mxu0 0
        %976 = vmatprep.subr.bf16.mxu0 0
        %977 = vmatpush2.bf16.msra.mxu0 0
        %978 = vmatprep.subr.bf16.mxu0 0
        %979 = vmatpush2.bf16.msra.mxu0 0
        %980 = vmatprep.subr.bf16.mxu0 0
        %981 = vmatpush2.bf16.msra.mxu0 0
        %982 = vmatprep.subr.bf16.mxu0 0
        %983 = vmatpush2.bf16.msra.mxu0 0
        %984 = vmatprep.mubr.bf16.mxu0 0
        %985 = vmatmul.mubr.bf16.gmra.mxu0 %v900
        %v986 = vpop.f32.mrf.mxu0
        %v987 = vadd.f32 0.0, %v986
        %v988 = vpop.f32.mrf.mxu0
        %v989 = vpop.f32.mrf.mxu0
        %v990 = vpop.f32.mrf.mxu0
        %991 = vdwg.mxu0
        %v992 = vadd.f32 %v876, %v946
        %v993 = vadd.f32 %v877, %v948
        %v994 = vadd.f32 %v878, %v987
        %s995 = scalar_lea.vmem %s2, 20
        %v996 = vld [vmem:[%s995] sm:$0xf]
        %v997 = vld [vmem:[%s384 + $0x2] sm:$0x3f]
        %v999 = vcombine.high %v997, %v997
        %v1001 = vunpack.c.l.s4 1983009808
        %v1002 = vunpack.c.0.s8 %v1001
        %v1003 = vlaneseq
        %v1004 = vshrl.u32 %v1003, 7
        %v1005 = vsub.s32 %v1002, %v1004
        %v1006 = vrot.slane %v997, %v1005
        %v1008 = vunpack.c.l.s4 1983009808
        %v1009 = vunpack.c.0.s8 %v1008
        %v1010 = vlaneseq
        %v1011 = vshrl.u32 %v1010, 7
        %v1012 = vsub.s32 %v1009, %v1011
        %v1013 = vrot.slane %v999, %v1012
        %v1014 = vcombine.high %v1006, %v1006
        %1015 = vrot.lane.b32.xlu0 %v1006, 127
        %v1016 = vpop.permute.xlu0 %1015
        %1017 = vrot.lane.b32.xlu0 %v1014, 127
        %v1018 = vpop.permute.xlu0 %1017
        %1019 = vrot.lane.b32.xlu0 %v1013, 127
        %v1020 = vpop.permute.xlu0 %1019
        %vm1021 = vcmask 1039360
        %v1022 = vsel %vm1021, %v1016, %v1018
        %v1023 = vsel %vm1021, %v1018, %v1020
        %v1025 = vsel %vm421, %v996, 0
        %v1028 = vsel %vm425, %v1022, 0
        %v1031 = vsel %vm425, %v1023, 0
        %v1034 = vsel %vm425, %v1020, 0
        %1036 = vmatprep.subr.bf16.mxu0 0
        %1037 = vmatpush1.bf16.msra.mxu0 0
        %1038 = vmatprep.subr.bf16.mxu0 0
        %1039 = vmatpush1.bf16.msra.mxu0 0
        %1040 = vmatprep.subr.bf16.mxu0 0
        %1041 = vmatpush1.bf16.msra.mxu0 0
        %1042 = vmatprep.subr.bf16.mxu0 0
        %1043 = vmatpush1.bf16.msra.mxu0 0
        %1044 = vmatprep.subr.bf16.mxu0 0
        %1045 = vmatpush1.bf16.msra.mxu0 0
        %1046 = vmatprep.subr.bf16.mxu0 0
        %1047 = vmatpush1.bf16.msra.mxu0 0
        %1048 = vmatprep.subr.bf16.mxu0 0
        %1049 = vmatpush1.bf16.msra.mxu0 0
        %1050 = vmatprep.subr.bf16.mxu0 %v1031
        %1051 = vmatpush1.bf16.msra.mxu0 %v1028
        %1052 = vmatprep.subr.bf16.mxu0 0
        %1053 = vmatpush2.bf16.msra.mxu0 0
        %1054 = vmatprep.subr.bf16.mxu0 0
        %1055 = vmatpush2.bf16.msra.mxu0 0
        %1056 = vmatprep.subr.bf16.mxu0 0
        %1057 = vmatpush2.bf16.msra.mxu0 0
        %1058 = vmatprep.subr.bf16.mxu0 0
        %1059 = vmatpush2.bf16.msra.mxu0 0
        %1060 = vmatprep.subr.bf16.mxu0 0
        %1061 = vmatpush2.bf16.msra.mxu0 0
        %1062 = vmatprep.subr.bf16.mxu0 0
        %1063 = vmatpush2.bf16.msra.mxu0 0
        %1064 = vmatprep.subr.bf16.mxu0 0
        %1065 = vmatpush2.bf16.msra.mxu0 0
        %1066 = vmatprep.subr.bf16.mxu0 0
        %1067 = vmatpush2.bf16.msra.mxu0 0
        %1068 = vmatprep.mubr.bf16.mxu0 0
        %1069 = vmatmul.mubr.bf16.gmra.mxu0 %v1025
        %v1070 = vpop.f32.mrf.mxu0
        %v1071 = vadd.f32 0.0, %v1070
        %v1072 = vpop.f32.mrf.mxu0
        %v1073 = vadd.f32 0.0, %v1072
        %v1074 = vpop.f32.mrf.mxu0
        %v1075 = vpop.f32.mrf.mxu0
        %1076 = vdwg.mxu0
        %1077 = vmatprep.subr.bf16.mxu0 0
        %1078 = vmatpush1.bf16.msra.mxu0 0
        %1079 = vmatprep.subr.bf16.mxu0 0
        %1080 = vmatpush1.bf16.msra.mxu0 0
        %1081 = vmatprep.subr.bf16.mxu0 0
        %1082 = vmatpush1.bf16.msra.mxu0 0
        %1083 = vmatprep.subr.bf16.mxu0 0
        %1084 = vmatpush1.bf16.msra.mxu0 0
        %1085 = vmatprep.subr.bf16.mxu0 0
        %1086 = vmatpush1.bf16.msra.mxu0 0
        %1087 = vmatprep.subr.bf16.mxu0 0
        %1088 = vmatpush1.bf16.msra.mxu0 0
        %1089 = vmatprep.subr.bf16.mxu0 0
        %1090 = vmatpush1.bf16.msra.mxu0 0
        %1091 = vmatprep.subr.bf16.mxu0 0
        %1092 = vmatpush1.bf16.msra.mxu0 %v1034
        %1093 = vmatprep.subr.bf16.mxu0 0
        %1094 = vmatpush2.bf16.msra.mxu0 0
        %1095 = vmatprep.subr.bf16.mxu0 0
        %1096 = vmatpush2.bf16.msra.mxu0 0
        %1097 = vmatprep.subr.bf16.mxu0 0
        %1098 = vmatpush2.bf16.msra.mxu0 0
        %1099 = vmatprep.subr.bf16.mxu0 0
        %1100 = vmatpush2.bf16.msra.mxu0 0
        %1101 = vmatprep.subr.bf16.mxu0 0
        %1102 = vmatpush2.bf16.msra.mxu0 0
        %1103 = vmatprep.subr.bf16.mxu0 0
        %1104 = vmatpush2.bf16.msra.mxu0 0
        %1105 = vmatprep.subr.bf16.mxu0 0
        %1106 = vmatpush2.bf16.msra.mxu0 0
        %1107 = vmatprep.subr.bf16.mxu0 0
        %1108 = vmatpush2.bf16.msra.mxu0 0
        %1109 = vmatprep.mubr.bf16.mxu0 0
        %1110 = vmatmul.mubr.bf16.gmra.mxu0 %v1025
        %v1111 = vpop.f32.mrf.mxu0
        %v1112 = vadd.f32 0.0, %v1111
        %v1113 = vpop.f32.mrf.mxu0
        %v1114 = vpop.f32.mrf.mxu0
        %v1115 = vpop.f32.mrf.mxu0
        %1116 = vdwg.mxu0
        %v1117 = vadd.f32 %v992, %v1071
        %v1118 = vadd.f32 %v993, %v1073
        %v1119 = vadd.f32 %v994, %v1112
        %s1120 = scalar_lea.vmem %s2, 24
        %v1121 = vld [vmem:[%s1120] sm:$0xf]
        %v1122 = vld [vmem:[%s384 + $0x2] sm:$0x3f]
        %v1124 = vcombine.high %v1122, %v1122
        %v1126 = vunpack.c.l.s4 1983009808
        %v1127 = vunpack.c.0.s8 %v1126
        %v1128 = vlaneseq
        %v1129 = vshrl.u32 %v1128, 7
        %v1130 = vsub.s32 %v1127, %v1129
        %v1131 = vrot.slane %v1122, %v1130
        %v1133 = vunpack.c.l.s4 1983009808
        %v1134 = vunpack.c.0.s8 %v1133
        %v1135 = vlaneseq
        %v1136 = vshrl.u32 %v1135, 7
        %v1137 = vsub.s32 %v1134, %v1136
        %v1138 = vrot.slane %v1124, %v1137
        %v1139 = vcombine.high %v1131, %v1131
        %1140 = vrot.lane.b32.xlu0 %v1131, 111
        %v1141 = vpop.permute.xlu0 %1140
        %1142 = vrot.lane.b32.xlu0 %v1139, 111
        %v1143 = vpop.permute.xlu0 %1142
        %1144 = vrot.lane.b32.xlu0 %v1138, 111
        %v1145 = vpop.permute.xlu0 %1144
        %vm1146 = vcmask 908288
        %v1147 = vsel %vm1146, %v1141, %v1143
        %v1148 = vsel %vm1146, %v1143, %v1145
        %v1150 = vsel %vm421, %v1121, 0
        %v1153 = vsel %vm425, %v1147, 0
        %v1156 = vsel %vm425, %v1148, 0
        %v1159 = vsel %vm425, %v1145, 0
        %1161 = vmatprep.subr.bf16.mxu0 0
        %1162 = vmatpush1.bf16.msra.mxu0 0
        %1163 = vmatprep.subr.bf16.mxu0 0
        %1164 = vmatpush1.bf16.msra.mxu0 0
        %1165 = vmatprep.subr.bf16.mxu0 0
        %1166 = vmatpush1.bf16.msra.mxu0 0
        %1167 = vmatprep.subr.bf16.mxu0 0
        %1168 = vmatpush1.bf16.msra.mxu0 0
        %1169 = vmatprep.subr.bf16.mxu0 0
        %1170 = vmatpush1.bf16.msra.mxu0 0
        %1171 = vmatprep.subr.bf16.mxu0 0
        %1172 = vmatpush1.bf16.msra.mxu0 0
        %1173 = vmatprep.subr.bf16.mxu0 0
        %1174 = vmatpush1.bf16.msra.mxu0 0
        %1175 = vmatprep.subr.bf16.mxu0 %v1156
        %1176 = vmatpush1.bf16.msra.mxu0 %v1153
        %1177 = vmatprep.subr.bf16.mxu0 0
        %1178 = vmatpush2.bf16.msra.mxu0 0
        %1179 = vmatprep.subr.bf16.mxu0 0
        %1180 = vmatpush2.bf16.msra.mxu0 0
        %1181 = vmatprep.subr.bf16.mxu0 0
        %1182 = vmatpush2.bf16.msra.mxu0 0
        %1183 = vmatprep.subr.bf16.mxu0 0
        %1184 = vmatpush2.bf16.msra.mxu0 0
        %1185 = vmatprep.subr.bf16.mxu0 0
        %1186 = vmatpush2.bf16.msra.mxu0 0
        %1187 = vmatprep.subr.bf16.mxu0 0
        %1188 = vmatpush2.bf16.msra.mxu0 0
        %1189 = vmatprep.subr.bf16.mxu0 0
        %1190 = vmatpush2.bf16.msra.mxu0 0
        %1191 = vmatprep.subr.bf16.mxu0 0
        %1192 = vmatpush2.bf16.msra.mxu0 0
        %1193 = vmatprep.mubr.bf16.mxu0 0
        %1194 = vmatmul.mubr.bf16.gmra.mxu0 %v1150
        %v1195 = vpop.f32.mrf.mxu0
        %v1196 = vadd.f32 0.0, %v1195
        %v1197 = vpop.f32.mrf.mxu0
        %v1198 = vadd.f32 0.0, %v1197
        %v1199 = vpop.f32.mrf.mxu0
        %v1200 = vpop.f32.mrf.mxu0
        %1201 = vdwg.mxu0
        %1202 = vmatprep.subr.bf16.mxu0 0
        %1203 = vmatpush1.bf16.msra.mxu0 0
        %1204 = vmatprep.subr.bf16.mxu0 0
        %1205 = vmatpush1.bf16.msra.mxu0 0
        %1206 = vmatprep.subr.bf16.mxu0 0
        %1207 = vmatpush1.bf16.msra.mxu0 0
        %1208 = vmatprep.subr.bf16.mxu0 0
        %1209 = vmatpush1.bf16.msra.mxu0 0
        %1210 = vmatprep.subr.bf16.mxu0 0
        %1211 = vmatpush1.bf16.msra.mxu0 0
        %1212 = vmatprep.subr.bf16.mxu0 0
        %1213 = vmatpush1.bf16.msra.mxu0 0
        %1214 = vmatprep.subr.bf16.mxu0 0
        %1215 = vmatpush1.bf16.msra.mxu0 0
        %1216 = vmatprep.subr.bf16.mxu0 0
        %1217 = vmatpush1.bf16.msra.mxu0 %v1159
        %1218 = vmatprep.subr.bf16.mxu0 0
        %1219 = vmatpush2.bf16.msra.mxu0 0
        %1220 = vmatprep.subr.bf16.mxu0 0
        %1221 = vmatpush2.bf16.msra.mxu0 0
        %1222 = vmatprep.subr.bf16.mxu0 0
        %1223 = vmatpush2.bf16.msra.mxu0 0
        %1224 = vmatprep.subr.bf16.mxu0 0
        %1225 = vmatpush2.bf16.msra.mxu0 0
        %1226 = vmatprep.subr.bf16.mxu0 0
        %1227 = vmatpush2.bf16.msra.mxu0 0
        %1228 = vmatprep.subr.bf16.mxu0 0
        %1229 = vmatpush2.bf16.msra.mxu0 0
        %1230 = vmatprep.subr.bf16.mxu0 0
        %1231 = vmatpush2.bf16.msra.mxu0 0
        %1232 = vmatprep.subr.bf16.mxu0 0
        %1233 = vmatpush2.bf16.msra.mxu0 0
        %1234 = vmatprep.mubr.bf16.mxu0 0
        %1235 = vmatmul.mubr.bf16.gmra.mxu0 %v1150
        %v1236 = vpop.f32.mrf.mxu0
        %v1237 = vadd.f32 0.0, %v1236
        %v1238 = vpop.f32.mrf.mxu0
        %v1239 = vpop.f32.mrf.mxu0
        %v1240 = vpop.f32.mrf.mxu0
        %1241 = vdwg.mxu0
        %v1242 = vadd.f32 %v1117, %v1196
        %v1243 = vadd.f32 %v1118, %v1198
        %v1244 = vadd.f32 %v1119, %v1237
        %s1245 = scalar_lea.vmem %s2, 28
        %v1246 = vld [vmem:[%s1245] sm:$0xf]
        %v1247 = vld [vmem:[%s384 + $0x2] sm:$0x3f]
        %v1249 = vcombine.high %v1247, %v1247
        %v1251 = vunpack.c.l.s4 1983009808
        %v1252 = vunpack.c.0.s8 %v1251
        %v1253 = vlaneseq
        %v1254 = vshrl.u32 %v1253, 7
        %v1255 = vsub.s32 %v1252, %v1254
        %v1256 = vrot.slane %v1247, %v1255
        %v1258 = vunpack.c.l.s4 1983009808
        %v1259 = vunpack.c.0.s8 %v1258
        %v1260 = vlaneseq
        %v1261 = vshrl.u32 %v1260, 7
        %v1262 = vsub.s32 %v1259, %v1261
        %v1263 = vrot.slane %v1249, %v1262
        %v1264 = vcombine.high %v1256, %v1256
        %1265 = vrot.lane.b32.xlu0 %v1256, 110
        %v1266 = vpop.permute.xlu0 %1265
        %1267 = vrot.lane.b32.xlu0 %v1264, 110
        %v1268 = vpop.permute.xlu0 %1267
        %1269 = vrot.lane.b32.xlu0 %v1263, 110
        %v1270 = vpop.permute.xlu0 %1269
        %vm1271 = vcmask 900096
        %v1272 = vsel %vm1271, %v1266, %v1268
        %v1273 = vsel %vm1271, %v1268, %v1270
        %v1275 = vsel %vm421, %v1246, 0
        %v1278 = vsel %vm425, %v1272, 0
        %v1281 = vsel %vm425, %v1273, 0
        %v1284 = vsel %vm425, %v1270, 0
        %1286 = vmatprep.subr.bf16.mxu0 0
        %1287 = vmatpush1.bf16.msra.mxu0 0
        %1288 = vmatprep.subr.bf16.mxu0 0
        %1289 = vmatpush1.bf16.msra.mxu0 0
        %1290 = vmatprep.subr.bf16.mxu0 0
        %1291 = vmatpush1.bf16.msra.mxu0 0
        %1292 = vmatprep.subr.bf16.mxu0 0
        %1293 = vmatpush1.bf16.msra.mxu0 0
        %1294 = vmatprep.subr.bf16.mxu0 0
        %1295 = vmatpush1.bf16.msra.mxu0 0
        %1296 = vmatprep.subr.bf16.mxu0 0
        %1297 = vmatpush1.bf16.msra.mxu0 0
        %1298 = vmatprep.subr.bf16.mxu0 0
        %1299 = vmatpush1.bf16.msra.mxu0 0
        %1300 = vmatprep.subr.bf16.mxu0 %v1281
        %1301 = vmatpush1.bf16.msra.mxu0 %v1278
        %1302 = vmatprep.subr.bf16.mxu0 0
        %1303 = vmatpush2.bf16.msra.mxu0 0
        %1304 = vmatprep.subr.bf16.mxu0 0
        %1305 = vmatpush2.bf16.msra.mxu0 0
        %1306 = vmatprep.subr.bf16.mxu0 0
        %1307 = vmatpush2.bf16.msra.mxu0 0
        %1308 = vmatprep.subr.bf16.mxu0 0
        %1309 = vmatpush2.bf16.msra.mxu0 0
        %1310 = vmatprep.subr.bf16.mxu0 0
        %1311 = vmatpush2.bf16.msra.mxu0 0
        %1312 = vmatprep.subr.bf16.mxu0 0
        %1313 = vmatpush2.bf16.msra.mxu0 0
        %1314 = vmatprep.subr.bf16.mxu0 0
        %1315 = vmatpush2.bf16.msra.mxu0 0
        %1316 = vmatprep.subr.bf16.mxu0 0
        %1317 = vmatpush2.bf16.msra.mxu0 0
        %1318 = vmatprep.mubr.bf16.mxu0 0
        %1319 = vmatmul.mubr.bf16.gmra.mxu0 %v1275
        %v1320 = vpop.f32.mrf.mxu0
        %v1321 = vadd.f32 0.0, %v1320
        %v1322 = vpop.f32.mrf.mxu0
        %v1323 = vadd.f32 0.0, %v1322
        %v1324 = vpop.f32.mrf.mxu0
        %v1325 = vpop.f32.mrf.mxu0
        %1326 = vdwg.mxu0
        %1327 = vmatprep.subr.bf16.mxu0 0
        %1328 = vmatpush1.bf16.msra.mxu0 0
        %1329 = vmatprep.subr.bf16.mxu0 0
        %1330 = vmatpush1.bf16.msra.mxu0 0
        %1331 = vmatprep.subr.bf16.mxu0 0
        %1332 = vmatpush1.bf16.msra.mxu0 0
        %1333 = vmatprep.subr.bf16.mxu0 0
        %1334 = vmatpush1.bf16.msra.mxu0 0
        %1335 = vmatprep.subr.bf16.mxu0 0
        %1336 = vmatpush1.bf16.msra.mxu0 0
        %1337 = vmatprep.subr.bf16.mxu0 0
        %1338 = vmatpush1.bf16.msra.mxu0 0
        %1339 = vmatprep.subr.bf16.mxu0 0
        %1340 = vmatpush1.bf16.msra.mxu0 0
        %1341 = vmatprep.subr.bf16.mxu0 0
        %1342 = vmatpush1.bf16.msra.mxu0 %v1284
        %1343 = vmatprep.subr.bf16.mxu0 0
        %1344 = vmatpush2.bf16.msra.mxu0 0
        %1345 = vmatprep.subr.bf16.mxu0 0
        %1346 = vmatpush2.bf16.msra.mxu0 0
        %1347 = vmatprep.subr.bf16.mxu0 0
        %1348 = vmatpush2.bf16.msra.mxu0 0
        %1349 = vmatprep.subr.bf16.mxu0 0
        %1350 = vmatpush2.bf16.msra.mxu0 0
        %1351 = vmatprep.subr.bf16.mxu0 0
        %1352 = vmatpush2.bf16.msra.mxu0 0
        %1353 = vmatprep.subr.bf16.mxu0 0
        %1354 = vmatpush2.bf16.msra.mxu0 0
        %1355 = vmatprep.subr.bf16.mxu0 0
        %1356 = vmatpush2.bf16.msra.mxu0 0
        %1357 = vmatprep.subr.bf16.mxu0 0
        %1358 = vmatpush2.bf16.msra.mxu0 0
        %1359 = vmatprep.mubr.bf16.mxu0 0
        %1360 = vmatmul.mubr.bf16.gmra.mxu0 %v1275
        %v1361 = vpop.f32.mrf.mxu0
        %v1362 = vadd.f32 0.0, %v1361
        %v1363 = vpop.f32.mrf.mxu0
        %v1364 = vpop.f32.mrf.mxu0
        %v1365 = vpop.f32.mrf.mxu0
        %1366 = vdwg.mxu0
        %v1367 = vadd.f32 %v1242, %v1321
        %v1368 = vadd.f32 %v1243, %v1323
        %v1369 = vadd.f32 %v1244, %v1362
        %s1370 = scalar_lea.vmem %s2, 32
        %v1371 = vld [vmem:[%s1370] sm:$0xf]
        %v1372 = vld [vmem:[%s384 + $0x2] sm:$0x3f]
        %v1374 = vcombine.high %v1372, %v1372
        %v1376 = vunpack.c.l.s4 1983009808
        %v1377 = vunpack.c.0.s8 %v1376
        %v1378 = vlaneseq
        %v1379 = vshrl.u32 %v1378, 7
        %v1380 = vsub.s32 %v1377, %v1379
        %v1381 = vrot.slane %v1372, %v1380
        %v1383 = vunpack.c.l.s4 1983009808
        %v1384 = vunpack.c.0.s8 %v1383
        %v1385 = vlaneseq
        %v1386 = vshrl.u32 %v1385, 7
        %v1387 = vsub.s32 %v1384, %v1386
        %v1388 = vrot.slane %v1374, %v1387
        %v1389 = vcombine.high %v1381, %v1381
        %1390 = vrot.lane.b32.xlu0 %v1381, 109
        %v1391 = vpop.permute.xlu0 %1390
        %1392 = vrot.lane.b32.xlu0 %v1389, 109
        %v1393 = vpop.permute.xlu0 %1392
        %1394 = vrot.lane.b32.xlu0 %v1388, 109
        %v1395 = vpop.permute.xlu0 %1394
        %vm1396 = vcmask 891904
        %v1397 = vsel %vm1396, %v1391, %v1393
        %v1398 = vsel %vm1396, %v1393, %v1395
        %v1400 = vsel %vm421, %v1371, 0
        %v1403 = vsel %vm425, %v1397, 0
        %v1406 = vsel %vm425, %v1398, 0
        %v1409 = vsel %vm425, %v1395, 0
        %1411 = vmatprep.subr.bf16.mxu0 0
        %1412 = vmatpush1.bf16.msra.mxu0 0
        %1413 = vmatprep.subr.bf16.mxu0 0
        %1414 = vmatpush1.bf16.msra.mxu0 0
        %1415 = vmatprep.subr.bf16.mxu0 0
        %1416 = vmatpush1.bf16.msra.mxu0 0
        %1417 = vmatprep.subr.bf16.mxu0 0
        %1418 = vmatpush1.bf16.msra.mxu0 0
        %1419 = vmatprep.subr.bf16.mxu0 0
        %1420 = vmatpush1.bf16.msra.mxu0 0
        %1421 = vmatprep.subr.bf16.mxu0 0
        %1422 = vmatpush1.bf16.msra.mxu0 0
        %1423 = vmatprep.subr.bf16.mxu0 0
        %1424 = vmatpush1.bf16.msra.mxu0 0
        %1425 = vmatprep.subr.bf16.mxu0 %v1406
        %1426 = vmatpush1.bf16.msra.mxu0 %v1403
        %1427 = vmatprep.subr.bf16.mxu0 0
        %1428 = vmatpush2.bf16.msra.mxu0 0
        %1429 = vmatprep.subr.bf16.mxu0 0
        %1430 = vmatpush2.bf16.msra.mxu0 0
        %1431 = vmatprep.subr.bf16.mxu0 0
        %1432 = vmatpush2.bf16.msra.mxu0 0
        %1433 = vmatprep.subr.bf16.mxu0 0
        %1434 = vmatpush2.bf16.msra.mxu0 0
        %1435 = vmatprep.subr.bf16.mxu0 0
        %1436 = vmatpush2.bf16.msra.mxu0 0
        %1437 = vmatprep.subr.bf16.mxu0 0
        %1438 = vmatpush2.bf16.msra.mxu0 0
        %1439 = vmatprep.subr.bf16.mxu0 0
        %1440 = vmatpush2.bf16.msra.mxu0 0
        %1441 = vmatprep.subr.bf16.mxu0 0
        %1442 = vmatpush2.bf16.msra.mxu0 0
        %1443 = vmatprep.mubr.bf16.mxu0 0
        %1444 = vmatmul.mubr.bf16.gmra.mxu0 %v1400
        %v1445 = vpop.f32.mrf.mxu0
        %v1446 = vadd.f32 0.0, %v1445
        %v1447 = vpop.f32.mrf.mxu0
        %v1448 = vadd.f32 0.0, %v1447
        %v1449 = vpop.f32.mrf.mxu0
        %v1450 = vpop.f32.mrf.mxu0
        %1451 = vdwg.mxu0
        %1452 = vmatprep.subr.bf16.mxu0 0
        %1453 = vmatpush1.bf16.msra.mxu0 0
        %1454 = vmatprep.subr.bf16.mxu0 0
        %1455 = vmatpush1.bf16.msra.mxu0 0
        %1456 = vmatprep.subr.bf16.mxu0 0
        %1457 = vmatpush1.bf16.msra.mxu0 0
        %1458 = vmatprep.subr.bf16.mxu0 0
        %1459 = vmatpush1.bf16.msra.mxu0 0
        %1460 = vmatprep.subr.bf16.mxu0 0
        %1461 = vmatpush1.bf16.msra.mxu0 0
        %1462 = vmatprep.subr.bf16.mxu0 0
        %1463 = vmatpush1.bf16.msra.mxu0 0
        %1464 = vmatprep.subr.bf16.mxu0 0
        %1465 = vmatpush1.bf16.msra.mxu0 0
        %1466 = vmatprep.subr.bf16.mxu0 0
        %1467 = vmatpush1.bf16.msra.mxu0 %v1409
        %1468 = vmatprep.subr.bf16.mxu0 0
        %1469 = vmatpush2.bf16.msra.mxu0 0
        %1470 = vmatprep.subr.bf16.mxu0 0
        %1471 = vmatpush2.bf16.msra.mxu0 0
        %1472 = vmatprep.subr.bf16.mxu0 0
        %1473 = vmatpush2.bf16.msra.mxu0 0
        %1474 = vmatprep.subr.bf16.mxu0 0
        %1475 = vmatpush2.bf16.msra.mxu0 0
        %1476 = vmatprep.subr.bf16.mxu0 0
        %1477 = vmatpush2.bf16.msra.mxu0 0
        %1478 = vmatprep.subr.bf16.mxu0 0
        %1479 = vmatpush2.bf16.msra.mxu0 0
        %1480 = vmatprep.subr.bf16.mxu0 0
        %1481 = vmatpush2.bf16.msra.mxu0 0
        %1482 = vmatprep.subr.bf16.mxu0 0
        %1483 = vmatpush2.bf16.msra.mxu0 0
        %1484 = vmatprep.mubr.bf16.mxu0 0
        %1485 = vmatmul.mubr.bf16.gmra.mxu0 %v1400
        %v1486 = vpop.f32.mrf.mxu0
        %v1487 = vadd.f32 0.0, %v1486
        %v1488 = vpop.f32.mrf.mxu0
        %v1489 = vpop.f32.mrf.mxu0
        %v1490 = vpop.f32.mrf.mxu0
        %1491 = vdwg.mxu0
        %v1492 = vadd.f32 %v1367, %v1446
        %v1493 = vadd.f32 %v1368, %v1448
        %v1494 = vadd.f32 %v1369, %v1487
        %v1495 = vld [vmem:[%s3] sm:$0xff]
        %1497 = vset.pattern.permute.xlu0 0
        %1498 = vperm.xlu0 %1497, %v1495
        %v1499 = vpop.permute.xlu0 %1498
        %v1501 = vmul.f32 %v1492, %v1499
        %v1502 = vmul.f32 %v1493, %v1499
        %v1503 = vmul.f32 %v1494, %v1499
        %v1504 = vld [vmem:[%s4] sm:$0xff]
        %1506 = vset.pattern.permute.xlu0 0
        %1507 = vperm.xlu0 %1506, %v1504
        %v1508 = vpop.permute.xlu0 %1507
        %v1510 = vadd.f32 %v1501, %v1508
        %v1511 = vadd.f32 %v1502, %v1508
        %v1512 = vadd.f32 %v1503, %v1508
        %v1513 = vmax.f32 %v1510, 0.0
        %v1514 = vmax.f32 %v1511, 0.0
        %v1515 = vmax.f32 %v1512, 0.0
        %v1517 = vlaneseq
        %v1518 = vshrl.u32 %v1517, 7
        %v1519 = vsub.s32 0, %v1518
        %v1520 = vrot.slane %v386, %v1519
        %v1521 = vlaneseq
        %v1522 = vshrl.u32 %v1521, 7
        %v1523 = vsub.s32 1, %v1522
        %v1524 = vrot.slane %v386, %v1523
        %v1525 = vlaneseq
        %v1526 = vshrl.u32 %v1525, 7
        %v1527 = vsub.s32 2, %v1526
        %v1528 = vrot.slane %v386, %v1527
        %v1532 = vmul.f32 %v1513, %v1520
        %v1533 = vmul.f32 %v1514, %v1524
        %v1534 = vmul.f32 %v1515, %v1528
        %1535 = vst [vmem:[#allocation2] sm:$0xff] 0
        %1536 = vst [vmem:[#allocation2 + $0x8] sm:$0xff] 0
        %v1537 = vpack.c.bf16 %v1532, %v1532
        %v1538 = vpack.c.bf16 %v1533, %v1533
        %v1539 = vpack.c.bf16 %v1534, %v1534
        %v1543 = vunpack.c.l.b16 %v1537
        %v1544 = vunpack.c.l.b16 %v1538
        %v1545 = vunpack.c.l.b16 %v1539
        %v1546 = vpack.c.b16 %v1544, %v1543
        %v1547 = vpack.c.b16 %v1545, %v1545
        %1550 = vst [vmem:[#allocation2 + $0x4] sm:$0xff] %v1546
        %vm1551 = vcmask 551936
        %1552 = vst.msk [vmem:[#allocation2 + $0xc] sm:$0xf] %vm1551, %v1547
        %v1553 = vld [vmem:[%s5] sm:$0xf]
        %v1554 = vld [vmem:[#allocation2] sm:$0xff]
        %v1555 = vld [vmem:[#allocation2 + $0x8] sm:$0xff]
        %s1556 = scalar_lea.vmem %s5, 4
        %v1557 = vld [vmem:[%s1556] sm:$0xf]
        %v1560 = vunpack.c.l.b16 %v1554
        %v1561 = vunpack.c.h.b16 %v1554
        %v1562 = vunpack.c.l.b16 %v1555
        %v1563 = vunpack.c.h.b16 %v1555
        %v1564 = vpack.c.b16 %v1560, %v1560
        %v1565 = vpack.c.b16 %v1561, %v1561
        %v1566 = vpack.c.b16 %v1562, %v1562
        %v1567 = vpack.c.b16 %v1563, %v1563
        %1568 = vrot.lane.b32.xlu0 %v1564, 18
        %v1569 = vpop.permute.xlu0 %1568
        %1570 = vrot.lane.b32.xlu0 %v1565, 18
        %v1571 = vpop.permute.xlu0 %1570
        %1572 = vrot.lane.b32.xlu0 %v1566, 18
        %v1573 = vpop.permute.xlu0 %1572
        %1574 = vrot.lane.b32.xlu0 %v1567, 18
        %v1575 = vpop.permute.xlu0 %1574
        %v1576 = vsel %vm417, %v1569, %v1571
        %v1577 = vsel %vm417, %v1571, %v1573
        %v1578 = vsel %vm417, %v1573, %v1575
        %vm1579 = vcmask 64512
        %v1581 = vsel %vm1579, %v1557, 0
        %vm1583 = vcmask 1043456
        %v1585 = vsel %vm1583, %v1576, 0
        %v1588 = vsel %vm1583, %v1577, 0
        %v1591 = vsel %vm1583, %v1578, 0
        %1593 = vmatprep.subr.bf16.mxu0 0
        %1594 = vmatpush1.bf16.msra.mxu0 0
        %1595 = vmatprep.subr.bf16.mxu0 0
        %1596 = vmatpush1.bf16.msra.mxu0 0
        %1597 = vmatprep.subr.bf16.mxu0 0
        %1598 = vmatpush1.bf16.msra.mxu0 0
        %1599 = vmatprep.subr.bf16.mxu0 0
        %1600 = vmatpush1.bf16.msra.mxu0 0
        %1601 = vmatprep.subr.bf16.mxu0 0
        %1602 = vmatpush1.bf16.msra.mxu0 0
        %1603 = vmatprep.subr.bf16.mxu0 0
        %1604 = vmatpush1.bf16.msra.mxu0 0
        %1605 = vmatprep.subr.bf16.mxu0 0
        %1606 = vmatpush1.bf16.msra.mxu0 0
        %1607 = vmatprep.subr.bf16.mxu0 %v1588
        %1608 = vmatpush1.bf16.msra.mxu0 %v1585
        %1609 = vmatprep.subr.bf16.mxu0 0
        %1610 = vmatpush2.bf16.msra.mxu0 0
        %1611 = vmatprep.subr.bf16.mxu0 0
        %1612 = vmatpush2.bf16.msra.mxu0 0
        %1613 = vmatprep.subr.bf16.mxu0 0
        %1614 = vmatpush2.bf16.msra.mxu0 0
        %1615 = vmatprep.subr.bf16.mxu0 0
        %1616 = vmatpush2.bf16.msra.mxu0 0
        %1617 = vmatprep.subr.bf16.mxu0 0
        %1618 = vmatpush2.bf16.msra.mxu0 0
        %1619 = vmatprep.subr.bf16.mxu0 0
        %1620 = vmatpush2.bf16.msra.mxu0 0
        %1621 = vmatprep.subr.bf16.mxu0 0
        %1622 = vmatpush2.bf16.msra.mxu0 0
        %1623 = vmatprep.subr.bf16.mxu0 0
        %1624 = vmatpush2.bf16.msra.mxu0 0
        %1625 = vmatprep.mubr.bf16.mxu0 0
        %1626 = vmatmul.mubr.bf16.gmra.mxu0 %v1581
        %v1627 = vpop.f32.mrf.mxu0
        %v1628 = vadd.f32 0.0, %v1627
        %v1629 = vpop.f32.mrf.mxu0
        %v1630 = vadd.f32 0.0, %v1629
        %v1631 = vpop.f32.mrf.mxu0
        %v1632 = vpop.f32.mrf.mxu0
        %1633 = vdwg.mxu0
        %1634 = vmatprep.subr.bf16.mxu0 0
        %1635 = vmatpush1.bf16.msra.mxu0 0
        %1636 = vmatprep.subr.bf16.mxu0 0
        %1637 = vmatpush1.bf16.msra.mxu0 0
        %1638 = vmatprep.subr.bf16.mxu0 0
        %1639 = vmatpush1.bf16.msra.mxu0 0
        %1640 = vmatprep.subr.bf16.mxu0 0
        %1641 = vmatpush1.bf16.msra.mxu0 0
        %1642 = vmatprep.subr.bf16.mxu0 0
        %1643 = vmatpush1.bf16.msra.mxu0 0
        %1644 = vmatprep.subr.bf16.mxu0 0
        %1645 = vmatpush1.bf16.msra.mxu0 0
        %1646 = vmatprep.subr.bf16.mxu0 0
        %1647 = vmatpush1.bf16.msra.mxu0 0
        %1648 = vmatprep.subr.bf16.mxu0 0
        %1649 = vmatpush1.bf16.msra.mxu0 %v1591
        %1650 = vmatprep.subr.bf16.mxu0 0
        %1651 = vmatpush2.bf16.msra.mxu0 0
        %1652 = vmatprep.subr.bf16.mxu0 0
        %1653 = vmatpush2.bf16.msra.mxu0 0
        %1654 = vmatprep.subr.bf16.mxu0 0
        %1655 = vmatpush2.bf16.msra.mxu0 0
        %1656 = vmatprep.subr.bf16.mxu0 0
        %1657 = vmatpush2.bf16.msra.mxu0 0
        %1658 = vmatprep.subr.bf16.mxu0 0
        %1659 = vmatpush2.bf16.msra.mxu0 0
        %1660 = vmatprep.subr.bf16.mxu0 0
        %1661 = vmatpush2.bf16.msra.mxu0 0
        %1662 = vmatprep.subr.bf16.mxu0 0
        %1663 = vmatpush2.bf16.msra.mxu0 0
        %1664 = vmatprep.subr.bf16.mxu0 0
        %1665 = vmatpush2.bf16.msra.mxu0 0
        %1666 = vmatprep.mubr.bf16.mxu0 0
        %1667 = vmatmul.mubr.bf16.gmra.mxu0 %v1581
        %v1668 = vpop.f32.mrf.mxu0
        %v1669 = vadd.f32 0.0, %v1668
        %v1670 = vpop.f32.mrf.mxu0
        %v1671 = vpop.f32.mrf.mxu0
        %v1672 = vpop.f32.mrf.mxu0
        %1673 = vdwg.mxu0
        %1674 = vrot.lane.b32.xlu0 %v1564, 19
        %v1675 = vpop.permute.xlu0 %1674
        %1676 = vrot.lane.b32.xlu0 %v1565, 19
        %v1677 = vpop.permute.xlu0 %1676
        %1678 = vrot.lane.b32.xlu0 %v1566, 19
        %v1679 = vpop.permute.xlu0 %1678
        %1680 = vrot.lane.b32.xlu0 %v1567, 19
        %v1681 = vpop.permute.xlu0 %1680
        %v1682 = vsel %vm524, %v1675, %v1677
        %v1683 = vsel %vm524, %v1677, %v1679
        %v1684 = vsel %vm524, %v1679, %v1681
        %v1686 = vsel %vm1579, %v1553, 0
        %v1689 = vsel %vm1583, %v1682, 0
        %v1692 = vsel %vm1583, %v1683, 0
        %v1695 = vsel %vm1583, %v1684, 0
        %1697 = vmatprep.subr.bf16.mxu0 0
        %1698 = vmatpush1.bf16.msra.mxu0 0
        %1699 = vmatprep.subr.bf16.mxu0 0
        %1700 = vmatpush1.bf16.msra.mxu0 0
        %1701 = vmatprep.subr.bf16.mxu0 0
        %1702 = vmatpush1.bf16.msra.mxu0 0
        %1703 = vmatprep.subr.bf16.mxu0 0
        %1704 = vmatpush1.bf16.msra.mxu0 0
        %1705 = vmatprep.subr.bf16.mxu0 0
        %1706 = vmatpush1.bf16.msra.mxu0 0
        %1707 = vmatprep.subr.bf16.mxu0 0
        %1708 = vmatpush1.bf16.msra.mxu0 0
        %1709 = vmatprep.subr.bf16.mxu0 0
        %1710 = vmatpush1.bf16.msra.mxu0 0
        %1711 = vmatprep.subr.bf16.mxu0 %v1692
        %1712 = vmatpush1.bf16.msra.mxu0 %v1689
        %1713 = vmatprep.subr.bf16.mxu0 0
        %1714 = vmatpush2.bf16.msra.mxu0 0
        %1715 = vmatprep.subr.bf16.mxu0 0
        %1716 = vmatpush2.bf16.msra.mxu0 0
        %1717 = vmatprep.subr.bf16.mxu0 0
        %1718 = vmatpush2.bf16.msra.mxu0 0
        %1719 = vmatprep.subr.bf16.mxu0 0
        %1720 = vmatpush2.bf16.msra.mxu0 0
        %1721 = vmatprep.subr.bf16.mxu0 0
        %1722 = vmatpush2.bf16.msra.mxu0 0
        %1723 = vmatprep.subr.bf16.mxu0 0
        %1724 = vmatpush2.bf16.msra.mxu0 0
        %1725 = vmatprep.subr.bf16.mxu0 0
        %1726 = vmatpush2.bf16.msra.mxu0 0
        %1727 = vmatprep.subr.bf16.mxu0 0
        %1728 = vmatpush2.bf16.msra.mxu0 0
        %1729 = vmatprep.mubr.bf16.mxu0 0
        %1730 = vmatmul.mubr.bf16.gmra.mxu0 %v1686
        %v1731 = vpop.f32.mrf.mxu0
        %v1732 = vadd.f32 %v1628, %v1731
        %v1733 = vpop.f32.mrf.mxu0
        %v1734 = vadd.f32 %v1630, %v1733
        %v1735 = vpop.f32.mrf.mxu0
        %v1736 = vpop.f32.mrf.mxu0
        %1737 = vdwg.mxu0
        %1738 = vmatprep.subr.bf16.mxu0 0
        %1739 = vmatpush1.bf16.msra.mxu0 0
        %1740 = vmatprep.subr.bf16.mxu0 0
        %1741 = vmatpush1.bf16.msra.mxu0 0
        %1742 = vmatprep.subr.bf16.mxu0 0
        %1743 = vmatpush1.bf16.msra.mxu0 0
        %1744 = vmatprep.subr.bf16.mxu0 0
        %1745 = vmatpush1.bf16.msra.mxu0 0
        %1746 = vmatprep.subr.bf16.mxu0 0
        %1747 = vmatpush1.bf16.msra.mxu0 0
        %1748 = vmatprep.subr.bf16.mxu0 0
        %1749 = vmatpush1.bf16.msra.mxu0 0
        %1750 = vmatprep.subr.bf16.mxu0 0
        %1751 = vmatpush1.bf16.msra.mxu0 0
        %1752 = vmatprep.subr.bf16.mxu0 0
        %1753 = vmatpush1.bf16.msra.mxu0 %v1695
        %1754 = vmatprep.subr.bf16.mxu0 0
        %1755 = vmatpush2.bf16.msra.mxu0 0
        %1756 = vmatprep.subr.bf16.mxu0 0
        %1757 = vmatpush2.bf16.msra.mxu0 0
        %1758 = vmatprep.subr.bf16.mxu0 0
        %1759 = vmatpush2.bf16.msra.mxu0 0
        %1760 = vmatprep.subr.bf16.mxu0 0
        %1761 = vmatpush2.bf16.msra.mxu0 0
        %1762 = vmatprep.subr.bf16.mxu0 0
        %1763 = vmatpush2.bf16.msra.mxu0 0
        %1764 = vmatprep.subr.bf16.mxu0 0
        %1765 = vmatpush2.bf16.msra.mxu0 0
        %1766 = vmatprep.subr.bf16.mxu0 0
        %1767 = vmatpush2.bf16.msra.mxu0 0
        %1768 = vmatprep.subr.bf16.mxu0 0
        %1769 = vmatpush2.bf16.msra.mxu0 0
        %1770 = vmatprep.mubr.bf16.mxu0 0
        %1771 = vmatmul.mubr.bf16.gmra.mxu0 %v1686
        %v1772 = vpop.f32.mrf.mxu0
        %v1773 = vadd.f32 %v1669, %v1772
        %v1774 = vpop.f32.mrf.mxu0
        %v1775 = vpop.f32.mrf.mxu0
        %v1776 = vpop.f32.mrf.mxu0
        %1777 = vdwg.mxu0
        %s1778 = scalar_lea.vmem %s5, 8
        %v1779 = vld [vmem:[%s1778] sm:$0xf]
        %1780 = vrot.lane.b32.xlu0 %v1564, 17
        %v1781 = vpop.permute.xlu0 %1780
        %1782 = vrot.lane.b32.xlu0 %v1565, 17
        %v1783 = vpop.permute.xlu0 %1782
        %1784 = vrot.lane.b32.xlu0 %v1566, 17
        %v1785 = vpop.permute.xlu0 %1784
        %1786 = vrot.lane.b32.xlu0 %v1567, 17
        %v1787 = vpop.permute.xlu0 %1786
        %v1788 = vsel %vm650, %v1781, %v1783
        %v1789 = vsel %vm650, %v1783, %v1785
        %v1790 = vsel %vm650, %v1785, %v1787
        %v1792 = vsel %vm1579, %v1779, 0
        %v1795 = vsel %vm1583, %v1788, 0
        %v1798 = vsel %vm1583, %v1789, 0
        %v1801 = vsel %vm1583, %v1790, 0
        %1803 = vmatprep.subr.bf16.mxu0 0
        %1804 = vmatpush1.bf16.msra.mxu0 0
        %1805 = vmatprep.subr.bf16.mxu0 0
        %1806 = vmatpush1.bf16.msra.mxu0 0
        %1807 = vmatprep.subr.bf16.mxu0 0
        %1808 = vmatpush1.bf16.msra.mxu0 0
        %1809 = vmatprep.subr.bf16.mxu0 0
        %1810 = vmatpush1.bf16.msra.mxu0 0
        %1811 = vmatprep.subr.bf16.mxu0 0
        %1812 = vmatpush1.bf16.msra.mxu0 0
        %1813 = vmatprep.subr.bf16.mxu0 0
        %1814 = vmatpush1.bf16.msra.mxu0 0
        %1815 = vmatprep.subr.bf16.mxu0 0
        %1816 = vmatpush1.bf16.msra.mxu0 0
        %1817 = vmatprep.subr.bf16.mxu0 %v1798
        %1818 = vmatpush1.bf16.msra.mxu0 %v1795
        %1819 = vmatprep.subr.bf16.mxu0 0
        %1820 = vmatpush2.bf16.msra.mxu0 0
        %1821 = vmatprep.subr.bf16.mxu0 0
        %1822 = vmatpush2.bf16.msra.mxu0 0
        %1823 = vmatprep.subr.bf16.mxu0 0
        %1824 = vmatpush2.bf16.msra.mxu0 0
        %1825 = vmatprep.subr.bf16.mxu0 0
        %1826 = vmatpush2.bf16.msra.mxu0 0
        %1827 = vmatprep.subr.bf16.mxu0 0
        %1828 = vmatpush2.bf16.msra.mxu0 0
        %1829 = vmatprep.subr.bf16.mxu0 0
        %1830 = vmatpush2.bf16.msra.mxu0 0
        %1831 = vmatprep.subr.bf16.mxu0 0
        %1832 = vmatpush2.bf16.msra.mxu0 0
        %1833 = vmatprep.subr.bf16.mxu0 0
        %1834 = vmatpush2.bf16.msra.mxu0 0
        %1835 = vmatprep.mubr.bf16.mxu0 0
        %1836 = vmatmul.mubr.bf16.gmra.mxu0 %v1792
        %v1837 = vpop.f32.mrf.mxu0
        %v1838 = vadd.f32 0.0, %v1837
        %v1839 = vpop.f32.mrf.mxu0
        %v1840 = vadd.f32 0.0, %v1839
        %v1841 = vpop.f32.mrf.mxu0
        %v1842 = vpop.f32.mrf.mxu0
        %1843 = vdwg.mxu0
        %1844 = vmatprep.subr.bf16.mxu0 0
        %1845 = vmatpush1.bf16.msra.mxu0 0
        %1846 = vmatprep.subr.bf16.mxu0 0
        %1847 = vmatpush1.bf16.msra.mxu0 0
        %1848 = vmatprep.subr.bf16.mxu0 0
        %1849 = vmatpush1.bf16.msra.mxu0 0
        %1850 = vmatprep.subr.bf16.mxu0 0
        %1851 = vmatpush1.bf16.msra.mxu0 0
        %1852 = vmatprep.subr.bf16.mxu0 0
        %1853 = vmatpush1.bf16.msra.mxu0 0
        %1854 = vmatprep.subr.bf16.mxu0 0
        %1855 = vmatpush1.bf16.msra.mxu0 0
        %1856 = vmatprep.subr.bf16.mxu0 0
        %1857 = vmatpush1.bf16.msra.mxu0 0
        %1858 = vmatprep.subr.bf16.mxu0 0
        %1859 = vmatpush1.bf16.msra.mxu0 %v1801
        %1860 = vmatprep.subr.bf16.mxu0 0
        %1861 = vmatpush2.bf16.msra.mxu0 0
        %1862 = vmatprep.subr.bf16.mxu0 0
        %1863 = vmatpush2.bf16.msra.mxu0 0
        %1864 = vmatprep.subr.bf16.mxu0 0
        %1865 = vmatpush2.bf16.msra.mxu0 0
        %1866 = vmatprep.subr.bf16.mxu0 0
        %1867 = vmatpush2.bf16.msra.mxu0 0
        %1868 = vmatprep.subr.bf16.mxu0 0
        %1869 = vmatpush2.bf16.msra.mxu0 0
        %1870 = vmatprep.subr.bf16.mxu0 0
        %1871 = vmatpush2.bf16.msra.mxu0 0
        %1872 = vmatprep.subr.bf16.mxu0 0
        %1873 = vmatpush2.bf16.msra.mxu0 0
        %1874 = vmatprep.subr.bf16.mxu0 0
        %1875 = vmatpush2.bf16.msra.mxu0 0
        %1876 = vmatprep.mubr.bf16.mxu0 0
        %1877 = vmatmul.mubr.bf16.gmra.mxu0 %v1792
        %v1878 = vpop.f32.mrf.mxu0
        %v1879 = vadd.f32 0.0, %v1878
        %v1880 = vpop.f32.mrf.mxu0
        %v1881 = vpop.f32.mrf.mxu0
        %v1882 = vpop.f32.mrf.mxu0
        %1883 = vdwg.mxu0
        %v1884 = vadd.f32 %v1732, %v1838
        %v1885 = vadd.f32 %v1734, %v1840
        %v1886 = vadd.f32 %v1773, %v1879
        %s1887 = scalar_lea.vmem %s5, 12
        %v1888 = vld [vmem:[%s1887] sm:$0xf]
        %1889 = vrot.lane.b32.xlu0 %v1564, 1
        %v1890 = vpop.permute.xlu0 %1889
        %1891 = vrot.lane.b32.xlu0 %v1565, 1
        %v1892 = vpop.permute.xlu0 %1891
        %1893 = vrot.lane.b32.xlu0 %v1566, 1
        %v1894 = vpop.permute.xlu0 %1893
        %1895 = vrot.lane.b32.xlu0 %v1567, 1
        %v1896 = vpop.permute.xlu0 %1895
        %v1897 = vsel %vm779, %v1890, %v1892
        %v1898 = vsel %vm779, %v1892, %v1894
        %v1899 = vsel %vm779, %v1894, %v1896
        %v1901 = vsel %vm1579, %v1888, 0
        %v1904 = vsel %vm1583, %v1897, 0
        %v1907 = vsel %vm1583, %v1898, 0
        %v1910 = vsel %vm1583, %v1899, 0
        %1912 = vmatprep.subr.bf16.mxu0 0
        %1913 = vmatpush1.bf16.msra.mxu0 0
        %1914 = vmatprep.subr.bf16.mxu0 0
        %1915 = vmatpush1.bf16.msra.mxu0 0
        %1916 = vmatprep.subr.bf16.mxu0 0
        %1917 = vmatpush1.bf16.msra.mxu0 0
        %1918 = vmatprep.subr.bf16.mxu0 0
        %1919 = vmatpush1.bf16.msra.mxu0 0
        %1920 = vmatprep.subr.bf16.mxu0 0
        %1921 = vmatpush1.bf16.msra.mxu0 0
        %1922 = vmatprep.subr.bf16.mxu0 0
        %1923 = vmatpush1.bf16.msra.mxu0 0
        %1924 = vmatprep.subr.bf16.mxu0 0
        %1925 = vmatpush1.bf16.msra.mxu0 0
        %1926 = vmatprep.subr.bf16.mxu0 %v1907
        %1927 = vmatpush1.bf16.msra.mxu0 %v1904
        %1928 = vmatprep.subr.bf16.mxu0 0
        %1929 = vmatpush2.bf16.msra.mxu0 0
        %1930 = vmatprep.subr.bf16.mxu0 0
        %1931 = vmatpush2.bf16.msra.mxu0 0
        %1932 = vmatprep.subr.bf16.mxu0 0
        %1933 = vmatpush2.bf16.msra.mxu0 0
        %1934 = vmatprep.subr.bf16.mxu0 0
        %1935 = vmatpush2.bf16.msra.mxu0 0
        %1936 = vmatprep.subr.bf16.mxu0 0
        %1937 = vmatpush2.bf16.msra.mxu0 0
        %1938 = vmatprep.subr.bf16.mxu0 0
        %1939 = vmatpush2.bf16.msra.mxu0 0
        %1940 = vmatprep.subr.bf16.mxu0 0
        %1941 = vmatpush2.bf16.msra.mxu0 0
        %1942 = vmatprep.subr.bf16.mxu0 0
        %1943 = vmatpush2.bf16.msra.mxu0 0
        %1944 = vmatprep.mubr.bf16.mxu0 0
        %1945 = vmatmul.mubr.bf16.gmra.mxu0 %v1901
        %v1946 = vpop.f32.mrf.mxu0
        %v1947 = vadd.f32 0.0, %v1946
        %v1948 = vpop.f32.mrf.mxu0
        %v1949 = vadd.f32 0.0, %v1948
        %v1950 = vpop.f32.mrf.mxu0
        %v1951 = vpop.f32.mrf.mxu0
        %1952 = vdwg.mxu0
        %1953 = vmatprep.subr.bf16.mxu0 0
        %1954 = vmatpush1.bf16.msra.mxu0 0
        %1955 = vmatprep.subr.bf16.mxu0 0
        %1956 = vmatpush1.bf16.msra.mxu0 0
        %1957 = vmatprep.subr.bf16.mxu0 0
        %1958 = vmatpush1.bf16.msra.mxu0 0
        %1959 = vmatprep.subr.bf16.mxu0 0
        %1960 = vmatpush1.bf16.msra.mxu0 0
        %1961 = vmatprep.subr.bf16.mxu0 0
        %1962 = vmatpush1.bf16.msra.mxu0 0
        %1963 = vmatprep.subr.bf16.mxu0 0
        %1964 = vmatpush1.bf16.msra.mxu0 0
        %1965 = vmatprep.subr.bf16.mxu0 0
        %1966 = vmatpush1.bf16.msra.mxu0 0
        %1967 = vmatprep.subr.bf16.mxu0 0
        %1968 = vmatpush1.bf16.msra.mxu0 %v1910
        %1969 = vmatprep.subr.bf16.mxu0 0
        %1970 = vmatpush2.bf16.msra.mxu0 0
        %1971 = vmatprep.subr.bf16.mxu0 0
        %1972 = vmatpush2.bf16.msra.mxu0 0
        %1973 = vmatprep.subr.bf16.mxu0 0
        %1974 = vmatpush2.bf16.msra.mxu0 0
        %1975 = vmatprep.subr.bf16.mxu0 0
        %1976 = vmatpush2.bf16.msra.mxu0 0
        %1977 = vmatprep.subr.bf16.mxu0 0
        %1978 = vmatpush2.bf16.msra.mxu0 0
        %1979 = vmatprep.subr.bf16.mxu0 0
        %1980 = vmatpush2.bf16.msra.mxu0 0
        %1981 = vmatprep.subr.bf16.mxu0 0
        %1982 = vmatpush2.bf16.msra.mxu0 0
        %1983 = vmatprep.subr.bf16.mxu0 0
        %1984 = vmatpush2.bf16.msra.mxu0 0
        %1985 = vmatprep.mubr.bf16.mxu0 0
        %1986 = vmatmul.mubr.bf16.gmra.mxu0 %v1901
        %v1987 = vpop.f32.mrf.mxu0
        %v1988 = vadd.f32 0.0, %v1987
        %v1989 = vpop.f32.mrf.mxu0
        %v1990 = vpop.f32.mrf.mxu0
        %v1991 = vpop.f32.mrf.mxu0
        %1992 = vdwg.mxu0
        %v1993 = vadd.f32 %v1884, %v1947
        %v1994 = vadd.f32 %v1885, %v1949
        %v1995 = vadd.f32 %v1886, %v1988
        %s1996 = scalar_lea.vmem %s5, 16
        %v1997 = vld [vmem:[%s1996] sm:$0xf]
        %v1998 = vld [vmem:[#allocation2 + $0x4] sm:$0xff]
        %v1999 = vld [vmem:[#allocation2 + $0xc] sm:$0xf]
        %v2002 = vunpack.c.l.b16 %v1998
        %v2003 = vunpack.c.h.b16 %v1998
        %v2004 = vunpack.c.l.b16 %v1999
        %v2005 = vpack.c.b16 %v2002, %v2002
        %v2006 = vpack.c.b16 %v2003, %v2003
        %v2007 = vpack.c.b16 %v2004, %v2004
        %v2009 = vsel %vm1579, %v1997, 0
        %v2012 = vsel %vm1583, %v2005, 0
        %v2015 = vsel %vm1583, %v2006, 0
        %v2018 = vsel %vm1583, %v2007, 0
        %2020 = vmatprep.subr.bf16.mxu0 0
        %2021 = vmatpush1.bf16.msra.mxu0 0
        %2022 = vmatprep.subr.bf16.mxu0 0
        %2023 = vmatpush1.bf16.msra.mxu0 0
        %2024 = vmatprep.subr.bf16.mxu0 0
        %2025 = vmatpush1.bf16.msra.mxu0 0
        %2026 = vmatprep.subr.bf16.mxu0 0
        %2027 = vmatpush1.bf16.msra.mxu0 0
        %2028 = vmatprep.subr.bf16.mxu0 0
        %2029 = vmatpush1.bf16.msra.mxu0 0
        %2030 = vmatprep.subr.bf16.mxu0 0
        %2031 = vmatpush1.bf16.msra.mxu0 0
        %2032 = vmatprep.subr.bf16.mxu0 0
        %2033 = vmatpush1.bf16.msra.mxu0 0
        %2034 = vmatprep.subr.bf16.mxu0 %v2015
        %2035 = vmatpush1.bf16.msra.mxu0 %v2012
        %2036 = vmatprep.subr.bf16.mxu0 0
        %2037 = vmatpush2.bf16.msra.mxu0 0
        %2038 = vmatprep.subr.bf16.mxu0 0
        %2039 = vmatpush2.bf16.msra.mxu0 0
        %2040 = vmatprep.subr.bf16.mxu0 0
        %2041 = vmatpush2.bf16.msra.mxu0 0
        %2042 = vmatprep.subr.bf16.mxu0 0
        %2043 = vmatpush2.bf16.msra.mxu0 0
        %2044 = vmatprep.subr.bf16.mxu0 0
        %2045 = vmatpush2.bf16.msra.mxu0 0
        %2046 = vmatprep.subr.bf16.mxu0 0
        %2047 = vmatpush2.bf16.msra.mxu0 0
        %2048 = vmatprep.subr.bf16.mxu0 0
        %2049 = vmatpush2.bf16.msra.mxu0 0
        %2050 = vmatprep.subr.bf16.mxu0 0
        %2051 = vmatpush2.bf16.msra.mxu0 0
        %2052 = vmatprep.mubr.bf16.mxu0 0
        %2053 = vmatmul.mubr.bf16.gmra.mxu0 %v2009
        %v2054 = vpop.f32.mrf.mxu0
        %v2055 = vadd.f32 0.0, %v2054
        %v2056 = vpop.f32.mrf.mxu0
        %v2057 = vadd.f32 0.0, %v2056
        %v2058 = vpop.f32.mrf.mxu0
        %v2059 = vpop.f32.mrf.mxu0
        %2060 = vdwg.mxu0
        %2061 = vmatprep.subr.bf16.mxu0 0
        %2062 = vmatpush1.bf16.msra.mxu0 0
        %2063 = vmatprep.subr.bf16.mxu0 0
        %2064 = vmatpush1.bf16.msra.mxu0 0
        %2065 = vmatprep.subr.bf16.mxu0 0
        %2066 = vmatpush1.bf16.msra.mxu0 0
        %2067 = vmatprep.subr.bf16.mxu0 0
        %2068 = vmatpush1.bf16.msra.mxu0 0
        %2069 = vmatprep.subr.bf16.mxu0 0
        %2070 = vmatpush1.bf16.msra.mxu0 0
        %2071 = vmatprep.subr.bf16.mxu0 0
        %2072 = vmatpush1.bf16.msra.mxu0 0
        %2073 = vmatprep.subr.bf16.mxu0 0
        %2074 = vmatpush1.bf16.msra.mxu0 0
        %2075 = vmatprep.subr.bf16.mxu0 0
        %2076 = vmatpush1.bf16.msra.mxu0 %v2018
        %2077 = vmatprep.subr.bf16.mxu0 0
        %2078 = vmatpush2.bf16.msra.mxu0 0
        %2079 = vmatprep.subr.bf16.mxu0 0
        %2080 = vmatpush2.bf16.msra.mxu0 0
        %2081 = vmatprep.subr.bf16.mxu0 0
        %2082 = vmatpush2.bf16.msra.mxu0 0
        %2083 = vmatprep.subr.bf16.mxu0 0
        %2084 = vmatpush2.bf16.msra.mxu0 0
        %2085 = vmatprep.subr.bf16.mxu0 0
        %2086 = vmatpush2.bf16.msra.mxu0 0
        %2087 = vmatprep.subr.bf16.mxu0 0
        %2088 = vmatpush2.bf16.msra.mxu0 0
        %2089 = vmatprep.subr.bf16.mxu0 0
        %2090 = vmatpush2.bf16.msra.mxu0 0
        %2091 = vmatprep.subr.bf16.mxu0 0
        %2092 = vmatpush2.bf16.msra.mxu0 0
        %2093 = vmatprep.mubr.bf16.mxu0 0
        %2094 = vmatmul.mubr.bf16.gmra.mxu0 %v2009
        %v2095 = vpop.f32.mrf.mxu0
        %v2096 = vadd.f32 0.0, %v2095
        %v2097 = vpop.f32.mrf.mxu0
        %v2098 = vpop.f32.mrf.mxu0
        %v2099 = vpop.f32.mrf.mxu0
        %2100 = vdwg.mxu0
        %v2101 = vadd.f32 %v1993, %v2055
        %v2102 = vadd.f32 %v1994, %v2057
        %v2103 = vadd.f32 %v1995, %v2096
        %s2104 = scalar_lea.vmem %s5, 20
        %v2105 = vld [vmem:[%s2104] sm:$0xf]
        %2106 = vrot.lane.b32.xlu0 %v2005, 127
        %v2107 = vpop.permute.xlu0 %2106
        %2108 = vrot.lane.b32.xlu0 %v2006, 127
        %v2109 = vpop.permute.xlu0 %2108
        %2110 = vrot.lane.b32.xlu0 %v2007, 127
        %v2111 = vpop.permute.xlu0 %2110
        %v2112 = vsel %vm1021, %v2107, %v2109
        %v2113 = vsel %vm1021, %v2109, %v2111
        %v2115 = vsel %vm1579, %v2105, 0
        %v2118 = vsel %vm1583, %v2112, 0
        %v2121 = vsel %vm1583, %v2113, 0
        %v2124 = vsel %vm1583, %v2111, 0
        %2126 = vmatprep.subr.bf16.mxu0 0
        %2127 = vmatpush1.bf16.msra.mxu0 0
        %2128 = vmatprep.subr.bf16.mxu0 0
        %2129 = vmatpush1.bf16.msra.mxu0 0
        %2130 = vmatprep.subr.bf16.mxu0 0
        %2131 = vmatpush1.bf16.msra.mxu0 0
        %2132 = vmatprep.subr.bf16.mxu0 0
        %2133 = vmatpush1.bf16.msra.mxu0 0
        %2134 = vmatprep.subr.bf16.mxu0 0
        %2135 = vmatpush1.bf16.msra.mxu0 0
        %2136 = vmatprep.subr.bf16.mxu0 0
        %2137 = vmatpush1.bf16.msra.mxu0 0
        %2138 = vmatprep.subr.bf16.mxu0 0
        %2139 = vmatpush1.bf16.msra.mxu0 0
        %2140 = vmatprep.subr.bf16.mxu0 %v2121
        %2141 = vmatpush1.bf16.msra.mxu0 %v2118
        %2142 = vmatprep.subr.bf16.mxu0 0
        %2143 = vmatpush2.bf16.msra.mxu0 0
        %2144 = vmatprep.subr.bf16.mxu0 0
        %2145 = vmatpush2.bf16.msra.mxu0 0
        %2146 = vmatprep.subr.bf16.mxu0 0
        %2147 = vmatpush2.bf16.msra.mxu0 0
        %2148 = vmatprep.subr.bf16.mxu0 0
        %2149 = vmatpush2.bf16.msra.mxu0 0
        %2150 = vmatprep.subr.bf16.mxu0 0
        %2151 = vmatpush2.bf16.msra.mxu0 0
        %2152 = vmatprep.subr.bf16.mxu0 0
        %2153 = vmatpush2.bf16.msra.mxu0 0
        %2154 = vmatprep.subr.bf16.mxu0 0
        %2155 = vmatpush2.bf16.msra.mxu0 0
        %2156 = vmatprep.subr.bf16.mxu0 0
        %2157 = vmatpush2.bf16.msra.mxu0 0
        %2158 = vmatprep.mubr.bf16.mxu0 0
        %2159 = vmatmul.mubr.bf16.gmra.mxu0 %v2115
        %v2160 = vpop.f32.mrf.mxu0
        %v2161 = vadd.f32 0.0, %v2160
        %v2162 = vpop.f32.mrf.mxu0
        %v2163 = vadd.f32 0.0, %v2162
        %v2164 = vpop.f32.mrf.mxu0
        %v2165 = vpop.f32.mrf.mxu0
        %2166 = vdwg.mxu0
        %2167 = vmatprep.subr.bf16.mxu0 0
        %2168 = vmatpush1.bf16.msra.mxu0 0
        %2169 = vmatprep.subr.bf16.mxu0 0
        %2170 = vmatpush1.bf16.msra.mxu0 0
        %2171 = vmatprep.subr.bf16.mxu0 0
        %2172 = vmatpush1.bf16.msra.mxu0 0
        %2173 = vmatprep.subr.bf16.mxu0 0
        %2174 = vmatpush1.bf16.msra.mxu0 0
        %2175 = vmatprep.subr.bf16.mxu0 0
        %2176 = vmatpush1.bf16.msra.mxu0 0
        %2177 = vmatprep.subr.bf16.mxu0 0
        %2178 = vmatpush1.bf16.msra.mxu0 0
        %2179 = vmatprep.subr.bf16.mxu0 0
        %2180 = vmatpush1.bf16.msra.mxu0 0
        %2181 = vmatprep.subr.bf16.mxu0 0
        %2182 = vmatpush1.bf16.msra.mxu0 %v2124
        %2183 = vmatprep.subr.bf16.mxu0 0
        %2184 = vmatpush2.bf16.msra.mxu0 0
        %2185 = vmatprep.subr.bf16.mxu0 0
        %2186 = vmatpush2.bf16.msra.mxu0 0
        %2187 = vmatprep.subr.bf16.mxu0 0
        %2188 = vmatpush2.bf16.msra.mxu0 0
        %2189 = vmatprep.subr.bf16.mxu0 0
        %2190 = vmatpush2.bf16.msra.mxu0 0
        %2191 = vmatprep.subr.bf16.mxu0 0
        %2192 = vmatpush2.bf16.msra.mxu0 0
        %2193 = vmatprep.subr.bf16.mxu0 0
        %2194 = vmatpush2.bf16.msra.mxu0 0
        %2195 = vmatprep.subr.bf16.mxu0 0
        %2196 = vmatpush2.bf16.msra.mxu0 0
        %2197 = vmatprep.subr.bf16.mxu0 0
        %2198 = vmatpush2.bf16.msra.mxu0 0
        %2199 = vmatprep.mubr.bf16.mxu0 0
        %2200 = vmatmul.mubr.bf16.gmra.mxu0 %v2115
        %v2201 = vpop.f32.mrf.mxu0
        %v2202 = vadd.f32 0.0, %v2201
        %v2203 = vpop.f32.mrf.mxu0
        %v2204 = vpop.f32.mrf.mxu0
        %v2205 = vpop.f32.mrf.mxu0
        %2206 = vdwg.mxu0
        %v2207 = vadd.f32 %v2101, %v2161
        %v2208 = vadd.f32 %v2102, %v2163
        %v2209 = vadd.f32 %v2103, %v2202
        %s2210 = scalar_lea.vmem %s5, 24
        %v2211 = vld [vmem:[%s2210] sm:$0xf]
        %2212 = vrot.lane.b32.xlu0 %v2005, 111
        %v2213 = vpop.permute.xlu0 %2212
        %2214 = vrot.lane.b32.xlu0 %v2006, 111
        %v2215 = vpop.permute.xlu0 %2214
        %2216 = vrot.lane.b32.xlu0 %v2007, 111
        %v2217 = vpop.permute.xlu0 %2216
        %v2218 = vsel %vm1146, %v2213, %v2215
        %v2219 = vsel %vm1146, %v2215, %v2217
        %v2221 = vsel %vm1579, %v2211, 0
        %v2224 = vsel %vm1583, %v2218, 0
        %v2227 = vsel %vm1583, %v2219, 0
        %v2230 = vsel %vm1583, %v2217, 0
        %2232 = vmatprep.subr.bf16.mxu0 0
        %2233 = vmatpush1.bf16.msra.mxu0 0
        %2234 = vmatprep.subr.bf16.mxu0 0
        %2235 = vmatpush1.bf16.msra.mxu0 0
        %2236 = vmatprep.subr.bf16.mxu0 0
        %2237 = vmatpush1.bf16.msra.mxu0 0
        %2238 = vmatprep.subr.bf16.mxu0 0
        %2239 = vmatpush1.bf16.msra.mxu0 0
        %2240 = vmatprep.subr.bf16.mxu0 0
        %2241 = vmatpush1.bf16.msra.mxu0 0
        %2242 = vmatprep.subr.bf16.mxu0 0
        %2243 = vmatpush1.bf16.msra.mxu0 0
        %2244 = vmatprep.subr.bf16.mxu0 0
        %2245 = vmatpush1.bf16.msra.mxu0 0
        %2246 = vmatprep.subr.bf16.mxu0 %v2227
        %2247 = vmatpush1.bf16.msra.mxu0 %v2224
        %2248 = vmatprep.subr.bf16.mxu0 0
        %2249 = vmatpush2.bf16.msra.mxu0 0
        %2250 = vmatprep.subr.bf16.mxu0 0
        %2251 = vmatpush2.bf16.msra.mxu0 0
        %2252 = vmatprep.subr.bf16.mxu0 0
        %2253 = vmatpush2.bf16.msra.mxu0 0
        %2254 = vmatprep.subr.bf16.mxu0 0
        %2255 = vmatpush2.bf16.msra.mxu0 0
        %2256 = vmatprep.subr.bf16.mxu0 0
        %2257 = vmatpush2.bf16.msra.mxu0 0
        %2258 = vmatprep.subr.bf16.mxu0 0
        %2259 = vmatpush2.bf16.msra.mxu0 0
        %2260 = vmatprep.subr.bf16.mxu0 0
        %2261 = vmatpush2.bf16.msra.mxu0 0
        %2262 = vmatprep.subr.bf16.mxu0 0
        %2263 = vmatpush2.bf16.msra.mxu0 0
        %2264 = vmatprep.mubr.bf16.mxu0 0
        %2265 = vmatmul.mubr.bf16.gmra.mxu0 %v2221
        %v2266 = vpop.f32.mrf.mxu0
        %v2267 = vadd.f32 0.0, %v2266
        %v2268 = vpop.f32.mrf.mxu0
        %v2269 = vadd.f32 0.0, %v2268
        %v2270 = vpop.f32.mrf.mxu0
        %v2271 = vpop.f32.mrf.mxu0
        %2272 = vdwg.mxu0
        %2273 = vmatprep.subr.bf16.mxu0 0
        %2274 = vmatpush1.bf16.msra.mxu0 0
        %2275 = vmatprep.subr.bf16.mxu0 0
        %2276 = vmatpush1.bf16.msra.mxu0 0
        %2277 = vmatprep.subr.bf16.mxu0 0
        %2278 = vmatpush1.bf16.msra.mxu0 0
        %2279 = vmatprep.subr.bf16.mxu0 0
        %2280 = vmatpush1.bf16.msra.mxu0 0
        %2281 = vmatprep.subr.bf16.mxu0 0
        %2282 = vmatpush1.bf16.msra.mxu0 0
        %2283 = vmatprep.subr.bf16.mxu0 0
        %2284 = vmatpush1.bf16.msra.mxu0 0
        %2285 = vmatprep.subr.bf16.mxu0 0
        %2286 = vmatpush1.bf16.msra.mxu0 0
        %2287 = vmatprep.subr.bf16.mxu0 0
        %2288 = vmatpush1.bf16.msra.mxu0 %v2230
        %2289 = vmatprep.subr.bf16.mxu0 0
        %2290 = vmatpush2.bf16.msra.mxu0 0
        %2291 = vmatprep.subr.bf16.mxu0 0
        %2292 = vmatpush2.bf16.msra.mxu0 0
        %2293 = vmatprep.subr.bf16.mxu0 0
        %2294 = vmatpush2.bf16.msra.mxu0 0
        %2295 = vmatprep.subr.bf16.mxu0 0
        %2296 = vmatpush2.bf16.msra.mxu0 0
        %2297 = vmatprep.subr.bf16.mxu0 0
        %2298 = vmatpush2.bf16.msra.mxu0 0
        %2299 = vmatprep.subr.bf16.mxu0 0
        %2300 = vmatpush2.bf16.msra.mxu0 0
        %2301 = vmatprep.subr.bf16.mxu0 0
        %2302 = vmatpush2.bf16.msra.mxu0 0
        %2303 = vmatprep.subr.bf16.mxu0 0
        %2304 = vmatpush2.bf16.msra.mxu0 0
        %2305 = vmatprep.mubr.bf16.mxu0 0
        %2306 = vmatmul.mubr.bf16.gmra.mxu0 %v2221
        %v2307 = vpop.f32.mrf.mxu0
        %v2308 = vadd.f32 0.0, %v2307
        %v2309 = vpop.f32.mrf.mxu0
        %v2310 = vpop.f32.mrf.mxu0
        %v2311 = vpop.f32.mrf.mxu0
        %2312 = vdwg.mxu0
        %v2313 = vadd.f32 %v2207, %v2267
        %v2314 = vadd.f32 %v2208, %v2269
        %v2315 = vadd.f32 %v2209, %v2308
        %s2316 = scalar_lea.vmem %s5, 28
        %v2317 = vld [vmem:[%s2316] sm:$0xf]
        %2318 = vrot.lane.b32.xlu0 %v2005, 110
        %v2319 = vpop.permute.xlu0 %2318
        %2320 = vrot.lane.b32.xlu0 %v2006, 110
        %v2321 = vpop.permute.xlu0 %2320
        %2322 = vrot.lane.b32.xlu0 %v2007, 110
        %v2323 = vpop.permute.xlu0 %2322
        %v2324 = vsel %vm1271, %v2319, %v2321
        %v2325 = vsel %vm1271, %v2321, %v2323
        %v2327 = vsel %vm1579, %v2317, 0
        %v2330 = vsel %vm1583, %v2324, 0
        %v2333 = vsel %vm1583, %v2325, 0
        %v2336 = vsel %vm1583, %v2323, 0
        %2338 = vmatprep.subr.bf16.mxu0 0
        %2339 = vmatpush1.bf16.msra.mxu0 0
        %2340 = vmatprep.subr.bf16.mxu0 0
        %2341 = vmatpush1.bf16.msra.mxu0 0
        %2342 = vmatprep.subr.bf16.mxu0 0
        %2343 = vmatpush1.bf16.msra.mxu0 0
        %2344 = vmatprep.subr.bf16.mxu0 0
        %2345 = vmatpush1.bf16.msra.mxu0 0
        %2346 = vmatprep.subr.bf16.mxu0 0
        %2347 = vmatpush1.bf16.msra.mxu0 0
        %2348 = vmatprep.subr.bf16.mxu0 0
        %2349 = vmatpush1.bf16.msra.mxu0 0
        %2350 = vmatprep.subr.bf16.mxu0 0
        %2351 = vmatpush1.bf16.msra.mxu0 0
        %2352 = vmatprep.subr.bf16.mxu0 %v2333
        %2353 = vmatpush1.bf16.msra.mxu0 %v2330
        %2354 = vmatprep.subr.bf16.mxu0 0
        %2355 = vmatpush2.bf16.msra.mxu0 0
        %2356 = vmatprep.subr.bf16.mxu0 0
        %2357 = vmatpush2.bf16.msra.mxu0 0
        %2358 = vmatprep.subr.bf16.mxu0 0
        %2359 = vmatpush2.bf16.msra.mxu0 0
        %2360 = vmatprep.subr.bf16.mxu0 0
        %2361 = vmatpush2.bf16.msra.mxu0 0
        %2362 = vmatprep.subr.bf16.mxu0 0
        %2363 = vmatpush2.bf16.msra.mxu0 0
        %2364 = vmatprep.subr.bf16.mxu0 0
        %2365 = vmatpush2.bf16.msra.mxu0 0
        %2366 = vmatprep.subr.bf16.mxu0 0
        %2367 = vmatpush2.bf16.msra.mxu0 0
        %2368 = vmatprep.subr.bf16.mxu0 0
        %2369 = vmatpush2.bf16.msra.mxu0 0
        %2370 = vmatprep.mubr.bf16.mxu0 0
        %2371 = vmatmul.mubr.bf16.gmra.mxu0 %v2327
        %v2372 = vpop.f32.mrf.mxu0
        %v2373 = vadd.f32 0.0, %v2372
        %v2374 = vpop.f32.mrf.mxu0
        %v2375 = vadd.f32 0.0, %v2374
        %v2376 = vpop.f32.mrf.mxu0
        %v2377 = vpop.f32.mrf.mxu0
        %2378 = vdwg.mxu0
        %2379 = vmatprep.subr.bf16.mxu0 0
        %2380 = vmatpush1.bf16.msra.mxu0 0
        %2381 = vmatprep.subr.bf16.mxu0 0
        %2382 = vmatpush1.bf16.msra.mxu0 0
        %2383 = vmatprep.subr.bf16.mxu0 0
        %2384 = vmatpush1.bf16.msra.mxu0 0
        %2385 = vmatprep.subr.bf16.mxu0 0
        %2386 = vmatpush1.bf16.msra.mxu0 0
        %2387 = vmatprep.subr.bf16.mxu0 0
        %2388 = vmatpush1.bf16.msra.mxu0 0
        %2389 = vmatprep.subr.bf16.mxu0 0
        %2390 = vmatpush1.bf16.msra.mxu0 0
        %2391 = vmatprep.subr.bf16.mxu0 0
        %2392 = vmatpush1.bf16.msra.mxu0 0
        %2393 = vmatprep.subr.bf16.mxu0 0
        %2394 = vmatpush1.bf16.msra.mxu0 %v2336
        %2395 = vmatprep.subr.bf16.mxu0 0
        %2396 = vmatpush2.bf16.msra.mxu0 0
        %2397 = vmatprep.subr.bf16.mxu0 0
        %2398 = vmatpush2.bf16.msra.mxu0 0
        %2399 = vmatprep.subr.bf16.mxu0 0
        %2400 = vmatpush2.bf16.msra.mxu0 0
        %2401 = vmatprep.subr.bf16.mxu0 0
        %2402 = vmatpush2.bf16.msra.mxu0 0
        %2403 = vmatprep.subr.bf16.mxu0 0
        %2404 = vmatpush2.bf16.msra.mxu0 0
        %2405 = vmatprep.subr.bf16.mxu0 0
        %2406 = vmatpush2.bf16.msra.mxu0 0
        %2407 = vmatprep.subr.bf16.mxu0 0
        %2408 = vmatpush2.bf16.msra.mxu0 0
        %2409 = vmatprep.subr.bf16.mxu0 0
        %2410 = vmatpush2.bf16.msra.mxu0 0
        %2411 = vmatprep.mubr.bf16.mxu0 0
        %2412 = vmatmul.mubr.bf16.gmra.mxu0 %v2327
        %v2413 = vpop.f32.mrf.mxu0
        %v2414 = vadd.f32 0.0, %v2413
        %v2415 = vpop.f32.mrf.mxu0
        %v2416 = vpop.f32.mrf.mxu0
        %v2417 = vpop.f32.mrf.mxu0
        %2418 = vdwg.mxu0
        %v2419 = vadd.f32 %v2313, %v2373
        %v2420 = vadd.f32 %v2314, %v2375
        %v2421 = vadd.f32 %v2315, %v2414
        %s2422 = scalar_lea.vmem %s5, 32
        %v2423 = vld [vmem:[%s2422] sm:$0xf]
        %2424 = vrot.lane.b32.xlu0 %v2005, 109
        %v2425 = vpop.permute.xlu0 %2424
        %2426 = vrot.lane.b32.xlu0 %v2006, 109
        %v2427 = vpop.permute.xlu0 %2426
        %2428 = vrot.lane.b32.xlu0 %v2007, 109
        %v2429 = vpop.permute.xlu0 %2428
        %v2430 = vsel %vm1396, %v2425, %v2427
        %v2431 = vsel %vm1396, %v2427, %v2429
        %v2433 = vsel %vm1579, %v2423, 0
        %v2436 = vsel %vm1583, %v2430, 0
        %v2439 = vsel %vm1583, %v2431, 0
        %v2442 = vsel %vm1583, %v2429, 0
        %2444 = vmatprep.subr.bf16.mxu0 0
        %2445 = vmatpush1.bf16.msra.mxu0 0
        %2446 = vmatprep.subr.bf16.mxu0 0
        %2447 = vmatpush1.bf16.msra.mxu0 0
        %2448 = vmatprep.subr.bf16.mxu0 0
        %2449 = vmatpush1.bf16.msra.mxu0 0
        %2450 = vmatprep.subr.bf16.mxu0 0
        %2451 = vmatpush1.bf16.msra.mxu0 0
        %2452 = vmatprep.subr.bf16.mxu0 0
        %2453 = vmatpush1.bf16.msra.mxu0 0
        %2454 = vmatprep.subr.bf16.mxu0 0
        %2455 = vmatpush1.bf16.msra.mxu0 0
        %2456 = vmatprep.subr.bf16.mxu0 0
        %2457 = vmatpush1.bf16.msra.mxu0 0
        %2458 = vmatprep.subr.bf16.mxu0 %v2439
        %2459 = vmatpush1.bf16.msra.mxu0 %v2436
        %2460 = vmatprep.subr.bf16.mxu0 0
        %2461 = vmatpush2.bf16.msra.mxu0 0
        %2462 = vmatprep.subr.bf16.mxu0 0
        %2463 = vmatpush2.bf16.msra.mxu0 0
        %2464 = vmatprep.subr.bf16.mxu0 0
        %2465 = vmatpush2.bf16.msra.mxu0 0
        %2466 = vmatprep.subr.bf16.mxu0 0
        %2467 = vmatpush2.bf16.msra.mxu0 0
        %2468 = vmatprep.subr.bf16.mxu0 0
        %2469 = vmatpush2.bf16.msra.mxu0 0
        %2470 = vmatprep.subr.bf16.mxu0 0
        %2471 = vmatpush2.bf16.msra.mxu0 0
        %2472 = vmatprep.subr.bf16.mxu0 0
        %2473 = vmatpush2.bf16.msra.mxu0 0
        %2474 = vmatprep.subr.bf16.mxu0 0
        %2475 = vmatpush2.bf16.msra.mxu0 0
        %2476 = vmatprep.mubr.bf16.mxu0 0
        %2477 = vmatmul.mubr.bf16.gmra.mxu0 %v2433
        %v2478 = vpop.f32.mrf.mxu0
        %v2479 = vadd.f32 0.0, %v2478
        %v2480 = vpop.f32.mrf.mxu0
        %v2481 = vadd.f32 0.0, %v2480
        %v2482 = vpop.f32.mrf.mxu0
        %v2483 = vpop.f32.mrf.mxu0
        %2484 = vdwg.mxu0
        %2485 = vmatprep.subr.bf16.mxu0 0
        %2486 = vmatpush1.bf16.msra.mxu0 0
        %2487 = vmatprep.subr.bf16.mxu0 0
        %2488 = vmatpush1.bf16.msra.mxu0 0
        %2489 = vmatprep.subr.bf16.mxu0 0
        %2490 = vmatpush1.bf16.msra.mxu0 0
        %2491 = vmatprep.subr.bf16.mxu0 0
        %2492 = vmatpush1.bf16.msra.mxu0 0
        %2493 = vmatprep.subr.bf16.mxu0 0
        %2494 = vmatpush1.bf16.msra.mxu0 0
        %2495 = vmatprep.subr.bf16.mxu0 0
        %2496 = vmatpush1.bf16.msra.mxu0 0
        %2497 = vmatprep.subr.bf16.mxu0 0
        %2498 = vmatpush1.bf16.msra.mxu0 0
        %2499 = vmatprep.subr.bf16.mxu0 0
        %2500 = vmatpush1.bf16.msra.mxu0 %v2442
        %2501 = vmatprep.subr.bf16.mxu0 0
        %2502 = vmatpush2.bf16.msra.mxu0 0
        %2503 = vmatprep.subr.bf16.mxu0 0
        %2504 = vmatpush2.bf16.msra.mxu0 0
        %2505 = vmatprep.subr.bf16.mxu0 0
        %2506 = vmatpush2.bf16.msra.mxu0 0
        %2507 = vmatprep.subr.bf16.mxu0 0
        %2508 = vmatpush2.bf16.msra.mxu0 0
        %2509 = vmatprep.subr.bf16.mxu0 0
        %2510 = vmatpush2.bf16.msra.mxu0 0
        %2511 = vmatprep.subr.bf16.mxu0 0
        %2512 = vmatpush2.bf16.msra.mxu0 0
        %2513 = vmatprep.subr.bf16.mxu0 0
        %2514 = vmatpush2.bf16.msra.mxu0 0
        %2515 = vmatprep.subr.bf16.mxu0 0
        %2516 = vmatpush2.bf16.msra.mxu0 0
        %2517 = vmatprep.mubr.bf16.mxu0 0
        %2518 = vmatmul.mubr.bf16.gmra.mxu0 %v2433
        %v2519 = vpop.f32.mrf.mxu0
        %v2520 = vadd.f32 0.0, %v2519
        %v2521 = vpop.f32.mrf.mxu0
        %v2522 = vpop.f32.mrf.mxu0
        %v2523 = vpop.f32.mrf.mxu0
        %2524 = vdwg.mxu0
        %v2525 = vadd.f32 %v2419, %v2479
        %v2526 = vadd.f32 %v2420, %v2481
        %v2527 = vadd.f32 %v2421, %v2520
        %v2528 = vld [vmem:[%s6] sm:$0xff]
        %2530 = vset.pattern.permute.xlu0 0
        %2531 = vperm.xlu0 %2530, %v2528
        %v2532 = vpop.permute.xlu0 %2531
        %v2534 = vmul.f32 %v2525, %v2532
        %v2535 = vmul.f32 %v2526, %v2532
        %v2536 = vmul.f32 %v2527, %v2532
        %v2537 = vld [vmem:[%s7] sm:$0xff]
        %2539 = vset.pattern.permute.xlu0 0
        %2540 = vperm.xlu0 %2539, %v2537
        %v2541 = vpop.permute.xlu0 %2540
        %v2543 = vadd.f32 %v2534, %v2541
        %v2544 = vadd.f32 %v2535, %v2541
        %v2545 = vadd.f32 %v2536, %v2541
        %v2546 = vld [vmem:[%s384 + $0x2] sm:$0x3f]
        %v2547 = vld [vmem:[%s8] sm:$0xf]
        %v2549 = vcombine.high %v2546, %v2546
        %v2551 = vunpack.c.l.s4 1983009808
        %v2552 = vunpack.c.0.s8 %v2551
        %v2553 = vlaneseq
        %v2554 = vshrl.u32 %v2553, 7
        %v2555 = vsub.s32 %v2552, %v2554
        %v2556 = vrot.slane %v2546, %v2555
        %v2558 = vunpack.c.l.s4 1983009808
        %v2559 = vunpack.c.0.s8 %v2558
        %v2560 = vlaneseq
        %v2561 = vshrl.u32 %v2560, 7
        %v2562 = vsub.s32 %v2559, %v2561
        %v2563 = vrot.slane %v2549, %v2562
        %v2564 = vcombine.high %v2556, %v2556
        %v2566 = vsel %vm421, %v2547, 0
        %v2569 = vsel %vm425, %v2556, 0
        %v2572 = vsel %vm425, %v2564, 0
        %v2575 = vsel %vm425, %v2563, 0
        %2577 = vmatprep.subr.bf16.mxu0 0
        %2578 = vmatpush1.bf16.msra.mxu0 0
        %2579 = vmatprep.subr.bf16.mxu0 0
        %2580 = vmatpush1.bf16.msra.mxu0 0
        %2581 = vmatprep.subr.bf16.mxu0 0
        %2582 = vmatpush1.bf16.msra.mxu0 0
        %2583 = vmatprep.subr.bf16.mxu0 0
        %2584 = vmatpush1.bf16.msra.mxu0 0
        %2585 = vmatprep.subr.bf16.mxu0 0
        %2586 = vmatpush1.bf16.msra.mxu0 0
        %2587 = vmatprep.subr.bf16.mxu0 0
        %2588 = vmatpush1.bf16.msra.mxu0 0
        %2589 = vmatprep.subr.bf16.mxu0 0
        %2590 = vmatpush1.bf16.msra.mxu0 0
        %2591 = vmatprep.subr.bf16.mxu0 %v2572
        %2592 = vmatpush1.bf16.msra.mxu0 %v2569
        %2593 = vmatprep.subr.bf16.mxu0 0
        %2594 = vmatpush2.bf16.msra.mxu0 0
        %2595 = vmatprep.subr.bf16.mxu0 0
        %2596 = vmatpush2.bf16.msra.mxu0 0
        %2597 = vmatprep.subr.bf16.mxu0 0
        %2598 = vmatpush2.bf16.msra.mxu0 0
        %2599 = vmatprep.subr.bf16.mxu0 0
        %2600 = vmatpush2.bf16.msra.mxu0 0
        %2601 = vmatprep.subr.bf16.mxu0 0
        %2602 = vmatpush2.bf16.msra.mxu0 0
        %2603 = vmatprep.subr.bf16.mxu0 0
        %2604 = vmatpush2.bf16.msra.mxu0 0
        %2605 = vmatprep.subr.bf16.mxu0 0
        %2606 = vmatpush2.bf16.msra.mxu0 0
        %2607 = vmatprep.subr.bf16.mxu0 0
        %2608 = vmatpush2.bf16.msra.mxu0 0
        %2609 = vmatprep.mubr.bf16.mxu0 0
        %2610 = vmatmul.mubr.bf16.gmra.mxu0 %v2566
        %v2611 = vpop.f32.mrf.mxu0
        %v2612 = vadd.f32 0.0, %v2611
        %v2613 = vpop.f32.mrf.mxu0
        %v2614 = vadd.f32 0.0, %v2613
        %v2615 = vpop.f32.mrf.mxu0
        %v2616 = vpop.f32.mrf.mxu0
        %2617 = vdwg.mxu0
        %2618 = vmatprep.subr.bf16.mxu0 0
        %2619 = vmatpush1.bf16.msra.mxu0 0
        %2620 = vmatprep.subr.bf16.mxu0 0
        %2621 = vmatpush1.bf16.msra.mxu0 0
        %2622 = vmatprep.subr.bf16.mxu0 0
        %2623 = vmatpush1.bf16.msra.mxu0 0
        %2624 = vmatprep.subr.bf16.mxu0 0
        %2625 = vmatpush1.bf16.msra.mxu0 0
        %2626 = vmatprep.subr.bf16.mxu0 0
        %2627 = vmatpush1.bf16.msra.mxu0 0
        %2628 = vmatprep.subr.bf16.mxu0 0
        %2629 = vmatpush1.bf16.msra.mxu0 0
        %2630 = vmatprep.subr.bf16.mxu0 0
        %2631 = vmatpush1.bf16.msra.mxu0 0
        %2632 = vmatprep.subr.bf16.mxu0 0
        %2633 = vmatpush1.bf16.msra.mxu0 %v2575
        %2634 = vmatprep.subr.bf16.mxu0 0
        %2635 = vmatpush2.bf16.msra.mxu0 0
        %2636 = vmatprep.subr.bf16.mxu0 0
        %2637 = vmatpush2.bf16.msra.mxu0 0
        %2638 = vmatprep.subr.bf16.mxu0 0
        %2639 = vmatpush2.bf16.msra.mxu0 0
        %2640 = vmatprep.subr.bf16.mxu0 0
        %2641 = vmatpush2.bf16.msra.mxu0 0
        %2642 = vmatprep.subr.bf16.mxu0 0
        %2643 = vmatpush2.bf16.msra.mxu0 0
        %2644 = vmatprep.subr.bf16.mxu0 0
        %2645 = vmatpush2.bf16.msra.mxu0 0
        %2646 = vmatprep.subr.bf16.mxu0 0
        %2647 = vmatpush2.bf16.msra.mxu0 0
        %2648 = vmatprep.subr.bf16.mxu0 0
        %2649 = vmatpush2.bf16.msra.mxu0 0
        %2650 = vmatprep.mubr.bf16.mxu0 0
        %2651 = vmatmul.mubr.bf16.gmra.mxu0 %v2566
        %v2652 = vpop.f32.mrf.mxu0
        %v2653 = vadd.f32 0.0, %v2652
        %v2654 = vpop.f32.mrf.mxu0
        %v2655 = vpop.f32.mrf.mxu0
        %v2656 = vpop.f32.mrf.mxu0
        %2657 = vdwg.mxu0
        %v2658 = vld [vmem:[%s9] sm:$0xff]
        %2660 = vset.pattern.permute.xlu0 0
        %2661 = vperm.xlu0 %2660, %v2658
        %v2662 = vpop.permute.xlu0 %2661
        %v2664 = vmul.f32 %v2612, %v2662
        %v2665 = vmul.f32 %v2614, %v2662
        %v2666 = vmul.f32 %v2653, %v2662
        %v2667 = vadd.f32 %v2543, %v2664
        %v2668 = vadd.f32 %v2544, %v2665
        %v2669 = vadd.f32 %v2545, %v2666
        %v2670 = vld [vmem:[%s10] sm:$0xff]
        %2672 = vset.pattern.permute.xlu0 0
        %2673 = vperm.xlu0 %2672, %v2670
        %v2674 = vpop.permute.xlu0 %2673
        %v2676 = vadd.f32 %v2667, %v2674
        %v2677 = vadd.f32 %v2668, %v2674
        %v2678 = vadd.f32 %v2669, %v2674
        %v2679 = vmin.f32 %v2676, 0.0
        %v2680 = vmin.f32 %v2677, 0.0
        %v2681 = vmin.f32 %v2678, 0.0
        %v2682 = vmul.f32 %v2679, 1.442695
        %v2683 = vpow.pop %v2682
        %v2684 = vmul.f32 %v2680, 1.442695
        %v2685 = vpow.pop %v2684
        %v2686 = vmul.f32 %v2681, 1.442695
        %v2687 = vpow.pop %v2686
        %v2688 = vsub.f32 %v2683, 1.0
        %v2689 = vsub.f32 %v2685, 1.0
        %v2690 = vsub.f32 %v2687, 1.0
        %v2691 = vmul.f32 %v2688, 1.6732632
        %v2692 = vmul.f32 %v2689, 1.6732632
        %v2693 = vmul.f32 %v2690, 1.6732632
        %vm2694 = vcmp.gt.f32.partialorder %v2676, 0.0
        %vm2695 = vcmp.gt.f32.partialorder %v2677, 0.0
        %vm2696 = vcmp.gt.f32.partialorder %v2678, 0.0
        %v2697 = vsel %vm2694, %v2676, %v2691
        %v2698 = vsel %vm2695, %v2677, %v2692
        %v2699 = vsel %vm2696, %v2678, %v2693
        %v2700 = vmul.f32 %v2697, 1.050701
        %v2701 = vmul.f32 %v2698, 1.050701
        %v2702 = vmul.f32 %v2699, 1.050701
        %2703 = vst [vmem:[%s379] sm:$0xff] %v2700
        %2704 = vst [vmem:[%s379 + $0x8] sm:$0xff] %v2701
        %vm2705 = vcmask 556032
        %2706 = vst.msk [vmem:[%s379 + $0x10] sm:$0xff] %vm2705, %v2702
        %s2707 = sand.u32 %s269, 1
        %s2708 = scalar_lea.sflag [#allocation4], %s2707
        %s2709 = sand.u32 %s269, 1
        %s2710 = smul.addr %s2709, 24
        %s2711 = scalar_lea.vmem [#allocation3], %s2710
        // Predicated region
        $region65: #{tpu_custom_call.1} parent=63 // pred_check
          %p2712 = pneg %p279
        $region66: #{tpu_custom_call.1} parent=63 // pred_check_branch
          %2714 = sbr.rel (%p2712) target = $region68
        $region67: #{tpu_custom_call.1} parent=63 // pred_region
          %s2716 = ssub.s32 384, 384
          %2717 = vsyncadd %s2708, %s2716
          %s2718 = smul.addr %s25, 3
          %s2719 = smul.addr %s2718, 128
          %s2720 = scalar_lea.hbm %s11, %s2719
          %s2722 = sshll.u32 %s2711, 4
          %s2723 = int_to_ptr.vmem [resolvable:$true] %s2722
          %2725 = dma.vmem_to_hbm [thread:$0]  %s2723, 384, %s2720, %s2708
        $region68: #{tpu_custom_call.1} parent=63 // pred_fallthru
          _
      $region64: #{tpu_custom_call.1} parent=5 // pred_fallthru
        _
      %p2726 = scmp.le.s32.totalorder 2, %s20
      // Predicated region
      $region69: #{tpu_custom_call.1} parent=5 // pred_check
        %p2727 = pneg %p2726
      $region70: #{tpu_custom_call.1} parent=5 // pred_check_branch
        %2729 = sbr.rel (%p2727) target = $region72
      $region71: #{tpu_custom_call.1} parent=5 // pred_region
        %s2730 = ssub.s32 %s20, 2
        // Predicated region
        $region73: #{tpu_custom_call.1} parent=71 // pred_check
          %p2731 = pneg %p285
        $region74: #{tpu_custom_call.1} parent=71 // pred_check_branch
          %2733 = sbr.rel (%p2731) target = $region76
        $region75: #{tpu_custom_call.1} parent=71 // pred_region
          %s2734 = sand.u32 %s270, 1
          %s2735 = scalar_lea.sflag [#allocation4], %s2734
          %s2736 = sand.u32 %s270, 1
          %s2737 = smul.addr %s2736, 24
          %s2738 = scalar_lea.vmem [#allocation3], %s2737
          %2739 = dma.done %s2735, 384
        $region76: #{tpu_custom_call.1} parent=71 // pred_fallthru
          _
      $region72: #{tpu_custom_call.1} parent=5 // pred_fallthru
        _
    $region6: #{tpu_custom_call.1} parent=1 // loop_footer
      %s24 = sadd.s32 1, %s20
    $region7: #{tpu_custom_call.1} parent=1 // loop_footer_branch
      %19 = sbr.rel target = $region3
    $region8: #{tpu_custom_call.1} parent=1 // loop_exit
      _
    %2740 = vsyncpa [#allocation4], 1
    %s2741 = scalar_lea.sflag [#allocation4], 1
    %2742 = vsyncpa %s2741, 1

</llo_original>
